<compile_context>
chip_gen: v5e
topology: v5e:2x2
jax: 0.10.0
libtpu: 0.0.40
codegen_flags: <defaults>
</compile_context>

<pallas_src>
import functools

import numpy as np

import jax
import jax.numpy as jnp
from jax.experimental import pallas as pl
from jax.experimental.pallas import tpu as pltpu

EPS = 1e-5


# ----------------------------- kernel helpers ------------------------------

def _bn_lane(act, p_mat, pt_mat, gamma, beta, count):
    """Training-mode BatchNorm2d on a lane-dense (rows, W*C) activation.

    Per-channel stats are pooled over rows and over the W positions folded
    into the lane dim via the 0/1 matrix p_mat ((W*C, C)); the per-channel
    scale/shift are broadcast back to lanes with pt_mat ((C, W*C)).
    """
    s1 = jnp.dot(jnp.sum(act, axis=0, keepdims=True), p_mat,
                 preferred_element_type=jnp.float32)
    s2 = jnp.dot(jnp.sum(act * act, axis=0, keepdims=True), p_mat,
                 preferred_element_type=jnp.float32)
    mean = s1 / count
    var = jnp.maximum(s2 / count - mean * mean, 0.0)  # clamp: never negative
    scale = gamma * jax.lax.rsqrt(var + EPS)
    shift = beta - mean * scale
    scale_l = jnp.dot(scale, pt_mat, preferred_element_type=jnp.float32)
    shift_l = jnp.dot(shift, pt_mat, preferred_element_type=jnp.float32)
    return act * scale_l + shift_l


def _conv_sum(act, a_ref, m_ref, ntaps):
    """sum_k (A_k @ act) @ M_k : row-tap selection + folded col/channel weights."""
    acc = None
    for t in range(ntaps):
        rows = jnp.dot(a_ref[t], act, preferred_element_type=jnp.float32)
        term = jnp.dot(rows, m_ref[t], preferred_element_type=jnp.float32)
        acc = term if acc is None else acc + term
    return acc


# -------------------------------- kernel ------------------------------------

def _encoder_kernel(x_ref, a1_ref, m1_ref, a2_ref, m2_ref, b3_ref, n1_ref,
                    n2_ref, k1_ref, s4_ref, k2_ref, c4_ref, ko_ref, bo_ref,
                    p1_ref, p1t_ref, p2_ref, p2t_ref, p3_ref, p3t_ref,
                    g_ref, bt_ref, o_ref, *, cnt1, cnt2, cnt3):
    def gam(i):
        return g_ref[i:i + 1, :]

    def bet(i):
        return bt_ref[i:i + 1, :]

    # stage 1: Conv2d(1, C, 4, 2, 1) + BN + ReLU          -> (n*H/2, (W/2)*C)
    c1 = _conv_sum(x_ref[...], a1_ref, m1_ref, 4)
    y1 = jnp.maximum(
        _bn_lane(c1, p1_ref[...], p1t_ref[...], gam(0), bet(0), cnt1), 0.0)

    # stage 2: Conv2d(C, C, 4, 2, 1) + BN                 -> (n*H/4, (W/4)*C)
    c2 = _conv_sum(y1, a2_ref, m2_ref, 4)
    y2 = _bn_lane(c2, p2_ref[...], p2t_ref[...], gam(1), bet(1), cnt2)

    # stage 3: Residual(C): x + BN(1x1(ReLU(BN(3x3(ReLU(x))))))
    h = jnp.maximum(y2, 0.0)
    c3 = _conv_sum(h, b3_ref, n1_ref, 3)
    h = jnp.maximum(
        _bn_lane(c3, p2_ref[...], p2t_ref[...], gam(2), bet(2), cnt2), 0.0)
    z = jnp.dot(h, k1_ref[...], preferred_element_type=jnp.float32)
    z = _bn_lane(z, p2_ref[...], p2t_ref[...], gam(3), bet(3), cnt2)
    y3 = y2 + z

    # stage 4: Residual(C, ds=True): nearest-2x-down skip + stride-2 1x1 branch
    h = jnp.maximum(y3, 0.0)
    c3 = _conv_sum(h, b3_ref, n2_ref, 3)
    h4 = jnp.maximum(
        _bn_lane(c3, p2_ref[...], p2t_ref[...], gam(4), bet(4), cnt2), 0.0)
    hs = jnp.dot(s4_ref[...], h4, preferred_element_type=jnp.float32)  # even rows
    z = jnp.dot(hs, k2_ref[...], preferred_element_type=jnp.float32)   # even cols * w
    z = _bn_lane(z, p3_ref[...], p3t_ref[...], gam(5), bet(5), cnt3)
    skip = jnp.dot(jnp.dot(s4_ref[...], y3, preferred_element_type=jnp.float32),
                   c4_ref[...], preferred_element_type=jnp.float32)
    y4 = skip + z

    # stage 5: Conv2d(C, output_size, 1) with bias        -> (n*H/8, (W/8)*out)
    o_ref[...] = (jnp.dot(y4, ko_ref[...], preferred_element_type=jnp.float32)
                  + bo_ref[...])


# --------------------------- pallas_call wrapper ----------------------------

def _zero_map(nd):
    return lambda i: (0,) * nd


def encoder_forward(x_nchw, mats):
    n, _, hin, win = x_nchw.shape
    h1, w1 = hin // 2, win // 2
    h2, w2 = h1 // 2, w1 // 2
    h3, w3 = h2 // 2, w2 // 2
    out_ch = mats["bo"].shape[1] // w3

    x_in = x_nchw[:, 0, :, :].reshape(n * hin, win).astype(jnp.float32)

    args = [x_in, mats["a1"], mats["m1"], mats["a2"], mats["m2"], mats["b3"],
            mats["n1"], mats["n2"], mats["k1"], mats["s4"], mats["k2"],
            mats["c4"], mats["ko"], mats["bo"], mats["p1"], mats["p1t"],
            mats["p2"], mats["p2t"], mats["p3"], mats["p3t"], mats["g"],
            mats["bt"]]

    out_shape = jax.ShapeDtypeStruct((n * h3, w3 * out_ch), jnp.float32)
    kernel = functools.partial(_encoder_kernel,
                               cnt1=float(n * h1 * w1),
                               cnt2=float(n * h2 * w2),
                               cnt3=float(n * h3 * w3))

    in_specs = [pl.BlockSpec(a.shape, _zero_map(a.ndim)) for a in args]
    out_specs = pl.BlockSpec(out_shape.shape, _zero_map(2))

    y = pl.pallas_call(
        kernel,
        grid=(1,),
        in_specs=in_specs,
        out_specs=out_specs,
        out_shape=out_shape,
        compiler_params=pltpu.CompilerParams(dimension_semantics=("arbitrary",)),
    )(*args)

    y = y.reshape(n, h3, w3, out_ch)
    return jnp.transpose(y, (0, 3, 1, 2))  # back to NCHW


# ----------------- host-side constant-matrix preparation --------------------

def prepare_mats(p, n, hin, win):
    c = int(p["bn1_g"].shape[0])
    h1, w1 = hin // 2, win // 2
    h2, w2 = h1 // 2, w1 // 2
    h3, w3 = h2 // 2, w2 // 2
    r1, r2 = p["r1"], p["r2"]

    def row_sel(h_out, h_in, fn):
        A = np.zeros((n * h_out, n * h_in), np.float32)
        for b in range(n):
            for r in range(h_out):
                i = fn(r)
                if 0 <= i < h_in:
                    A[b * h_out + r, b * h_in + i] = 1.0
        return A

    def col_w_s2(w, ki, win_, wout_):          # 4x4 stride-2 pad-1, one row tap
        w = np.asarray(w)
        cout, cin = w.shape[0], w.shape[1]
        M = np.zeros((win_ * cin, wout_ * cout), np.float32)
        for oj in range(wout_):
            for kj in range(w.shape[3]):
                j = 2 * oj + kj - 1
                if 0 <= j < win_:
                    M[j * cin:(j + 1) * cin, oj * cout:(oj + 1) * cout] = w[:, :, ki, kj].T
        return M

    def col_w_s1(w, di, W):                    # 3x3 stride-1 pad-1, one row tap
        w = np.asarray(w)
        cout, cin = w.shape[0], w.shape[1]
        M = np.zeros((W * cin, W * cout), np.float32)
        for oj in range(W):
            for dj in range(w.shape[3]):
                j = oj + dj - 1
                if 0 <= j < W:
                    M[j * cin:(j + 1) * cin, oj * cout:(oj + 1) * cout] = w[:, :, di, dj].T
        return M

    def blockdiag(w2d, W):                     # 1x1 conv, stride 1
        w2d = np.asarray(w2d)
        cout, cin = w2d.shape
        M = np.zeros((W * cin, W * cout), np.float32)
        for j in range(W):
            M[j * cin:(j + 1) * cin, j * cout:(j + 1) * cout] = w2d.T
        return M

    def blockdiag_s2(w2d, win_, wout_):        # 1x1 conv, stride 2 (cols)
        w2d = np.asarray(w2d)
        cout, cin = w2d.shape
        M = np.zeros((win_ * cin, wout_ * cout), np.float32)
        for oj in range(wout_):
            j = 2 * oj
            M[j * cin:(j + 1) * cin, oj * cout:(oj + 1) * cout] = w2d.T
        return M

    def col_subsample(cc, win_, wout_):        # pure ::2 column selection
        M = np.zeros((win_ * cc, wout_ * cc), np.float32)
        for oj in range(wout_):
            j = 2 * oj
            M[j * cc:(j + 1) * cc, oj * cc:(oj + 1) * cc] = np.eye(cc, dtype=np.float32)
        return M

    def chan_pool(cc, W):                      # (W*C, C) channel pooling matrix
        return np.tile(np.eye(cc, dtype=np.float32), (W, 1))

    a1 = np.stack([row_sel(h1, hin, lambda r, ki=ki: 2 * r + ki - 1) for ki in range(4)])
    m1 = np.stack([col_w_s2(p["w1"], ki, win, w1) for ki in range(4)])
    a2 = np.stack([row_sel(h2, h1, lambda r, ki=ki: 2 * r + ki - 1) for ki in range(4)])
    m2 = np.stack([col_w_s2(p["w2"], ki, w1, w2) for ki in range(4)])
    b3 = np.stack([row_sel(h2, h2, lambda r, di=di: r + di - 1) for di in range(3)])
    n1 = np.stack([col_w_s1(r1["w3"], di, w2) for di in range(3)])
    n2 = np.stack([col_w_s1(r2["w3"], di, w2) for di in range(3)])
    k1 = blockdiag(np.asarray(r1["w1x1"])[:, :, 0, 0], w2)
    s4 = row_sel(h3, h2, lambda r: 2 * r)
    k2 = blockdiag_s2(np.asarray(r2["w1x1"])[:, :, 0, 0], w2, w3)
    c4 = col_subsample(c, w2, w3)
    ko = blockdiag(np.asarray(p["w_out"])[:, :, 0, 0], w3)
    bo = np.tile(np.asarray(p["b_out"]).astype(np.float32), (w3,))[None, :]

    p1 = chan_pool(c, w1)
    p2 = chan_pool(c, w2)
    p3 = chan_pool(c, w3)

    g = np.stack([np.asarray(v).astype(np.float32) for v in
                  (p["bn1_g"], p["bn2_g"], r1["bn3_g"], r1["bn1_g"],
                   r2["bn3_g"], r2["bn1_g"])])
    bt = np.stack([np.asarray(v).astype(np.float32) for v in
                   (p["bn1_b"], p["bn2_b"], r1["bn3_b"], r1["bn1_b"],
                    r2["bn3_b"], r2["bn1_b"])])

    host = {"a1": a1, "m1": m1, "a2": a2, "m2": m2, "b3": b3, "n1": n1,
            "n2": n2, "k1": k1, "s4": s4, "k2": k2, "c4": c4, "ko": ko,
            "bo": bo, "p1": p1, "p1t": p1.T, "p2": p2, "p2t": p2.T,
            "p3": p3, "p3t": p3.T, "g": g, "bt": bt}
    return {k: jnp.asarray(v) for k, v in host.items()}


# --------------------------- deterministic params ---------------------------

def make_params(key, channels, output_size):
    # PyTorch-layout parameters (Cout, Cin, kh, kw), BN gamma/beta per channel.
    ks = jax.random.split(key, 8)

    def conv_w(k, cout, cin, kh, kw):
        fan_in = cin * kh * kw
        return jax.random.normal(k, (cout, cin, kh, kw), jnp.float32) / jnp.sqrt(fan_in)

    def res_params(k3, k1, c):
        return {
            "w3": conv_w(k3, c, c, 3, 3),
            "bn3_g": jnp.ones((c,), jnp.float32), "bn3_b": jnp.zeros((c,), jnp.float32),
            "w1x1": conv_w(k1, c, c, 1, 1),
            "bn1_g": jnp.ones((c,), jnp.float32), "bn1_b": jnp.zeros((c,), jnp.float32),
        }

    c = channels
    return {
        "w1": conv_w(ks[0], c, 1, 4, 4),
        "bn1_g": jnp.ones((c,), jnp.float32), "bn1_b": jnp.zeros((c,), jnp.float32),
        "w2": conv_w(ks[1], c, c, 4, 4),
        "bn2_g": jnp.ones((c,), jnp.float32), "bn2_b": jnp.zeros((c,), jnp.float32),
        "r1": res_params(ks[2], ks[3], c),
        "r2": res_params(ks[4], ks[5], c),
        "w_out": conv_w(ks[6], output_size, c, 1, 1),
        "b_out": 0.01 * jax.random.normal(ks[7], (output_size,), jnp.float32),
    }


if __name__ == "__main__":
    key = jax.random.PRNGKey(0)
    kx, kp = jax.random.split(key)

    channels, output_size = 8, 16
    x = jax.random.normal(kx, (2, 1, 32, 32), jnp.float32)   # NCHW, like PyTorch
    params = make_params(kp, channels, output_size)
    mats = prepare_mats(params, n=2, hin=32, win=32)

    fwd = jax.jit(encoder_forward)
    y = jax.block_until_ready(fwd(x, mats))

    # 32 -> 16 -> 8 -> 8 (Residual) -> 4 (Residual ds) -> 4 (1x1 conv)
    assert y.shape == (2, output_size, 4, 4), y.shape
    assert bool(jnp.all(jnp.isfinite(y)))
    print("KERNEL_OK")
</pallas_src>

<mosaic_0001>
module attributes {stable_mosaic.version = 11 : i64} {
  func.func @_encoder_kernel(%arg0: i32, %arg1: memref<64x32xf32, #tpu.memory_space<vmem>>, %arg2: memref<4x32x64xf32, #tpu.memory_space<vmem>>, %arg3: memref<4x32x128xf32, #tpu.memory_space<vmem>>, %arg4: memref<4x16x32xf32, #tpu.memory_space<vmem>>, %arg5: memref<4x128x64xf32, #tpu.memory_space<vmem>>, %arg6: memref<3x16x16xf32, #tpu.memory_space<vmem>>, %arg7: memref<3x64x64xf32, #tpu.memory_space<vmem>>, %arg8: memref<3x64x64xf32, #tpu.memory_space<vmem>>, %arg9: memref<64x64xf32, #tpu.memory_space<vmem>>, %arg10: memref<8x16xf32, #tpu.memory_space<vmem>>, %arg11: memref<64x32xf32, #tpu.memory_space<vmem>>, %arg12: memref<64x32xf32, #tpu.memory_space<vmem>>, %arg13: memref<32x64xf32, #tpu.memory_space<vmem>>, %arg14: memref<1x64xf32, #tpu.memory_space<vmem>>, %arg15: memref<128x8xf32, #tpu.memory_space<vmem>>, %arg16: memref<8x128xf32, #tpu.memory_space<vmem>>, %arg17: memref<64x8xf32, #tpu.memory_space<vmem>>, %arg18: memref<8x64xf32, #tpu.memory_space<vmem>>, %arg19: memref<32x8xf32, #tpu.memory_space<vmem>>, %arg20: memref<8x32xf32, #tpu.memory_space<vmem>>, %arg21: memref<6x8xf32, #tpu.memory_space<vmem>>, %arg22: memref<6x8xf32, #tpu.memory_space<vmem>>, %arg23: memref<8x64xf32, #tpu.memory_space<vmem>>) attributes {dimension_semantics = [#tpu.dimension_semantics<arbitrary>], iteration_bounds = array<i64: 1>, scalar_prefetch = 0 : i64, scratch_operands = 0 : i64, tpu.core_type = #tpu.core_type<tc>, window_params = [{pipeline_mode = #tpu.pipeline_mode<synchronous>, transform_indices = @transform_0, window_bounds = array<i64: 64, 32>}, {pipeline_mode = #tpu.pipeline_mode<synchronous>, transform_indices = @transform_1, window_bounds = array<i64: 4, 32, 64>}, {pipeline_mode = #tpu.pipeline_mode<synchronous>, transform_indices = @transform_2, window_bounds = array<i64: 4, 32, 128>}, {pipeline_mode = #tpu.pipeline_mode<synchronous>, transform_indices = @transform_3, window_bounds = array<i64: 4, 16, 32>}, {pipeline_mode = #tpu.pipeline_mode<synchronous>, transform_indices = @transform_4, window_bounds = array<i64: 4, 128, 64>}, {pipeline_mode = #tpu.pipeline_mode<synchronous>, transform_indices = @transform_5, window_bounds = array<i64: 3, 16, 16>}, {pipeline_mode = #tpu.pipeline_mode<synchronous>, transform_indices = @transform_6, window_bounds = array<i64: 3, 64, 64>}, {pipeline_mode = #tpu.pipeline_mode<synchronous>, transform_indices = @transform_7, window_bounds = array<i64: 3, 64, 64>}, {pipeline_mode = #tpu.pipeline_mode<synchronous>, transform_indices = @transform_8, window_bounds = array<i64: 64, 64>}, {pipeline_mode = #tpu.pipeline_mode<synchronous>, transform_indices = @transform_9, window_bounds = array<i64: 8, 16>}, {pipeline_mode = #tpu.pipeline_mode<synchronous>, transform_indices = @transform_10, window_bounds = array<i64: 64, 32>}, {pipeline_mode = #tpu.pipeline_mode<synchronous>, transform_indices = @transform_11, window_bounds = array<i64: 64, 32>}, {pipeline_mode = #tpu.pipeline_mode<synchronous>, transform_indices = @transform_12, window_bounds = array<i64: 32, 64>}, {pipeline_mode = #tpu.pipeline_mode<synchronous>, transform_indices = @transform_13, window_bounds = array<i64: 1, 64>}, {pipeline_mode = #tpu.pipeline_mode<synchronous>, transform_indices = @transform_14, window_bounds = array<i64: 128, 8>}, {pipeline_mode = #tpu.pipeline_mode<synchronous>, transform_indices = @transform_15, window_bounds = array<i64: 8, 128>}, {pipeline_mode = #tpu.pipeline_mode<synchronous>, transform_indices = @transform_16, window_bounds = array<i64: 64, 8>}, {pipeline_mode = #tpu.pipeline_mode<synchronous>, transform_indices = @transform_17, window_bounds = array<i64: 8, 64>}, {pipeline_mode = #tpu.pipeline_mode<synchronous>, transform_indices = @transform_18, window_bounds = array<i64: 32, 8>}, {pipeline_mode = #tpu.pipeline_mode<synchronous>, transform_indices = @transform_19, window_bounds = array<i64: 8, 32>}, {pipeline_mode = #tpu.pipeline_mode<synchronous>, transform_indices = @transform_20, window_bounds = array<i64: 6, 8>}, {pipeline_mode = #tpu.pipeline_mode<synchronous>, transform_indices = @transform_21, window_bounds = array<i64: 6, 8>}, {pipeline_mode = #tpu.pipeline_mode<synchronous>, transform_indices = @transform_22, window_bounds = array<i64: 8, 64>}]} {
    %c0 = arith.constant 0 : index
    %c0_0 = arith.constant 0 : index
    %0 = vector.load %arg1[%c0, %c0_0] : memref<64x32xf32, #tpu.memory_space<vmem>>, vector<64x32xf32>
    %c0_1 = arith.constant 0 : index
    %c0_2 = arith.constant 0 : index
    %c0_3 = arith.constant 0 : index
    %1 = vector.load %arg2[%c0_1, %c0_2, %c0_3] : memref<4x32x64xf32, #tpu.memory_space<vmem>>, vector<1x32x64xf32>
    %2 = vector.shape_cast %1 : vector<1x32x64xf32> to vector<32x64xf32>
    %cst = arith.constant dense<0.000000e+00> : vector<32x32xf32>
    %3 = tpu.matmul %2, %0, %cst {dimension_numbers = #tpu.dot_dimension_numbers<[1], [0], [0], [1], [0, 0, 1, 1], [], []>} : vector<32x64xf32>, vector<64x32xf32>, vector<32x32xf32> -> vector<32x32xf32>
    %c0_4 = arith.constant 0 : index
    %c0_5 = arith.constant 0 : index
    %c0_6 = arith.constant 0 : index
    %4 = vector.load %arg3[%c0_4, %c0_5, %c0_6] : memref<4x32x128xf32, #tpu.memory_space<vmem>>, vector<1x32x128xf32>
    %5 = vector.shape_cast %4 : vector<1x32x128xf32> to vector<32x128xf32>
    %cst_7 = arith.constant dense<0.000000e+00> : vector<32x128xf32>
    %6 = tpu.matmul %3, %5, %cst_7 {dimension_numbers = #tpu.dot_dimension_numbers<[1], [0], [0], [1], [0, 0, 1, 1], [], []>} : vector<32x32xf32>, vector<32x128xf32>, vector<32x128xf32> -> vector<32x128xf32>
    %c1 = arith.constant 1 : index
    %c0_8 = arith.constant 0 : index
    %c0_9 = arith.constant 0 : index
    %7 = vector.load %arg2[%c1, %c0_8, %c0_9] : memref<4x32x64xf32, #tpu.memory_space<vmem>>, vector<1x32x64xf32>
    %8 = vector.shape_cast %7 : vector<1x32x64xf32> to vector<32x64xf32>
    %cst_10 = arith.constant dense<0.000000e+00> : vector<32x32xf32>
    %9 = tpu.matmul %8, %0, %cst_10 {dimension_numbers = #tpu.dot_dimension_numbers<[1], [0], [0], [1], [0, 0, 1, 1], [], []>} : vector<32x64xf32>, vector<64x32xf32>, vector<32x32xf32> -> vector<32x32xf32>
    %c1_11 = arith.constant 1 : index
    %c0_12 = arith.constant 0 : index
    %c0_13 = arith.constant 0 : index
    %10 = vector.load %arg3[%c1_11, %c0_12, %c0_13] : memref<4x32x128xf32, #tpu.memory_space<vmem>>, vector<1x32x128xf32>
    %11 = vector.shape_cast %10 : vector<1x32x128xf32> to vector<32x128xf32>
    %cst_14 = arith.constant dense<0.000000e+00> : vector<32x128xf32>
    %12 = tpu.matmul %9, %11, %cst_14 {dimension_numbers = #tpu.dot_dimension_numbers<[1], [0], [0], [1], [0, 0, 1, 1], [], []>} : vector<32x32xf32>, vector<32x128xf32>, vector<32x128xf32> -> vector<32x128xf32>
    %13 = arith.addf %6, %12 : vector<32x128xf32>
    %c2 = arith.constant 2 : index
    %c0_15 = arith.constant 0 : index
    %c0_16 = arith.constant 0 : index
    %14 = vector.load %arg2[%c2, %c0_15, %c0_16] : memref<4x32x64xf32, #tpu.memory_space<vmem>>, vector<1x32x64xf32>
    %15 = vector.shape_cast %14 : vector<1x32x64xf32> to vector<32x64xf32>
    %cst_17 = arith.constant dense<0.000000e+00> : vector<32x32xf32>
    %16 = tpu.matmul %15, %0, %cst_17 {dimension_numbers = #tpu.dot_dimension_numbers<[1], [0], [0], [1], [0, 0, 1, 1], [], []>} : vector<32x64xf32>, vector<64x32xf32>, vector<32x32xf32> -> vector<32x32xf32>
    %c2_18 = arith.constant 2 : index
    %c0_19 = arith.constant 0 : index
    %c0_20 = arith.constant 0 : index
    %17 = vector.load %arg3[%c2_18, %c0_19, %c0_20] : memref<4x32x128xf32, #tpu.memory_space<vmem>>, vector<1x32x128xf32>
    %18 = vector.shape_cast %17 : vector<1x32x128xf32> to vector<32x128xf32>
    %cst_21 = arith.constant dense<0.000000e+00> : vector<32x128xf32>
    %19 = tpu.matmul %16, %18, %cst_21 {dimension_numbers = #tpu.dot_dimension_numbers<[1], [0], [0], [1], [0, 0, 1, 1], [], []>} : vector<32x32xf32>, vector<32x128xf32>, vector<32x128xf32> -> vector<32x128xf32>
    %20 = arith.addf %13, %19 : vector<32x128xf32>
    %c3 = arith.constant 3 : index
    %c0_22 = arith.constant 0 : index
    %c0_23 = arith.constant 0 : index
    %21 = vector.load %arg2[%c3, %c0_22, %c0_23] : memref<4x32x64xf32, #tpu.memory_space<vmem>>, vector<1x32x64xf32>
    %22 = vector.shape_cast %21 : vector<1x32x64xf32> to vector<32x64xf32>
    %cst_24 = arith.constant dense<0.000000e+00> : vector<32x32xf32>
    %23 = tpu.matmul %22, %0, %cst_24 {dimension_numbers = #tpu.dot_dimension_numbers<[1], [0], [0], [1], [0, 0, 1, 1], [], []>} : vector<32x64xf32>, vector<64x32xf32>, vector<32x32xf32> -> vector<32x32xf32>
    %c3_25 = arith.constant 3 : index
    %c0_26 = arith.constant 0 : index
    %c0_27 = arith.constant 0 : index
    %24 = vector.load %arg3[%c3_25, %c0_26, %c0_27] : memref<4x32x128xf32, #tpu.memory_space<vmem>>, vector<1x32x128xf32>
    %25 = vector.shape_cast %24 : vector<1x32x128xf32> to vector<32x128xf32>
    %cst_28 = arith.constant dense<0.000000e+00> : vector<32x128xf32>
    %26 = tpu.matmul %23, %25, %cst_28 {dimension_numbers = #tpu.dot_dimension_numbers<[1], [0], [0], [1], [0, 0, 1, 1], [], []>} : vector<32x32xf32>, vector<32x128xf32>, vector<32x128xf32> -> vector<32x128xf32>
    %27 = arith.addf %20, %26 : vector<32x128xf32>
    %c0_29 = arith.constant 0 : index
    %c0_30 = arith.constant 0 : index
    %28 = vector.load %arg15[%c0_29, %c0_30] : memref<128x8xf32, #tpu.memory_space<vmem>>, vector<128x8xf32>
    %c0_31 = arith.constant 0 : index
    %c0_32 = arith.constant 0 : index
    %29 = vector.load %arg16[%c0_31, %c0_32] : memref<8x128xf32, #tpu.memory_space<vmem>>, vector<8x128xf32>
    %c0_33 = arith.constant 0 : index
    %c0_34 = arith.constant 0 : index
    %30 = vector.load %arg21[%c0_33, %c0_34] : memref<6x8xf32, #tpu.memory_space<vmem>>, vector<1x8xf32>
    %c0_35 = arith.constant 0 : index
    %c0_36 = arith.constant 0 : index
    %31 = vector.load %arg22[%c0_35, %c0_36] : memref<6x8xf32, #tpu.memory_space<vmem>>, vector<1x8xf32>
    %cst_37 = arith.constant dense<0.000000e+00> : vector<128xf32>
    %32 = vector.multi_reduction <add>, %27, %cst_37 [0] : vector<32x128xf32> to vector<128xf32>
    %33 = vector.shape_cast %32 : vector<128xf32> to vector<1x128xf32>
    %cst_38 = arith.constant dense<0.000000e+00> : vector<1x8xf32>
    %34 = tpu.matmul %33, %28, %cst_38 {dimension_numbers = #tpu.dot_dimension_numbers<[1], [0], [0], [1], [0, 0, 1, 1], [], []>} : vector<1x128xf32>, vector<128x8xf32>, vector<1x8xf32> -> vector<1x8xf32>
    %35 = arith.mulf %27, %27 : vector<32x128xf32>
    %cst_39 = arith.constant dense<0.000000e+00> : vector<128xf32>
    %36 = vector.multi_reduction <add>, %35, %cst_39 [0] : vector<32x128xf32> to vector<128xf32>
    %37 = vector.shape_cast %36 : vector<128xf32> to vector<1x128xf32>
    %cst_40 = arith.constant dense<0.000000e+00> : vector<1x8xf32>
    %38 = tpu.matmul %37, %28, %cst_40 {dimension_numbers = #tpu.dot_dimension_numbers<[1], [0], [0], [1], [0, 0, 1, 1], [], []>} : vector<1x128xf32>, vector<128x8xf32>, vector<1x8xf32> -> vector<1x8xf32>
    %cst_41 = arith.constant 5.120000e+02 : f32
    %39 = vector.broadcast %cst_41 : f32 to vector<1x8xf32>
    %40 = arith.divf %34, %39 : vector<1x8xf32>
    %cst_42 = arith.constant 5.120000e+02 : f32
    %41 = vector.broadcast %cst_42 : f32 to vector<1x8xf32>
    %42 = arith.divf %38, %41 : vector<1x8xf32>
    %43 = arith.mulf %40, %40 : vector<1x8xf32>
    %44 = arith.subf %42, %43 : vector<1x8xf32>
    %cst_43 = arith.constant 0.000000e+00 : f32
    %45 = vector.broadcast %cst_43 : f32 to vector<1x8xf32>
    %46 = arith.maximumf %44, %45 : vector<1x8xf32>
    %cst_44 = arith.constant 9.99999974E-6 : f32
    %47 = vector.broadcast %cst_44 : f32 to vector<1x8xf32>
    %48 = arith.addf %46, %47 : vector<1x8xf32>
    %49 = math.rsqrt %48 : vector<1x8xf32>
    %50 = arith.mulf %30, %49 : vector<1x8xf32>
    %51 = arith.mulf %40, %50 : vector<1x8xf32>
    %52 = arith.subf %31, %51 : vector<1x8xf32>
    %cst_45 = arith.constant dense<0.000000e+00> : vector<1x128xf32>
    %53 = tpu.matmul %50, %29, %cst_45 {dimension_numbers = #tpu.dot_dimension_numbers<[1], [0], [0], [1], [0, 0, 1, 1], [], []>} : vector<1x8xf32>, vector<8x128xf32>, vector<1x128xf32> -> vector<1x128xf32>
    %cst_46 = arith.constant dense<0.000000e+00> : vector<1x128xf32>
    %54 = tpu.matmul %52, %29, %cst_46 {dimension_numbers = #tpu.dot_dimension_numbers<[1], [0], [0], [1], [0, 0, 1, 1], [], []>} : vector<1x8xf32>, vector<8x128xf32>, vector<1x128xf32> -> vector<1x128xf32>
    %55 = vector.broadcast %53 : vector<1x128xf32> to vector<32x128xf32>
    %56 = arith.mulf %27, %55 : vector<32x128xf32>
    %57 = vector.broadcast %54 : vector<1x128xf32> to vector<32x128xf32>
    %58 = arith.addf %56, %57 : vector<32x128xf32>
    %cst_47 = arith.constant 0.000000e+00 : f32
    %59 = vector.broadcast %cst_47 : f32 to vector<32x128xf32>
    %60 = arith.maximumf %58, %59 : vector<32x128xf32>
    %c0_48 = arith.constant 0 : index
    %c0_49 = arith.constant 0 : index
    %c0_50 = arith.constant 0 : index
    %61 = vector.load %arg4[%c0_48, %c0_49, %c0_50] : memref<4x16x32xf32, #tpu.memory_space<vmem>>, vector<1x16x32xf32>
    %62 = vector.shape_cast %61 : vector<1x16x32xf32> to vector<16x32xf32>
    %cst_51 = arith.constant dense<0.000000e+00> : vector<16x128xf32>
    %63 = tpu.matmul %62, %60, %cst_51 {dimension_numbers = #tpu.dot_dimension_numbers<[1], [0], [0], [1], [0, 0, 1, 1], [], []>} : vector<16x32xf32>, vector<32x128xf32>, vector<16x128xf32> -> vector<16x128xf32>
    %c0_52 = arith.constant 0 : index
    %c0_53 = arith.constant 0 : index
    %c0_54 = arith.constant 0 : index
    %64 = vector.load %arg5[%c0_52, %c0_53, %c0_54] : memref<4x128x64xf32, #tpu.memory_space<vmem>>, vector<1x128x64xf32>
    %65 = vector.shape_cast %64 : vector<1x128x64xf32> to vector<128x64xf32>
    %cst_55 = arith.constant dense<0.000000e+00> : vector<16x64xf32>
    %66 = tpu.matmul %63, %65, %cst_55 {dimension_numbers = #tpu.dot_dimension_numbers<[1], [0], [0], [1], [0, 0, 1, 1], [], []>} : vector<16x128xf32>, vector<128x64xf32>, vector<16x64xf32> -> vector<16x64xf32>
    %c1_56 = arith.constant 1 : index
    %c0_57 = arith.constant 0 : index
    %c0_58 = arith.constant 0 : index
    %67 = vector.load %arg4[%c1_56, %c0_57, %c0_58] : memref<4x16x32xf32, #tpu.memory_space<vmem>>, vector<1x16x32xf32>
    %68 = vector.shape_cast %67 : vector<1x16x32xf32> to vector<16x32xf32>
    %cst_59 = arith.constant dense<0.000000e+00> : vector<16x128xf32>
    %69 = tpu.matmul %68, %60, %cst_59 {dimension_numbers = #tpu.dot_dimension_numbers<[1], [0], [0], [1], [0, 0, 1, 1], [], []>} : vector<16x32xf32>, vector<32x128xf32>, vector<16x128xf32> -> vector<16x128xf32>
    %c1_60 = arith.constant 1 : index
    %c0_61 = arith.constant 0 : index
    %c0_62 = arith.constant 0 : index
    %70 = vector.load %arg5[%c1_60, %c0_61, %c0_62] : memref<4x128x64xf32, #tpu.memory_space<vmem>>, vector<1x128x64xf32>
    %71 = vector.shape_cast %70 : vector<1x128x64xf32> to vector<128x64xf32>
    %cst_63 = arith.constant dense<0.000000e+00> : vector<16x64xf32>
    %72 = tpu.matmul %69, %71, %cst_63 {dimension_numbers = #tpu.dot_dimension_numbers<[1], [0], [0], [1], [0, 0, 1, 1], [], []>} : vector<16x128xf32>, vector<128x64xf32>, vector<16x64xf32> -> vector<16x64xf32>
    %73 = arith.addf %66, %72 : vector<16x64xf32>
    %c2_64 = arith.constant 2 : index
    %c0_65 = arith.constant 0 : index
    %c0_66 = arith.constant 0 : index
    %74 = vector.load %arg4[%c2_64, %c0_65, %c0_66] : memref<4x16x32xf32, #tpu.memory_space<vmem>>, vector<1x16x32xf32>
    %75 = vector.shape_cast %74 : vector<1x16x32xf32> to vector<16x32xf32>
    %cst_67 = arith.constant dense<0.000000e+00> : vector<16x128xf32>
    %76 = tpu.matmul %75, %60, %cst_67 {dimension_numbers = #tpu.dot_dimension_numbers<[1], [0], [0], [1], [0, 0, 1, 1], [], []>} : vector<16x32xf32>, vector<32x128xf32>, vector<16x128xf32> -> vector<16x128xf32>
    %c2_68 = arith.constant 2 : index
    %c0_69 = arith.constant 0 : index
    %c0_70 = arith.constant 0 : index
    %77 = vector.load %arg5[%c2_68, %c0_69, %c0_70] : memref<4x128x64xf32, #tpu.memory_space<vmem>>, vector<1x128x64xf32>
    %78 = vector.shape_cast %77 : vector<1x128x64xf32> to vector<128x64xf32>
    %cst_71 = arith.constant dense<0.000000e+00> : vector<16x64xf32>
    %79 = tpu.matmul %76, %78, %cst_71 {dimension_numbers = #tpu.dot_dimension_numbers<[1], [0], [0], [1], [0, 0, 1, 1], [], []>} : vector<16x128xf32>, vector<128x64xf32>, vector<16x64xf32> -> vector<16x64xf32>
    %80 = arith.addf %73, %79 : vector<16x64xf32>
    %c3_72 = arith.constant 3 : index
    %c0_73 = arith.constant 0 : index
    %c0_74 = arith.constant 0 : index
    %81 = vector.load %arg4[%c3_72, %c0_73, %c0_74] : memref<4x16x32xf32, #tpu.memory_space<vmem>>, vector<1x16x32xf32>
    %82 = vector.shape_cast %81 : vector<1x16x32xf32> to vector<16x32xf32>
    %cst_75 = arith.constant dense<0.000000e+00> : vector<16x128xf32>
    %83 = tpu.matmul %82, %60, %cst_75 {dimension_numbers = #tpu.dot_dimension_numbers<[1], [0], [0], [1], [0, 0, 1, 1], [], []>} : vector<16x32xf32>, vector<32x128xf32>, vector<16x128xf32> -> vector<16x128xf32>
    %c3_76 = arith.constant 3 : index
    %c0_77 = arith.constant 0 : index
    %c0_78 = arith.constant 0 : index
    %84 = vector.load %arg5[%c3_76, %c0_77, %c0_78] : memref<4x128x64xf32, #tpu.memory_space<vmem>>, vector<1x128x64xf32>
    %85 = vector.shape_cast %84 : vector<1x128x64xf32> to vector<128x64xf32>
    %cst_79 = arith.constant dense<0.000000e+00> : vector<16x64xf32>
    %86 = tpu.matmul %83, %85, %cst_79 {dimension_numbers = #tpu.dot_dimension_numbers<[1], [0], [0], [1], [0, 0, 1, 1], [], []>} : vector<16x128xf32>, vector<128x64xf32>, vector<16x64xf32> -> vector<16x64xf32>
    %87 = arith.addf %80, %86 : vector<16x64xf32>
    %c0_80 = arith.constant 0 : index
    %c0_81 = arith.constant 0 : index
    %88 = vector.load %arg17[%c0_80, %c0_81] : memref<64x8xf32, #tpu.memory_space<vmem>>, vector<64x8xf32>
    %c0_82 = arith.constant 0 : index
    %c0_83 = arith.constant 0 : index
    %89 = vector.load %arg18[%c0_82, %c0_83] : memref<8x64xf32, #tpu.memory_space<vmem>>, vector<8x64xf32>
    %c1_84 = arith.constant 1 : index
    %c0_85 = arith.constant 0 : index
    %90 = vector.load %arg21[%c1_84, %c0_85] : memref<6x8xf32, #tpu.memory_space<vmem>>, vector<1x8xf32>
    %c1_86 = arith.constant 1 : index
    %c0_87 = arith.constant 0 : index
    %91 = vector.load %arg22[%c1_86, %c0_87] : memref<6x8xf32, #tpu.memory_space<vmem>>, vector<1x8xf32>
    %cst_88 = arith.constant dense<0.000000e+00> : vector<64xf32>
    %92 = vector.multi_reduction <add>, %87, %cst_88 [0] : vector<16x64xf32> to vector<64xf32>
    %93 = vector.shape_cast %92 : vector<64xf32> to vector<1x64xf32>
    %cst_89 = arith.constant dense<0.000000e+00> : vector<1x8xf32>
    %94 = tpu.matmul %93, %88, %cst_89 {dimension_numbers = #tpu.dot_dimension_numbers<[1], [0], [0], [1], [0, 0, 1, 1], [], []>} : vector<1x64xf32>, vector<64x8xf32>, vector<1x8xf32> -> vector<1x8xf32>
    %95 = arith.mulf %87, %87 : vector<16x64xf32>
    %cst_90 = arith.constant dense<0.000000e+00> : vector<64xf32>
    %96 = vector.multi_reduction <add>, %95, %cst_90 [0] : vector<16x64xf32> to vector<64xf32>
    %97 = vector.shape_cast %96 : vector<64xf32> to vector<1x64xf32>
    %cst_91 = arith.constant dense<0.000000e+00> : vector<1x8xf32>
    %98 = tpu.matmul %97, %88, %cst_91 {dimension_numbers = #tpu.dot_dimension_numbers<[1], [0], [0], [1], [0, 0, 1, 1], [], []>} : vector<1x64xf32>, vector<64x8xf32>, vector<1x8xf32> -> vector<1x8xf32>
    %cst_92 = arith.constant 1.280000e+02 : f32
    %99 = vector.broadcast %cst_92 : f32 to vector<1x8xf32>
    %100 = arith.divf %94, %99 : vector<1x8xf32>
    %cst_93 = arith.constant 1.280000e+02 : f32
    %101 = vector.broadcast %cst_93 : f32 to vector<1x8xf32>
    %102 = arith.divf %98, %101 : vector<1x8xf32>
    %103 = arith.mulf %100, %100 : vector<1x8xf32>
    %104 = arith.subf %102, %103 : vector<1x8xf32>
    %cst_94 = arith.constant 0.000000e+00 : f32
    %105 = vector.broadcast %cst_94 : f32 to vector<1x8xf32>
    %106 = arith.maximumf %104, %105 : vector<1x8xf32>
    %cst_95 = arith.constant 9.99999974E-6 : f32
    %107 = vector.broadcast %cst_95 : f32 to vector<1x8xf32>
    %108 = arith.addf %106, %107 : vector<1x8xf32>
    %109 = math.rsqrt %108 : vector<1x8xf32>
    %110 = arith.mulf %90, %109 : vector<1x8xf32>
    %111 = arith.mulf %100, %110 : vector<1x8xf32>
    %112 = arith.subf %91, %111 : vector<1x8xf32>
    %cst_96 = arith.constant dense<0.000000e+00> : vector<1x64xf32>
    %113 = tpu.matmul %110, %89, %cst_96 {dimension_numbers = #tpu.dot_dimension_numbers<[1], [0], [0], [1], [0, 0, 1, 1], [], []>} : vector<1x8xf32>, vector<8x64xf32>, vector<1x64xf32> -> vector<1x64xf32>
    %cst_97 = arith.constant dense<0.000000e+00> : vector<1x64xf32>
    %114 = tpu.matmul %112, %89, %cst_97 {dimension_numbers = #tpu.dot_dimension_numbers<[1], [0], [0], [1], [0, 0, 1, 1], [], []>} : vector<1x8xf32>, vector<8x64xf32>, vector<1x64xf32> -> vector<1x64xf32>
    %115 = vector.broadcast %113 : vector<1x64xf32> to vector<16x64xf32>
    %116 = arith.mulf %87, %115 : vector<16x64xf32>
    %117 = vector.broadcast %114 : vector<1x64xf32> to vector<16x64xf32>
    %118 = arith.addf %116, %117 : vector<16x64xf32>
    %cst_98 = arith.constant 0.000000e+00 : f32
    %119 = vector.broadcast %cst_98 : f32 to vector<16x64xf32>
    %120 = arith.maximumf %118, %119 : vector<16x64xf32>
    %c0_99 = arith.constant 0 : index
    %c0_100 = arith.constant 0 : index
    %c0_101 = arith.constant 0 : index
    %121 = vector.load %arg6[%c0_99, %c0_100, %c0_101] : memref<3x16x16xf32, #tpu.memory_space<vmem>>, vector<1x16x16xf32>
    %122 = vector.shape_cast %121 : vector<1x16x16xf32> to vector<16x16xf32>
    %cst_102 = arith.constant dense<0.000000e+00> : vector<16x64xf32>
    %123 = tpu.matmul %122, %120, %cst_102 {dimension_numbers = #tpu.dot_dimension_numbers<[1], [0], [0], [1], [0, 0, 1, 1], [], []>} : vector<16x16xf32>, vector<16x64xf32>, vector<16x64xf32> -> vector<16x64xf32>
    %c0_103 = arith.constant 0 : index
    %c0_104 = arith.constant 0 : index
    %c0_105 = arith.constant 0 : index
    %124 = vector.load %arg7[%c0_103, %c0_104, %c0_105] : memref<3x64x64xf32, #tpu.memory_space<vmem>>, vector<1x64x64xf32>
    %125 = vector.shape_cast %124 : vector<1x64x64xf32> to vector<64x64xf32>
    %cst_106 = arith.constant dense<0.000000e+00> : vector<16x64xf32>
    %126 = tpu.matmul %123, %125, %cst_106 {dimension_numbers = #tpu.dot_dimension_numbers<[1], [0], [0], [1], [0, 0, 1, 1], [], []>} : vector<16x64xf32>, vector<64x64xf32>, vector<16x64xf32> -> vector<16x64xf32>
    %c1_107 = arith.constant 1 : index
    %c0_108 = arith.constant 0 : index
    %c0_109 = arith.constant 0 : index
    %127 = vector.load %arg6[%c1_107, %c0_108, %c0_109] : memref<3x16x16xf32, #tpu.memory_space<vmem>>, vector<1x16x16xf32>
    %128 = vector.shape_cast %127 : vector<1x16x16xf32> to vector<16x16xf32>
    %cst_110 = arith.constant dense<0.000000e+00> : vector<16x64xf32>
    %129 = tpu.matmul %128, %120, %cst_110 {dimension_numbers = #tpu.dot_dimension_numbers<[1], [0], [0], [1], [0, 0, 1, 1], [], []>} : vector<16x16xf32>, vector<16x64xf32>, vector<16x64xf32> -> vector<16x64xf32>
    %c1_111 = arith.constant 1 : index
    %c0_112 = arith.constant 0 : index
    %c0_113 = arith.constant 0 : index
    %130 = vector.load %arg7[%c1_111, %c0_112, %c0_113] : memref<3x64x64xf32, #tpu.memory_space<vmem>>, vector<1x64x64xf32>
    %131 = vector.shape_cast %130 : vector<1x64x64xf32> to vector<64x64xf32>
    %cst_114 = arith.constant dense<0.000000e+00> : vector<16x64xf32>
    %132 = tpu.matmul %129, %131, %cst_114 {dimension_numbers = #tpu.dot_dimension_numbers<[1], [0], [0], [1], [0, 0, 1, 1], [], []>} : vector<16x64xf32>, vector<64x64xf32>, vector<16x64xf32> -> vector<16x64xf32>
    %133 = arith.addf %126, %132 : vector<16x64xf32>
    %c2_115 = arith.constant 2 : index
    %c0_116 = arith.constant 0 : index
    %c0_117 = arith.constant 0 : index
    %134 = vector.load %arg6[%c2_115, %c0_116, %c0_117] : memref<3x16x16xf32, #tpu.memory_space<vmem>>, vector<1x16x16xf32>
    %135 = vector.shape_cast %134 : vector<1x16x16xf32> to vector<16x16xf32>
    %cst_118 = arith.constant dense<0.000000e+00> : vector<16x64xf32>
    %136 = tpu.matmul %135, %120, %cst_118 {dimension_numbers = #tpu.dot_dimension_numbers<[1], [0], [0], [1], [0, 0, 1, 1], [], []>} : vector<16x16xf32>, vector<16x64xf32>, vector<16x64xf32> -> vector<16x64xf32>
    %c2_119 = arith.constant 2 : index
    %c0_120 = arith.constant 0 : index
    %c0_121 = arith.constant 0 : index
    %137 = vector.load %arg7[%c2_119, %c0_120, %c0_121] : memref<3x64x64xf32, #tpu.memory_space<vmem>>, vector<1x64x64xf32>
    %138 = vector.shape_cast %137 : vector<1x64x64xf32> to vector<64x64xf32>
    %cst_122 = arith.constant dense<0.000000e+00> : vector<16x64xf32>
    %139 = tpu.matmul %136, %138, %cst_122 {dimension_numbers = #tpu.dot_dimension_numbers<[1], [0], [0], [1], [0, 0, 1, 1], [], []>} : vector<16x64xf32>, vector<64x64xf32>, vector<16x64xf32> -> vector<16x64xf32>
    %140 = arith.addf %133, %139 : vector<16x64xf32>
    %c0_123 = arith.constant 0 : index
    %c0_124 = arith.constant 0 : index
    %141 = vector.load %arg17[%c0_123, %c0_124] : memref<64x8xf32, #tpu.memory_space<vmem>>, vector<64x8xf32>
    %c0_125 = arith.constant 0 : index
    %c0_126 = arith.constant 0 : index
    %142 = vector.load %arg18[%c0_125, %c0_126] : memref<8x64xf32, #tpu.memory_space<vmem>>, vector<8x64xf32>
    %c2_127 = arith.constant 2 : index
    %c0_128 = arith.constant 0 : index
    %143 = vector.load %arg21[%c2_127, %c0_128] : memref<6x8xf32, #tpu.memory_space<vmem>>, vector<1x8xf32>
    %c2_129 = arith.constant 2 : index
    %c0_130 = arith.constant 0 : index
    %144 = vector.load %arg22[%c2_129, %c0_130] : memref<6x8xf32, #tpu.memory_space<vmem>>, vector<1x8xf32>
    %cst_131 = arith.constant dense<0.000000e+00> : vector<64xf32>
    %145 = vector.multi_reduction <add>, %140, %cst_131 [0] : vector<16x64xf32> to vector<64xf32>
    %146 = vector.shape_cast %145 : vector<64xf32> to vector<1x64xf32>
    %cst_132 = arith.constant dense<0.000000e+00> : vector<1x8xf32>
    %147 = tpu.matmul %146, %141, %cst_132 {dimension_numbers = #tpu.dot_dimension_numbers<[1], [0], [0], [1], [0, 0, 1, 1], [], []>} : vector<1x64xf32>, vector<64x8xf32>, vector<1x8xf32> -> vector<1x8xf32>
    %148 = arith.mulf %140, %140 : vector<16x64xf32>
    %cst_133 = arith.constant dense<0.000000e+00> : vector<64xf32>
    %149 = vector.multi_reduction <add>, %148, %cst_133 [0] : vector<16x64xf32> to vector<64xf32>
    %150 = vector.shape_cast %149 : vector<64xf32> to vector<1x64xf32>
    %cst_134 = arith.constant dense<0.000000e+00> : vector<1x8xf32>
    %151 = tpu.matmul %150, %141, %cst_134 {dimension_numbers = #tpu.dot_dimension_numbers<[1], [0], [0], [1], [0, 0, 1, 1], [], []>} : vector<1x64xf32>, vector<64x8xf32>, vector<1x8xf32> -> vector<1x8xf32>
    %cst_135 = arith.constant 1.280000e+02 : f32
    %152 = vector.broadcast %cst_135 : f32 to vector<1x8xf32>
    %153 = arith.divf %147, %152 : vector<1x8xf32>
    %cst_136 = arith.constant 1.280000e+02 : f32
    %154 = vector.broadcast %cst_136 : f32 to vector<1x8xf32>
    %155 = arith.divf %151, %154 : vector<1x8xf32>
    %156 = arith.mulf %153, %153 : vector<1x8xf32>
    %157 = arith.subf %155, %156 : vector<1x8xf32>
    %cst_137 = arith.constant 0.000000e+00 : f32
    %158 = vector.broadcast %cst_137 : f32 to vector<1x8xf32>
    %159 = arith.maximumf %157, %158 : vector<1x8xf32>
    %cst_138 = arith.constant 9.99999974E-6 : f32
    %160 = vector.broadcast %cst_138 : f32 to vector<1x8xf32>
    %161 = arith.addf %159, %160 : vector<1x8xf32>
    %162 = math.rsqrt %161 : vector<1x8xf32>
    %163 = arith.mulf %143, %162 : vector<1x8xf32>
    %164 = arith.mulf %153, %163 : vector<1x8xf32>
    %165 = arith.subf %144, %164 : vector<1x8xf32>
    %cst_139 = arith.constant dense<0.000000e+00> : vector<1x64xf32>
    %166 = tpu.matmul %163, %142, %cst_139 {dimension_numbers = #tpu.dot_dimension_numbers<[1], [0], [0], [1], [0, 0, 1, 1], [], []>} : vector<1x8xf32>, vector<8x64xf32>, vector<1x64xf32> -> vector<1x64xf32>
    %cst_140 = arith.constant dense<0.000000e+00> : vector<1x64xf32>
    %167 = tpu.matmul %165, %142, %cst_140 {dimension_numbers = #tpu.dot_dimension_numbers<[1], [0], [0], [1], [0, 0, 1, 1], [], []>} : vector<1x8xf32>, vector<8x64xf32>, vector<1x64xf32> -> vector<1x64xf32>
    %168 = vector.broadcast %166 : vector<1x64xf32> to vector<16x64xf32>
    %169 = arith.mulf %140, %168 : vector<16x64xf32>
    %170 = vector.broadcast %167 : vector<1x64xf32> to vector<16x64xf32>
    %171 = arith.addf %169, %170 : vector<16x64xf32>
    %cst_141 = arith.constant 0.000000e+00 : f32
    %172 = vector.broadcast %cst_141 : f32 to vector<16x64xf32>
    %173 = arith.maximumf %171, %172 : vector<16x64xf32>
    %c0_142 = arith.constant 0 : index
    %c0_143 = arith.constant 0 : index
    %174 = vector.load %arg9[%c0_142, %c0_143] : memref<64x64xf32, #tpu.memory_space<vmem>>, vector<64x64xf32>
    %cst_144 = arith.constant dense<0.000000e+00> : vector<16x64xf32>
    %175 = tpu.matmul %173, %174, %cst_144 {dimension_numbers = #tpu.dot_dimension_numbers<[1], [0], [0], [1], [0, 0, 1, 1], [], []>} : vector<16x64xf32>, vector<64x64xf32>, vector<16x64xf32> -> vector<16x64xf32>
    %c0_145 = arith.constant 0 : index
    %c0_146 = arith.constant 0 : index
    %176 = vector.load %arg17[%c0_145, %c0_146] : memref<64x8xf32, #tpu.memory_space<vmem>>, vector<64x8xf32>
    %c0_147 = arith.constant 0 : index
    %c0_148 = arith.constant 0 : index
    %177 = vector.load %arg18[%c0_147, %c0_148] : memref<8x64xf32, #tpu.memory_space<vmem>>, vector<8x64xf32>
    %c3_149 = arith.constant 3 : index
    %c0_150 = arith.constant 0 : index
    %178 = vector.load %arg21[%c3_149, %c0_150] : memref<6x8xf32, #tpu.memory_space<vmem>>, vector<1x8xf32>
    %c3_151 = arith.constant 3 : index
    %c0_152 = arith.constant 0 : index
    %179 = vector.load %arg22[%c3_151, %c0_152] : memref<6x8xf32, #tpu.memory_space<vmem>>, vector<1x8xf32>
    %cst_153 = arith.constant dense<0.000000e+00> : vector<64xf32>
    %180 = vector.multi_reduction <add>, %175, %cst_153 [0] : vector<16x64xf32> to vector<64xf32>
    %181 = vector.shape_cast %180 : vector<64xf32> to vector<1x64xf32>
    %cst_154 = arith.constant dense<0.000000e+00> : vector<1x8xf32>
    %182 = tpu.matmul %181, %176, %cst_154 {dimension_numbers = #tpu.dot_dimension_numbers<[1], [0], [0], [1], [0, 0, 1, 1], [], []>} : vector<1x64xf32>, vector<64x8xf32>, vector<1x8xf32> -> vector<1x8xf32>
    %183 = arith.mulf %175, %175 : vector<16x64xf32>
    %cst_155 = arith.constant dense<0.000000e+00> : vector<64xf32>
    %184 = vector.multi_reduction <add>, %183, %cst_155 [0] : vector<16x64xf32> to vector<64xf32>
    %185 = vector.shape_cast %184 : vector<64xf32> to vector<1x64xf32>
    %cst_156 = arith.constant dense<0.000000e+00> : vector<1x8xf32>
    %186 = tpu.matmul %185, %176, %cst_156 {dimension_numbers = #tpu.dot_dimension_numbers<[1], [0], [0], [1], [0, 0, 1, 1], [], []>} : vector<1x64xf32>, vector<64x8xf32>, vector<1x8xf32> -> vector<1x8xf32>
    %cst_157 = arith.constant 1.280000e+02 : f32
    %187 = vector.broadcast %cst_157 : f32 to vector<1x8xf32>
    %188 = arith.divf %182, %187 : vector<1x8xf32>
    %cst_158 = arith.constant 1.280000e+02 : f32
    %189 = vector.broadcast %cst_158 : f32 to vector<1x8xf32>
    %190 = arith.divf %186, %189 : vector<1x8xf32>
    %191 = arith.mulf %188, %188 : vector<1x8xf32>
    %192 = arith.subf %190, %191 : vector<1x8xf32>
    %cst_159 = arith.constant 0.000000e+00 : f32
    %193 = vector.broadcast %cst_159 : f32 to vector<1x8xf32>
    %194 = arith.maximumf %192, %193 : vector<1x8xf32>
    %cst_160 = arith.constant 9.99999974E-6 : f32
    %195 = vector.broadcast %cst_160 : f32 to vector<1x8xf32>
    %196 = arith.addf %194, %195 : vector<1x8xf32>
    %197 = math.rsqrt %196 : vector<1x8xf32>
    %198 = arith.mulf %178, %197 : vector<1x8xf32>
    %199 = arith.mulf %188, %198 : vector<1x8xf32>
    %200 = arith.subf %179, %199 : vector<1x8xf32>
    %cst_161 = arith.constant dense<0.000000e+00> : vector<1x64xf32>
    %201 = tpu.matmul %198, %177, %cst_161 {dimension_numbers = #tpu.dot_dimension_numbers<[1], [0], [0], [1], [0, 0, 1, 1], [], []>} : vector<1x8xf32>, vector<8x64xf32>, vector<1x64xf32> -> vector<1x64xf32>
    %cst_162 = arith.constant dense<0.000000e+00> : vector<1x64xf32>
    %202 = tpu.matmul %200, %177, %cst_162 {dimension_numbers = #tpu.dot_dimension_numbers<[1], [0], [0], [1], [0, 0, 1, 1], [], []>} : vector<1x8xf32>, vector<8x64xf32>, vector<1x64xf32> -> vector<1x64xf32>
    %203 = vector.broadcast %201 : vector<1x64xf32> to vector<16x64xf32>
    %204 = arith.mulf %175, %203 : vector<16x64xf32>
    %205 = vector.broadcast %202 : vector<1x64xf32> to vector<16x64xf32>
    %206 = arith.addf %204, %205 : vector<16x64xf32>
    %207 = arith.addf %118, %206 : vector<16x64xf32>
    %cst_163 = arith.constant 0.000000e+00 : f32
    %208 = vector.broadcast %cst_163 : f32 to vector<16x64xf32>
    %209 = arith.maximumf %207, %208 : vector<16x64xf32>
    %c0_164 = arith.constant 0 : index
    %c0_165 = arith.constant 0 : index
    %c0_166 = arith.constant 0 : index
    %210 = vector.load %arg6[%c0_164, %c0_165, %c0_166] : memref<3x16x16xf32, #tpu.memory_space<vmem>>, vector<1x16x16xf32>
    %211 = vector.shape_cast %210 : vector<1x16x16xf32> to vector<16x16xf32>
    %cst_167 = arith.constant dense<0.000000e+00> : vector<16x64xf32>
    %212 = tpu.matmul %211, %209, %cst_167 {dimension_numbers = #tpu.dot_dimension_numbers<[1], [0], [0], [1], [0, 0, 1, 1], [], []>} : vector<16x16xf32>, vector<16x64xf32>, vector<16x64xf32> -> vector<16x64xf32>
    %c0_168 = arith.constant 0 : index
    %c0_169 = arith.constant 0 : index
    %c0_170 = arith.constant 0 : index
    %213 = vector.load %arg8[%c0_168, %c0_169, %c0_170] : memref<3x64x64xf32, #tpu.memory_space<vmem>>, vector<1x64x64xf32>
    %214 = vector.shape_cast %213 : vector<1x64x64xf32> to vector<64x64xf32>
    %cst_171 = arith.constant dense<0.000000e+00> : vector<16x64xf32>
    %215 = tpu.matmul %212, %214, %cst_171 {dimension_numbers = #tpu.dot_dimension_numbers<[1], [0], [0], [1], [0, 0, 1, 1], [], []>} : vector<16x64xf32>, vector<64x64xf32>, vector<16x64xf32> -> vector<16x64xf32>
    %c1_172 = arith.constant 1 : index
    %c0_173 = arith.constant 0 : index
    %c0_174 = arith.constant 0 : index
    %216 = vector.load %arg6[%c1_172, %c0_173, %c0_174] : memref<3x16x16xf32, #tpu.memory_space<vmem>>, vector<1x16x16xf32>
    %217 = vector.shape_cast %216 : vector<1x16x16xf32> to vector<16x16xf32>
    %cst_175 = arith.constant dense<0.000000e+00> : vector<16x64xf32>
    %218 = tpu.matmul %217, %209, %cst_175 {dimension_numbers = #tpu.dot_dimension_numbers<[1], [0], [0], [1], [0, 0, 1, 1], [], []>} : vector<16x16xf32>, vector<16x64xf32>, vector<16x64xf32> -> vector<16x64xf32>
    %c1_176 = arith.constant 1 : index
    %c0_177 = arith.constant 0 : index
    %c0_178 = arith.constant 0 : index
    %219 = vector.load %arg8[%c1_176, %c0_177, %c0_178] : memref<3x64x64xf32, #tpu.memory_space<vmem>>, vector<1x64x64xf32>
    %220 = vector.shape_cast %219 : vector<1x64x64xf32> to vector<64x64xf32>
    %cst_179 = arith.constant dense<0.000000e+00> : vector<16x64xf32>
    %221 = tpu.matmul %218, %220, %cst_179 {dimension_numbers = #tpu.dot_dimension_numbers<[1], [0], [0], [1], [0, 0, 1, 1], [], []>} : vector<16x64xf32>, vector<64x64xf32>, vector<16x64xf32> -> vector<16x64xf32>
    %222 = arith.addf %215, %221 : vector<16x64xf32>
    %c2_180 = arith.constant 2 : index
    %c0_181 = arith.constant 0 : index
    %c0_182 = arith.constant 0 : index
    %223 = vector.load %arg6[%c2_180, %c0_181, %c0_182] : memref<3x16x16xf32, #tpu.memory_space<vmem>>, vector<1x16x16xf32>
    %224 = vector.shape_cast %223 : vector<1x16x16xf32> to vector<16x16xf32>
    %cst_183 = arith.constant dense<0.000000e+00> : vector<16x64xf32>
    %225 = tpu.matmul %224, %209, %cst_183 {dimension_numbers = #tpu.dot_dimension_numbers<[1], [0], [0], [1], [0, 0, 1, 1], [], []>} : vector<16x16xf32>, vector<16x64xf32>, vector<16x64xf32> -> vector<16x64xf32>
    %c2_184 = arith.constant 2 : index
    %c0_185 = arith.constant 0 : index
    %c0_186 = arith.constant 0 : index
    %226 = vector.load %arg8[%c2_184, %c0_185, %c0_186] : memref<3x64x64xf32, #tpu.memory_space<vmem>>, vector<1x64x64xf32>
    %227 = vector.shape_cast %226 : vector<1x64x64xf32> to vector<64x64xf32>
    %cst_187 = arith.constant dense<0.000000e+00> : vector<16x64xf32>
    %228 = tpu.matmul %225, %227, %cst_187 {dimension_numbers = #tpu.dot_dimension_numbers<[1], [0], [0], [1], [0, 0, 1, 1], [], []>} : vector<16x64xf32>, vector<64x64xf32>, vector<16x64xf32> -> vector<16x64xf32>
    %229 = arith.addf %222, %228 : vector<16x64xf32>
    %c0_188 = arith.constant 0 : index
    %c0_189 = arith.constant 0 : index
    %230 = vector.load %arg17[%c0_188, %c0_189] : memref<64x8xf32, #tpu.memory_space<vmem>>, vector<64x8xf32>
    %c0_190 = arith.constant 0 : index
    %c0_191 = arith.constant 0 : index
    %231 = vector.load %arg18[%c0_190, %c0_191] : memref<8x64xf32, #tpu.memory_space<vmem>>, vector<8x64xf32>
    %c4 = arith.constant 4 : index
    %c0_192 = arith.constant 0 : index
    %232 = vector.load %arg21[%c4, %c0_192] : memref<6x8xf32, #tpu.memory_space<vmem>>, vector<1x8xf32>
    %c4_193 = arith.constant 4 : index
    %c0_194 = arith.constant 0 : index
    %233 = vector.load %arg22[%c4_193, %c0_194] : memref<6x8xf32, #tpu.memory_space<vmem>>, vector<1x8xf32>
    %cst_195 = arith.constant dense<0.000000e+00> : vector<64xf32>
    %234 = vector.multi_reduction <add>, %229, %cst_195 [0] : vector<16x64xf32> to vector<64xf32>
    %235 = vector.shape_cast %234 : vector<64xf32> to vector<1x64xf32>
    %cst_196 = arith.constant dense<0.000000e+00> : vector<1x8xf32>
    %236 = tpu.matmul %235, %230, %cst_196 {dimension_numbers = #tpu.dot_dimension_numbers<[1], [0], [0], [1], [0, 0, 1, 1], [], []>} : vector<1x64xf32>, vector<64x8xf32>, vector<1x8xf32> -> vector<1x8xf32>
    %237 = arith.mulf %229, %229 : vector<16x64xf32>
    %cst_197 = arith.constant dense<0.000000e+00> : vector<64xf32>
    %238 = vector.multi_reduction <add>, %237, %cst_197 [0] : vector<16x64xf32> to vector<64xf32>
    %239 = vector.shape_cast %238 : vector<64xf32> to vector<1x64xf32>
    %cst_198 = arith.constant dense<0.000000e+00> : vector<1x8xf32>
    %240 = tpu.matmul %239, %230, %cst_198 {dimension_numbers = #tpu.dot_dimension_numbers<[1], [0], [0], [1], [0, 0, 1, 1], [], []>} : vector<1x64xf32>, vector<64x8xf32>, vector<1x8xf32> -> vector<1x8xf32>
    %cst_199 = arith.constant 1.280000e+02 : f32
    %241 = vector.broadcast %cst_199 : f32 to vector<1x8xf32>
    %242 = arith.divf %236, %241 : vector<1x8xf32>
    %cst_200 = arith.constant 1.280000e+02 : f32
    %243 = vector.broadcast %cst_200 : f32 to vector<1x8xf32>
    %244 = arith.divf %240, %243 : vector<1x8xf32>
    %245 = arith.mulf %242, %242 : vector<1x8xf32>
    %246 = arith.subf %244, %245 : vector<1x8xf32>
    %cst_201 = arith.constant 0.000000e+00 : f32
    %247 = vector.broadcast %cst_201 : f32 to vector<1x8xf32>
    %248 = arith.maximumf %246, %247 : vector<1x8xf32>
    %cst_202 = arith.constant 9.99999974E-6 : f32
    %249 = vector.broadcast %cst_202 : f32 to vector<1x8xf32>
    %250 = arith.addf %248, %249 : vector<1x8xf32>
    %251 = math.rsqrt %250 : vector<1x8xf32>
    %252 = arith.mulf %232, %251 : vector<1x8xf32>
    %253 = arith.mulf %242, %252 : vector<1x8xf32>
    %254 = arith.subf %233, %253 : vector<1x8xf32>
    %cst_203 = arith.constant dense<0.000000e+00> : vector<1x64xf32>
    %255 = tpu.matmul %252, %231, %cst_203 {dimension_numbers = #tpu.dot_dimension_numbers<[1], [0], [0], [1], [0, 0, 1, 1], [], []>} : vector<1x8xf32>, vector<8x64xf32>, vector<1x64xf32> -> vector<1x64xf32>
    %cst_204 = arith.constant dense<0.000000e+00> : vector<1x64xf32>
    %256 = tpu.matmul %254, %231, %cst_204 {dimension_numbers = #tpu.dot_dimension_numbers<[1], [0], [0], [1], [0, 0, 1, 1], [], []>} : vector<1x8xf32>, vector<8x64xf32>, vector<1x64xf32> -> vector<1x64xf32>
    %257 = vector.broadcast %255 : vector<1x64xf32> to vector<16x64xf32>
    %258 = arith.mulf %229, %257 : vector<16x64xf32>
    %259 = vector.broadcast %256 : vector<1x64xf32> to vector<16x64xf32>
    %260 = arith.addf %258, %259 : vector<16x64xf32>
    %cst_205 = arith.constant 0.000000e+00 : f32
    %261 = vector.broadcast %cst_205 : f32 to vector<16x64xf32>
    %262 = arith.maximumf %260, %261 : vector<16x64xf32>
    %c0_206 = arith.constant 0 : index
    %c0_207 = arith.constant 0 : index
    %263 = vector.load %arg10[%c0_206, %c0_207] : memref<8x16xf32, #tpu.memory_space<vmem>>, vector<8x16xf32>
    %cst_208 = arith.constant dense<0.000000e+00> : vector<8x64xf32>
    %264 = tpu.matmul %263, %262, %cst_208 {dimension_numbers = #tpu.dot_dimension_numbers<[1], [0], [0], [1], [0, 0, 1, 1], [], []>} : vector<8x16xf32>, vector<16x64xf32>, vector<8x64xf32> -> vector<8x64xf32>
    %c0_209 = arith.constant 0 : index
    %c0_210 = arith.constant 0 : index
    %265 = vector.load %arg11[%c0_209, %c0_210] : memref<64x32xf32, #tpu.memory_space<vmem>>, vector<64x32xf32>
    %cst_211 = arith.constant dense<0.000000e+00> : vector<8x32xf32>
    %266 = tpu.matmul %264, %265, %cst_211 {dimension_numbers = #tpu.dot_dimension_numbers<[1], [0], [0], [1], [0, 0, 1, 1], [], []>} : vector<8x64xf32>, vector<64x32xf32>, vector<8x32xf32> -> vector<8x32xf32>
    %c0_212 = arith.constant 0 : index
    %c0_213 = arith.constant 0 : index
    %267 = vector.load %arg19[%c0_212, %c0_213] : memref<32x8xf32, #tpu.memory_space<vmem>>, vector<32x8xf32>
    %c0_214 = arith.constant 0 : index
    %c0_215 = arith.constant 0 : index
    %268 = vector.load %arg20[%c0_214, %c0_215] : memref<8x32xf32, #tpu.memory_space<vmem>>, vector<8x32xf32>
    %c5 = arith.constant 5 : index
    %c0_216 = arith.constant 0 : index
    %269 = vector.load %arg21[%c5, %c0_216] : memref<6x8xf32, #tpu.memory_space<vmem>>, vector<1x8xf32>
    %c5_217 = arith.constant 5 : index
    %c0_218 = arith.constant 0 : index
    %270 = vector.load %arg22[%c5_217, %c0_218] : memref<6x8xf32, #tpu.memory_space<vmem>>, vector<1x8xf32>
    %cst_219 = arith.constant dense<0.000000e+00> : vector<32xf32>
    %271 = vector.multi_reduction <add>, %266, %cst_219 [0] : vector<8x32xf32> to vector<32xf32>
    %272 = vector.shape_cast %271 : vector<32xf32> to vector<1x32xf32>
    %cst_220 = arith.constant dense<0.000000e+00> : vector<1x8xf32>
    %273 = tpu.matmul %272, %267, %cst_220 {dimension_numbers = #tpu.dot_dimension_numbers<[1], [0], [0], [1], [0, 0, 1, 1], [], []>} : vector<1x32xf32>, vector<32x8xf32>, vector<1x8xf32> -> vector<1x8xf32>
    %274 = arith.mulf %266, %266 : vector<8x32xf32>
    %cst_221 = arith.constant dense<0.000000e+00> : vector<32xf32>
    %275 = vector.multi_reduction <add>, %274, %cst_221 [0] : vector<8x32xf32> to vector<32xf32>
    %276 = vector.shape_cast %275 : vector<32xf32> to vector<1x32xf32>
    %cst_222 = arith.constant dense<0.000000e+00> : vector<1x8xf32>
    %277 = tpu.matmul %276, %267, %cst_222 {dimension_numbers = #tpu.dot_dimension_numbers<[1], [0], [0], [1], [0, 0, 1, 1], [], []>} : vector<1x32xf32>, vector<32x8xf32>, vector<1x8xf32> -> vector<1x8xf32>
    %cst_223 = arith.constant 3.200000e+01 : f32
    %278 = vector.broadcast %cst_223 : f32 to vector<1x8xf32>
    %279 = arith.divf %273, %278 : vector<1x8xf32>
    %cst_224 = arith.constant 3.200000e+01 : f32
    %280 = vector.broadcast %cst_224 : f32 to vector<1x8xf32>
    %281 = arith.divf %277, %280 : vector<1x8xf32>
    %282 = arith.mulf %279, %279 : vector<1x8xf32>
    %283 = arith.subf %281, %282 : vector<1x8xf32>
    %cst_225 = arith.constant 0.000000e+00 : f32
    %284 = vector.broadcast %cst_225 : f32 to vector<1x8xf32>
    %285 = arith.maximumf %283, %284 : vector<1x8xf32>
    %cst_226 = arith.constant 9.99999974E-6 : f32
    %286 = vector.broadcast %cst_226 : f32 to vector<1x8xf32>
    %287 = arith.addf %285, %286 : vector<1x8xf32>
    %288 = math.rsqrt %287 : vector<1x8xf32>
    %289 = arith.mulf %269, %288 : vector<1x8xf32>
    %290 = arith.mulf %279, %289 : vector<1x8xf32>
    %291 = arith.subf %270, %290 : vector<1x8xf32>
    %cst_227 = arith.constant dense<0.000000e+00> : vector<1x32xf32>
    %292 = tpu.matmul %289, %268, %cst_227 {dimension_numbers = #tpu.dot_dimension_numbers<[1], [0], [0], [1], [0, 0, 1, 1], [], []>} : vector<1x8xf32>, vector<8x32xf32>, vector<1x32xf32> -> vector<1x32xf32>
    %cst_228 = arith.constant dense<0.000000e+00> : vector<1x32xf32>
    %293 = tpu.matmul %291, %268, %cst_228 {dimension_numbers = #tpu.dot_dimension_numbers<[1], [0], [0], [1], [0, 0, 1, 1], [], []>} : vector<1x8xf32>, vector<8x32xf32>, vector<1x32xf32> -> vector<1x32xf32>
    %294 = vector.broadcast %292 : vector<1x32xf32> to vector<8x32xf32>
    %295 = arith.mulf %266, %294 : vector<8x32xf32>
    %296 = vector.broadcast %293 : vector<1x32xf32> to vector<8x32xf32>
    %297 = arith.addf %295, %296 : vector<8x32xf32>
    %c0_229 = arith.constant 0 : index
    %c0_230 = arith.constant 0 : index
    %298 = vector.load %arg10[%c0_229, %c0_230] : memref<8x16xf32, #tpu.memory_space<vmem>>, vector<8x16xf32>
    %cst_231 = arith.constant dense<0.000000e+00> : vector<8x64xf32>
    %299 = tpu.matmul %298, %207, %cst_231 {dimension_numbers = #tpu.dot_dimension_numbers<[1], [0], [0], [1], [0, 0, 1, 1], [], []>} : vector<8x16xf32>, vector<16x64xf32>, vector<8x64xf32> -> vector<8x64xf32>
    %c0_232 = arith.constant 0 : index
    %c0_233 = arith.constant 0 : index
    %300 = vector.load %arg12[%c0_232, %c0_233] : memref<64x32xf32, #tpu.memory_space<vmem>>, vector<64x32xf32>
    %cst_234 = arith.constant dense<0.000000e+00> : vector<8x32xf32>
    %301 = tpu.matmul %299, %300, %cst_234 {dimension_numbers = #tpu.dot_dimension_numbers<[1], [0], [0], [1], [0, 0, 1, 1], [], []>} : vector<8x64xf32>, vector<64x32xf32>, vector<8x32xf32> -> vector<8x32xf32>
    %302 = arith.addf %301, %297 : vector<8x32xf32>
    %c0_235 = arith.constant 0 : index
    %c0_236 = arith.constant 0 : index
    %303 = vector.load %arg13[%c0_235, %c0_236] : memref<32x64xf32, #tpu.memory_space<vmem>>, vector<32x64xf32>
    %cst_237 = arith.constant dense<0.000000e+00> : vector<8x64xf32>
    %304 = tpu.matmul %302, %303, %cst_237 {dimension_numbers = #tpu.dot_dimension_numbers<[1], [0], [0], [1], [0, 0, 1, 1], [], []>} : vector<8x32xf32>, vector<32x64xf32>, vector<8x64xf32> -> vector<8x64xf32>
    %c0_238 = arith.constant 0 : index
    %c0_239 = arith.constant 0 : index
    %305 = vector.load %arg14[%c0_238, %c0_239] : memref<1x64xf32, #tpu.memory_space<vmem>>, vector<1x64xf32>
    %306 = vector.broadcast %305 : vector<1x64xf32> to vector<8x64xf32>
    %307 = arith.addf %304, %306 : vector<8x64xf32>
    %c0_240 = arith.constant 0 : index
    %c0_241 = arith.constant 0 : index
    %308 = vector.load %arg23[%c0_240, %c0_241] : memref<8x64xf32, #tpu.memory_space<vmem>>, vector<8x64xf32>
    tpu.vector_store %arg23[%c0_240, %c0_241], %307 {strides = array<i32>} : memref<8x64xf32, #tpu.memory_space<vmem>>, vector<8x64xf32>,
    return
  }
  func.func @transform_0(%arg0: i32) -> (i32, i32) {
    %c0_i32 = arith.constant 0 : i32
    %c0_i32_0 = arith.constant 0 : i32
    %c0_i32_1 = arith.constant 0 : i32
    return %c0_i32, %c0_i32_0 : i32, i32
  }
  func.func @transform_1(%arg0: i32) -> (i32, i32, i32) {
    %c0_i32 = arith.constant 0 : i32
    %c0_i32_0 = arith.constant 0 : i32
    %c0_i32_1 = arith.constant 0 : i32
    %c0_i32_2 = arith.constant 0 : i32
    return %c0_i32, %c0_i32_0, %c0_i32_1 : i32, i32, i32
  }
  func.func @transform_2(%arg0: i32) -> (i32, i32, i32) {
    %c0_i32 = arith.constant 0 : i32
    %c0_i32_0 = arith.constant 0 : i32
    %c0_i32_1 = arith.constant 0 : i32
    %c0_i32_2 = arith.constant 0 : i32
    return %c0_i32, %c0_i32_0, %c0_i32_1 : i32, i32, i32
  }
  func.func @transform_3(%arg0: i32) -> (i32, i32, i32) {
    %c0_i32 = arith.constant 0 : i32
    %c0_i32_0 = arith.constant 0 : i32
    %c0_i32_1 = arith.constant 0 : i32
    %c0_i32_2 = arith.constant 0 : i32
    return %c0_i32, %c0_i32_0, %c0_i32_1 : i32, i32, i32
  }
  func.func @transform_4(%arg0: i32) -> (i32, i32, i32) {
    %c0_i32 = arith.constant 0 : i32
    %c0_i32_0 = arith.constant 0 : i32
    %c0_i32_1 = arith.constant 0 : i32
    %c0_i32_2 = arith.constant 0 : i32
    return %c0_i32, %c0_i32_0, %c0_i32_1 : i32, i32, i32
  }
  func.func @transform_5(%arg0: i32) -> (i32, i32, i32) {
    %c0_i32 = arith.constant 0 : i32
    %c0_i32_0 = arith.constant 0 : i32
    %c0_i32_1 = arith.constant 0 : i32
    %c0_i32_2 = arith.constant 0 : i32
    return %c0_i32, %c0_i32_0, %c0_i32_1 : i32, i32, i32
  }
  func.func @transform_6(%arg0: i32) -> (i32, i32, i32) {
    %c0_i32 = arith.constant 0 : i32
    %c0_i32_0 = arith.constant 0 : i32
    %c0_i32_1 = arith.constant 0 : i32
    %c0_i32_2 = arith.constant 0 : i32
    return %c0_i32, %c0_i32_0, %c0_i32_1 : i32, i32, i32
  }
  func.func @transform_7(%arg0: i32) -> (i32, i32, i32) {
    %c0_i32 = arith.constant 0 : i32
    %c0_i32_0 = arith.constant 0 : i32
    %c0_i32_1 = arith.constant 0 : i32
    %c0_i32_2 = arith.constant 0 : i32
    return %c0_i32, %c0_i32_0, %c0_i32_1 : i32, i32, i32
  }
  func.func @transform_8(%arg0: i32) -> (i32, i32) {
    %c0_i32 = arith.constant 0 : i32
    %c0_i32_0 = arith.constant 0 : i32
    %c0_i32_1 = arith.constant 0 : i32
    return %c0_i32, %c0_i32_0 : i32, i32
  }
  func.func @transform_9(%arg0: i32) -> (i32, i32) {
    %c0_i32 = arith.constant 0 : i32
    %c0_i32_0 = arith.constant 0 : i32
    %c0_i32_1 = arith.constant 0 : i32
    return %c0_i32, %c0_i32_0 : i32, i32
  }
  func.func @transform_10(%arg0: i32) -> (i32, i32) {
    %c0_i32 = arith.constant 0 : i32
    %c0_i32_0 = arith.constant 0 : i32
    %c0_i32_1 = arith.constant 0 : i32
    return %c0_i32, %c0_i32_0 : i32, i32
  }
  func.func @transform_11(%arg0: i32) -> (i32, i32) {
    %c0_i32 = arith.constant 0 : i32
    %c0_i32_0 = arith.constant 0 : i32
    %c0_i32_1 = arith.constant 0 : i32
    return %c0_i32, %c0_i32_0 : i32, i32
  }
  func.func @transform_12(%arg0: i32) -> (i32, i32) {
    %c0_i32 = arith.constant 0 : i32
    %c0_i32_0 = arith.constant 0 : i32
    %c0_i32_1 = arith.constant 0 : i32
    return %c0_i32, %c0_i32_0 : i32, i32
  }
  func.func @transform_13(%arg0: i32) -> (i32, i32) {
    %c0_i32 = arith.constant 0 : i32
    %c0_i32_0 = arith.constant 0 : i32
    %c0_i32_1 = arith.constant 0 : i32
    return %c0_i32, %c0_i32_0 : i32, i32
  }
  func.func @transform_14(%arg0: i32) -> (i32, i32) {
    %c0_i32 = arith.constant 0 : i32
    %c0_i32_0 = arith.constant 0 : i32
    %c0_i32_1 = arith.constant 0 : i32
    return %c0_i32, %c0_i32_0 : i32, i32
  }
  func.func @transform_15(%arg0: i32) -> (i32, i32) {
    %c0_i32 = arith.constant 0 : i32
    %c0_i32_0 = arith.constant 0 : i32
    %c0_i32_1 = arith.constant 0 : i32
    return %c0_i32, %c0_i32_0 : i32, i32
  }
  func.func @transform_16(%arg0: i32) -> (i32, i32) {
    %c0_i32 = arith.constant 0 : i32
    %c0_i32_0 = arith.constant 0 : i32
    %c0_i32_1 = arith.constant 0 : i32
    return %c0_i32, %c0_i32_0 : i32, i32
  }
  func.func @transform_17(%arg0: i32) -> (i32, i32) {
    %c0_i32 = arith.constant 0 : i32
    %c0_i32_0 = arith.constant 0 : i32
    %c0_i32_1 = arith.constant 0 : i32
    return %c0_i32, %c0_i32_0 : i32, i32
  }
  func.func @transform_18(%arg0: i32) -> (i32, i32) {
    %c0_i32 = arith.constant 0 : i32
    %c0_i32_0 = arith.constant 0 : i32
    %c0_i32_1 = arith.constant 0 : i32
    return %c0_i32, %c0_i32_0 : i32, i32
  }
  func.func @transform_19(%arg0: i32) -> (i32, i32) {
    %c0_i32 = arith.constant 0 : i32
    %c0_i32_0 = arith.constant 0 : i32
    %c0_i32_1 = arith.constant 0 : i32
    return %c0_i32, %c0_i32_0 : i32, i32
  }
  func.func @transform_20(%arg0: i32) -> (i32, i32) {
    %c0_i32 = arith.constant 0 : i32
    %c0_i32_0 = arith.constant 0 : i32
    %c0_i32_1 = arith.constant 0 : i32
    return %c0_i32, %c0_i32_0 : i32, i32
  }
  func.func @transform_21(%arg0: i32) -> (i32, i32) {
    %c0_i32 = arith.constant 0 : i32
    %c0_i32_0 = arith.constant 0 : i32
    %c0_i32_1 = arith.constant 0 : i32
    return %c0_i32, %c0_i32_0 : i32, i32
  }
  func.func @transform_22(%arg0: i32) -> (i32, i32) {
    %c0_i32 = arith.constant 0 : i32
    %c0_i32_0 = arith.constant 0 : i32
    %c0_i32_1 = arith.constant 0 : i32
    return %c0_i32, %c0_i32_0 : i32, i32
  }
}

</mosaic_0001>

<llo_original>
// kernel: encoder_forward.1
$region0: #{encoder_forward.1}
  #allocation0 [shape = 'u32[]', space=smem, size = 0x4, offset = 0x4, fixed_abs, tag = 'smem constant byte address 0x4 - core index']
  #allocation1 [shape = 'u32[72,128]{1,0:T(1,128)}', space=vmem, size = 0x9000, scoped, tag = 'internal scratch']
  %s0 = inlined_call_operand.vmem [shape: f32[64,32], index: 0, kind: input, shape index: {}]
  %s1 = inlined_call_operand.vmem [shape: f32[4,32,64], index: 1, kind: input, shape index: {}]
  %s2 = inlined_call_operand.vmem [shape: f32[4,32,128], index: 2, kind: input, shape index: {}]
  %s3 = inlined_call_operand.vmem [shape: f32[4,16,32], index: 3, kind: input, shape index: {}]
  %s4 = inlined_call_operand.vmem [shape: f32[4,128,64], index: 4, kind: input, shape index: {}]
  %s5 = inlined_call_operand.vmem [shape: f32[3,16,16], index: 5, kind: input, shape index: {}]
  %s6 = inlined_call_operand.vmem [shape: f32[3,64,64], index: 6, kind: input, shape index: {}]
  %s7 = inlined_call_operand.vmem [shape: f32[3,64,64], index: 7, kind: input, shape index: {}]
  %s8 = inlined_call_operand.vmem [shape: f32[64,64], index: 8, kind: input, shape index: {}]
  %s9 = inlined_call_operand.vmem [shape: f32[8,16], index: 9, kind: input, shape index: {}]
  %s10 = inlined_call_operand.vmem [shape: f32[64,32], index: 10, kind: input, shape index: {}]
  %s11 = inlined_call_operand.vmem [shape: f32[64,32], index: 11, kind: input, shape index: {}]
  %s12 = inlined_call_operand.vmem [shape: f32[32,64], index: 12, kind: input, shape index: {}]
  %s13 = inlined_call_operand.hbm [shape: f32[1,64], index: 13, kind: input, shape index: {}]
  %s14 = inlined_call_operand.vmem [shape: f32[128,8], index: 14, kind: input, shape index: {}]
  %s15 = inlined_call_operand.vmem [shape: f32[8,128], index: 15, kind: input, shape index: {}]
  %s16 = inlined_call_operand.vmem [shape: f32[64,8], index: 16, kind: input, shape index: {}]
  %s17 = inlined_call_operand.vmem [shape: f32[8,64], index: 17, kind: input, shape index: {}]
  %s18 = inlined_call_operand.vmem [shape: f32[32,8], index: 18, kind: input, shape index: {}]
  %s19 = inlined_call_operand.vmem [shape: f32[8,32], index: 19, kind: input, shape index: {}]
  %s20 = inlined_call_operand.hbm [shape: f32[6,8], index: 20, kind: input, shape index: {}]
  %s21 = inlined_call_operand.hbm [shape: f32[6,8], index: 21, kind: input, shape index: {}]
  %s22 = inlined_call_operand.vmem [shape: f32[8,64], index: 22, kind: output, shape index: {}]
  %s23 = sld [smem:[#allocation0]]
  $region110: #{encoder_forward.1} parent=0
    _
  %s25 = ssub.s32 1, %s23
  %s26 = scalar_select 0, %s25, %s23
  $region1: #{encoder_forward.1} parent=0
    #allocation2 [shape = 'u8[512]{0}', space=vmem, size = 0x400, scoped, tag = 'input window, operand 13, single buffered']
    #allocation3 [shape = 's32[1]{0}', space=sflag, size = 0x4, scoped, tag = 'scoped memory for encoder_forward.1']
    #allocation4 [shape = 'u8[4096]{0}', space=vmem, size = 0x1000, scoped, tag = 'input window, operand 20, single buffered']
    #allocation5 [shape = 's32[1]{0}', space=sflag, size = 0x4, scoped, tag = 'scoped memory for encoder_forward.1']
    #allocation6 [shape = 'u8[4096]{0}', space=vmem, size = 0x1000, scoped, tag = 'input window, operand 21, single buffered']
    %27 = vsyncpa [#allocation3], 0
    %28 = vsyncpa [#allocation5], 0
    // Predicated region
    $region2: #{encoder_forward.1} parent=1 // pred_check
      _
    $region3: #{encoder_forward.1} parent=1 // pred_check_branch
      %30 = sbr.rel (0) target = $region5
    $region4: #{encoder_forward.1} parent=1 // pred_region
      _
    $region5: #{encoder_forward.1} parent=1 // pred_fallthru
      _
    // Predicated region
    $region6: #{encoder_forward.1} parent=1 // pred_check
      _
    $region7: #{encoder_forward.1} parent=1 // pred_check_branch
      %32 = sbr.rel (0) target = $region9
    $region8: #{encoder_forward.1} parent=1 // pred_region
      _
    $region9: #{encoder_forward.1} parent=1 // pred_fallthru
      _
    // Predicated region
    $region10: #{encoder_forward.1} parent=1 // pred_check
      _
    $region11: #{encoder_forward.1} parent=1 // pred_check_branch
      %34 = sbr.rel (0) target = $region13
    $region12: #{encoder_forward.1} parent=1 // pred_region
      _
    $region13: #{encoder_forward.1} parent=1 // pred_fallthru
      _
    // Predicated region
    $region14: #{encoder_forward.1} parent=1 // pred_check
      _
    $region15: #{encoder_forward.1} parent=1 // pred_check_branch
      %36 = sbr.rel (0) target = $region17
    $region16: #{encoder_forward.1} parent=1 // pred_region
      _
    $region17: #{encoder_forward.1} parent=1 // pred_fallthru
      _
    // Predicated region
    $region18: #{encoder_forward.1} parent=1 // pred_check
      _
    $region19: #{encoder_forward.1} parent=1 // pred_check_branch
      %38 = sbr.rel (0) target = $region21
    $region20: #{encoder_forward.1} parent=1 // pred_region
      _
    $region21: #{encoder_forward.1} parent=1 // pred_fallthru
      _
    // Predicated region
    $region22: #{encoder_forward.1} parent=1 // pred_check
      _
    $region23: #{encoder_forward.1} parent=1 // pred_check_branch
      %40 = sbr.rel (0) target = $region25
    $region24: #{encoder_forward.1} parent=1 // pred_region
      _
    $region25: #{encoder_forward.1} parent=1 // pred_fallthru
      _
    // Predicated region
    $region26: #{encoder_forward.1} parent=1 // pred_check
      _
    $region27: #{encoder_forward.1} parent=1 // pred_check_branch
      %42 = sbr.rel (0) target = $region29
    $region28: #{encoder_forward.1} parent=1 // pred_region
      _
    $region29: #{encoder_forward.1} parent=1 // pred_fallthru
      _
    // Predicated region
    $region30: #{encoder_forward.1} parent=1 // pred_check
      _
    $region31: #{encoder_forward.1} parent=1 // pred_check_branch
      %44 = sbr.rel (0) target = $region33
    $region32: #{encoder_forward.1} parent=1 // pred_region
      _
    $region33: #{encoder_forward.1} parent=1 // pred_fallthru
      _
    // Predicated region
    $region34: #{encoder_forward.1} parent=1 // pred_check
      _
    $region35: #{encoder_forward.1} parent=1 // pred_check_branch
      %46 = sbr.rel (0) target = $region37
    $region36: #{encoder_forward.1} parent=1 // pred_region
      _
    $region37: #{encoder_forward.1} parent=1 // pred_fallthru
      _
    // Predicated region
    $region38: #{encoder_forward.1} parent=1 // pred_check
      _
    $region39: #{encoder_forward.1} parent=1 // pred_check_branch
      %48 = sbr.rel (0) target = $region41
    $region40: #{encoder_forward.1} parent=1 // pred_region
      _
    $region41: #{encoder_forward.1} parent=1 // pred_fallthru
      _
    // Predicated region
    $region42: #{encoder_forward.1} parent=1 // pred_check
      _
    $region43: #{encoder_forward.1} parent=1 // pred_check_branch
      %50 = sbr.rel (0) target = $region45
    $region44: #{encoder_forward.1} parent=1 // pred_region
      _
    $region45: #{encoder_forward.1} parent=1 // pred_fallthru
      _
    // Predicated region
    $region46: #{encoder_forward.1} parent=1 // pred_check
      _
    $region47: #{encoder_forward.1} parent=1 // pred_check_branch
      %52 = sbr.rel (0) target = $region49
    $region48: #{encoder_forward.1} parent=1 // pred_region
      _
    $region49: #{encoder_forward.1} parent=1 // pred_fallthru
      _
    // Predicated region
    $region50: #{encoder_forward.1} parent=1 // pred_check
      _
    $region51: #{encoder_forward.1} parent=1 // pred_check_branch
      %54 = sbr.rel (0) target = $region53
    $region52: #{encoder_forward.1} parent=1 // pred_region
      _
    $region53: #{encoder_forward.1} parent=1 // pred_fallthru
      _
    // Predicated region
    $region54: #{encoder_forward.1} parent=1 // pred_check
      _
    $region55: #{encoder_forward.1} parent=1 // pred_check_branch
      %56 = sbr.rel (0) target = $region57
    $region56: #{encoder_forward.1} parent=1 // pred_region
      %58 = vsyncadd [#allocation3], 0
      %s60 = sshll.u32 %s13, 4
      %s61 = int_to_ptr.hbm [resolvable:$true] %s60
      %s62 = sshll.u32 [#allocation2], 4
      %s63 = int_to_ptr.vmem [resolvable:$true] %s62
      %65 = dma.hbm_to_vmem [thread:$0]  %s61, 16, %s63, [#allocation3]
    $region57: #{encoder_forward.1} parent=1 // pred_fallthru
      _
    // Predicated region
    $region58: #{encoder_forward.1} parent=1 // pred_check
      _
    $region59: #{encoder_forward.1} parent=1 // pred_check_branch
      %67 = sbr.rel (0) target = $region61
    $region60: #{encoder_forward.1} parent=1 // pred_region
      _
    $region61: #{encoder_forward.1} parent=1 // pred_fallthru
      _
    // Predicated region
    $region62: #{encoder_forward.1} parent=1 // pred_check
      _
    $region63: #{encoder_forward.1} parent=1 // pred_check_branch
      %69 = sbr.rel (0) target = $region65
    $region64: #{encoder_forward.1} parent=1 // pred_region
      _
    $region65: #{encoder_forward.1} parent=1 // pred_fallthru
      _
    // Predicated region
    $region66: #{encoder_forward.1} parent=1 // pred_check
      _
    $region67: #{encoder_forward.1} parent=1 // pred_check_branch
      %71 = sbr.rel (0) target = $region69
    $region68: #{encoder_forward.1} parent=1 // pred_region
      _
    $region69: #{encoder_forward.1} parent=1 // pred_fallthru
      _
    // Predicated region
    $region70: #{encoder_forward.1} parent=1 // pred_check
      _
    $region71: #{encoder_forward.1} parent=1 // pred_check_branch
      %73 = sbr.rel (0) target = $region73
    $region72: #{encoder_forward.1} parent=1 // pred_region
      _
    $region73: #{encoder_forward.1} parent=1 // pred_fallthru
      _
    // Predicated region
    $region74: #{encoder_forward.1} parent=1 // pred_check
      _
    $region75: #{encoder_forward.1} parent=1 // pred_check_branch
      %75 = sbr.rel (0) target = $region77
    $region76: #{encoder_forward.1} parent=1 // pred_region
      _
    $region77: #{encoder_forward.1} parent=1 // pred_fallthru
      _
    // Predicated region
    $region78: #{encoder_forward.1} parent=1 // pred_check
      _
    $region79: #{encoder_forward.1} parent=1 // pred_check_branch
      %77 = sbr.rel (0) target = $region81
    $region80: #{encoder_forward.1} parent=1 // pred_region
      _
    $region81: #{encoder_forward.1} parent=1 // pred_fallthru
      _
    // Predicated region
    $region82: #{encoder_forward.1} parent=1 // pred_check
      _
    $region83: #{encoder_forward.1} parent=1 // pred_check_branch
      %79 = sbr.rel (0) target = $region85
    $region84: #{encoder_forward.1} parent=1 // pred_region
      %81 = vsyncadd [#allocation5], 0
      %s83 = sshll.u32 %s20, 4
      %s84 = int_to_ptr.hbm [resolvable:$true] %s83
      %s85 = sshll.u32 [#allocation4], 4
      %s86 = int_to_ptr.vmem [resolvable:$true] %s85
      %88 = dma.hbm_to_vmem [thread:$0]  %s84, 128, %s86, [#allocation5]
    $region85: #{encoder_forward.1} parent=1 // pred_fallthru
      _
    // Predicated region
    $region86: #{encoder_forward.1} parent=1 // pred_check
      _
    $region87: #{encoder_forward.1} parent=1 // pred_check_branch
      %90 = sbr.rel (0) target = $region89
    $region88: #{encoder_forward.1} parent=1 // pred_region
      %92 = vsyncadd [#allocation5], 0
      %s94 = sshll.u32 %s21, 4
      %s95 = int_to_ptr.hbm [resolvable:$true] %s94
      %s96 = sshll.u32 [#allocation6], 4
      %s97 = int_to_ptr.vmem [resolvable:$true] %s96
      %99 = dma.hbm_to_vmem [thread:$0]  %s95, 128, %s97, [#allocation5]
    $region89: #{encoder_forward.1} parent=1 // pred_fallthru
      _
    // Predicated region
    $region90: #{encoder_forward.1} parent=1 // pred_check
      _
    $region91: #{encoder_forward.1} parent=1 // pred_check_branch
      %101 = sbr.rel (0) target = $region93
    $region92: #{encoder_forward.1} parent=1 // pred_region
      %103 = dma.done [#allocation3], 16
    $region93: #{encoder_forward.1} parent=1 // pred_fallthru
      _
    // Predicated region
    $region94: #{encoder_forward.1} parent=1 // pred_check
      _
    $region95: #{encoder_forward.1} parent=1 // pred_check_branch
      %105 = sbr.rel (0) target = $region97
    $region96: #{encoder_forward.1} parent=1 // pred_region
      %107 = dma.done [#allocation5], 128
    $region97: #{encoder_forward.1} parent=1 // pred_fallthru
      _
    // Predicated region
    $region98: #{encoder_forward.1} parent=1 // pred_check
      _
    $region99: #{encoder_forward.1} parent=1 // pred_check_branch
      %109 = sbr.rel (0) target = $region101
    $region100: #{encoder_forward.1} parent=1 // pred_region
      %111 = dma.done [#allocation5], 128
    $region101: #{encoder_forward.1} parent=1 // pred_fallthru
      _
    %v112 = vld [vmem:[%s0] sm:$0xff]
    %v113 = vld [vmem:[%s0 + $0x8] sm:$0xff]
    %v114 = vld [vmem:[%s0 + $0x10] sm:$0xff]
    %v115 = vld [vmem:[%s0 + $0x18] sm:$0xff]
    %v116 = vld [vmem:[%s0 + $0x20] sm:$0xff]
    %v117 = vld [vmem:[%s0 + $0x28] sm:$0xff]
    %v118 = vld [vmem:[%s0 + $0x30] sm:$0xff]
    %v119 = vld [vmem:[%s0 + $0x38] sm:$0xff]
    %v120 = vld [vmem:[%s1] sm:$0xff]
    %v121 = vld [vmem:[%s1 + $0x8] sm:$0xff]
    %v122 = vld [vmem:[%s1 + $0x10] sm:$0xff]
    %v123 = vld [vmem:[%s1 + $0x18] sm:$0xff]
    %vm124 = vcmask 523264
    %v126 = vsel %vm124, %v120, 0
    %v129 = vsel %vm124, %v121, 0
    %v132 = vsel %vm124, %v122, 0
    %v135 = vsel %vm124, %v123, 0
    %137 = vmatpush.msra.mxu0 0.0
    %138 = vmatpush.msra.mxu0 0.0
    %139 = vmatpush.msra.mxu0 0.0
    %140 = vmatpush.msra.mxu0 0.0
    %141 = vmatpush.msra.mxu0 0.0
    %142 = vmatpush.msra.mxu0 0.0
    %143 = vmatpush.msra.mxu0 0.0
    %144 = vmatpush.msra.mxu0 0.0
    %145 = vmatpush.msra.mxu0 %v119
    %146 = vmatpush.msra.mxu0 %v118
    %147 = vmatpush.msra.mxu0 %v117
    %148 = vmatpush.msra.mxu0 %v116
    %149 = vmatpush.msra.mxu0 %v115
    %150 = vmatpush.msra.mxu0 %v114
    %151 = vmatpush.msra.mxu0 %v113
    %152 = vmatpush.msra.mxu0 %v112
    %153 = vmatmul.f32.gmra.mxu0 %v126
    %v154 = vpop.f32.mrf.mxu0
    %v155 = vadd.f32 0.0, %v154
    %156 = vmatmul.f32.gmra.mxu0 %v129
    %v157 = vpop.f32.mrf.mxu0
    %v158 = vadd.f32 0.0, %v157
    %159 = vmatmul.f32.gmra.mxu0 %v132
    %v160 = vpop.f32.mrf.mxu0
    %v161 = vadd.f32 0.0, %v160
    %162 = vmatmul.f32.gmra.mxu0 %v135
    %v163 = vpop.f32.mrf.mxu0
    %v164 = vadd.f32 0.0, %v163
    %165 = vdwg.mxu0
    %v166 = vld [vmem:[%s2] sm:$0xff]
    %v167 = vld [vmem:[%s2 + $0x8] sm:$0xff]
    %v168 = vld [vmem:[%s2 + $0x10] sm:$0xff]
    %v169 = vld [vmem:[%s2 + $0x18] sm:$0xff]
    %s170 = scalar_lea.vmem %s1, 32
    %v171 = vld [vmem:[%s170] sm:$0xff]
    %v172 = vld [vmem:[%s170 + $0x8] sm:$0xff]
    %v173 = vld [vmem:[%s170 + $0x10] sm:$0xff]
    %v174 = vld [vmem:[%s170 + $0x18] sm:$0xff]
    %v176 = vsel %vm124, %v171, 0
    %v179 = vsel %vm124, %v172, 0
    %v182 = vsel %vm124, %v173, 0
    %v185 = vsel %vm124, %v174, 0
    %187 = vmatpush.msra.mxu0 0.0
    %188 = vmatpush.msra.mxu0 0.0
    %189 = vmatpush.msra.mxu0 0.0
    %190 = vmatpush.msra.mxu0 0.0
    %191 = vmatpush.msra.mxu0 0.0
    %192 = vmatpush.msra.mxu0 0.0
    %193 = vmatpush.msra.mxu0 0.0
    %194 = vmatpush.msra.mxu0 0.0
    %195 = vmatpush.msra.mxu0 %v119
    %196 = vmatpush.msra.mxu0 %v118
    %197 = vmatpush.msra.mxu0 %v117
    %198 = vmatpush.msra.mxu0 %v116
    %199 = vmatpush.msra.mxu0 %v115
    %200 = vmatpush.msra.mxu0 %v114
    %201 = vmatpush.msra.mxu0 %v113
    %202 = vmatpush.msra.mxu0 %v112
    %203 = vmatmul.f32.gmra.mxu0 %v176
    %v204 = vpop.f32.mrf.mxu0
    %v205 = vadd.f32 0.0, %v204
    %206 = vmatmul.f32.gmra.mxu0 %v179
    %v207 = vpop.f32.mrf.mxu0
    %v208 = vadd.f32 0.0, %v207
    %209 = vmatmul.f32.gmra.mxu0 %v182
    %v210 = vpop.f32.mrf.mxu0
    %v211 = vadd.f32 0.0, %v210
    %212 = vmatmul.f32.gmra.mxu0 %v185
    %v213 = vpop.f32.mrf.mxu0
    %v214 = vadd.f32 0.0, %v213
    %215 = vdwg.mxu0
    %s216 = scalar_lea.vmem %s2, 32
    %v217 = vld [vmem:[%s216] sm:$0xff]
    %v218 = vld [vmem:[%s216 + $0x8] sm:$0xff]
    %v219 = vld [vmem:[%s216 + $0x10] sm:$0xff]
    %v220 = vld [vmem:[%s216 + $0x18] sm:$0xff]
    %vm221 = vcmask 261120
    %v223 = vsel %vm221, %v205, 0
    %v226 = vsel %vm221, %v208, 0
    %v229 = vsel %vm221, %v211, 0
    %v232 = vsel %vm221, %v214, 0
    %234 = vmatpush.msra.mxu0 0.0
    %235 = vmatpush.msra.mxu0 0.0
    %236 = vmatpush.msra.mxu0 0.0
    %237 = vmatpush.msra.mxu0 0.0
    %238 = vmatpush.msra.mxu0 0.0
    %239 = vmatpush.msra.mxu0 0.0
    %240 = vmatpush.msra.mxu0 0.0
    %241 = vmatpush.msra.mxu0 0.0
    %242 = vmatpush.msra.mxu0 0.0
    %243 = vmatpush.msra.mxu0 0.0
    %244 = vmatpush.msra.mxu0 0.0
    %245 = vmatpush.msra.mxu0 0.0
    %246 = vmatpush.msra.mxu0 %v220
    %247 = vmatpush.msra.mxu0 %v219
    %248 = vmatpush.msra.mxu0 %v218
    %249 = vmatpush.msra.mxu0 %v217
    %250 = vmatmul.f32.gmra.mxu0 %v223
    %v251 = vpop.f32.mrf.mxu0
    %v252 = vadd.f32 0.0, %v251
    %253 = vmatmul.f32.gmra.mxu0 %v226
    %v254 = vpop.f32.mrf.mxu0
    %v255 = vadd.f32 0.0, %v254
    %256 = vmatmul.f32.gmra.mxu0 %v229
    %v257 = vpop.f32.mrf.mxu0
    %v258 = vadd.f32 0.0, %v257
    %259 = vmatmul.f32.gmra.mxu0 %v232
    %v260 = vpop.f32.mrf.mxu0
    %v261 = vadd.f32 0.0, %v260
    %262 = vdwg.mxu0
    %v264 = vsel %vm221, %v155, 0
    %v267 = vsel %vm221, %v158, 0
    %v270 = vsel %vm221, %v161, 0
    %v273 = vsel %vm221, %v164, 0
    %275 = vmatpush.msra.mxu0 0.0
    %276 = vmatpush.msra.mxu0 0.0
    %277 = vmatpush.msra.mxu0 0.0
    %278 = vmatpush.msra.mxu0 0.0
    %279 = vmatpush.msra.mxu0 0.0
    %280 = vmatpush.msra.mxu0 0.0
    %281 = vmatpush.msra.mxu0 0.0
    %282 = vmatpush.msra.mxu0 0.0
    %283 = vmatpush.msra.mxu0 0.0
    %284 = vmatpush.msra.mxu0 0.0
    %285 = vmatpush.msra.mxu0 0.0
    %286 = vmatpush.msra.mxu0 0.0
    %287 = vmatpush.msra.mxu0 %v169
    %288 = vmatpush.msra.mxu0 %v168
    %289 = vmatpush.msra.mxu0 %v167
    %290 = vmatpush.msra.mxu0 %v166
    %291 = vmatmul.f32.gmra.mxu0 %v264
    %v292 = vpop.f32.mrf.mxu0
    %v293 = vadd.f32 %v252, %v292
    %294 = vmatmul.f32.gmra.mxu0 %v267
    %v295 = vpop.f32.mrf.mxu0
    %v296 = vadd.f32 %v255, %v295
    %297 = vmatmul.f32.gmra.mxu0 %v270
    %v298 = vpop.f32.mrf.mxu0
    %v299 = vadd.f32 %v258, %v298
    %300 = vmatmul.f32.gmra.mxu0 %v273
    %v301 = vpop.f32.mrf.mxu0
    %v302 = vadd.f32 %v261, %v301
    %303 = vdwg.mxu0
    %s304 = scalar_lea.vmem %s1, 64
    %v305 = vld [vmem:[%s304] sm:$0xff]
    %v306 = vld [vmem:[%s304 + $0x8] sm:$0xff]
    %v307 = vld [vmem:[%s304 + $0x10] sm:$0xff]
    %v308 = vld [vmem:[%s304 + $0x18] sm:$0xff]
    %v310 = vsel %vm124, %v305, 0
    %v313 = vsel %vm124, %v306, 0
    %v316 = vsel %vm124, %v307, 0
    %v319 = vsel %vm124, %v308, 0
    %321 = vmatpush.msra.mxu0 0.0
    %322 = vmatpush.msra.mxu0 0.0
    %323 = vmatpush.msra.mxu0 0.0
    %324 = vmatpush.msra.mxu0 0.0
    %325 = vmatpush.msra.mxu0 0.0
    %326 = vmatpush.msra.mxu0 0.0
    %327 = vmatpush.msra.mxu0 0.0
    %328 = vmatpush.msra.mxu0 0.0
    %329 = vmatpush.msra.mxu0 %v119
    %330 = vmatpush.msra.mxu0 %v118
    %331 = vmatpush.msra.mxu0 %v117
    %332 = vmatpush.msra.mxu0 %v116
    %333 = vmatpush.msra.mxu0 %v115
    %334 = vmatpush.msra.mxu0 %v114
    %335 = vmatpush.msra.mxu0 %v113
    %336 = vmatpush.msra.mxu0 %v112
    %337 = vmatmul.f32.gmra.mxu0 %v310
    %v338 = vpop.f32.mrf.mxu0
    %v339 = vadd.f32 0.0, %v338
    %340 = vmatmul.f32.gmra.mxu0 %v313
    %v341 = vpop.f32.mrf.mxu0
    %v342 = vadd.f32 0.0, %v341
    %343 = vmatmul.f32.gmra.mxu0 %v316
    %v344 = vpop.f32.mrf.mxu0
    %v345 = vadd.f32 0.0, %v344
    %346 = vmatmul.f32.gmra.mxu0 %v319
    %v347 = vpop.f32.mrf.mxu0
    %v348 = vadd.f32 0.0, %v347
    %349 = vdwg.mxu0
    %s350 = scalar_lea.vmem %s2, 64
    %v351 = vld [vmem:[%s350] sm:$0xff]
    %v352 = vld [vmem:[%s350 + $0x8] sm:$0xff]
    %v353 = vld [vmem:[%s350 + $0x10] sm:$0xff]
    %v354 = vld [vmem:[%s350 + $0x18] sm:$0xff]
    %v356 = vsel %vm221, %v339, 0
    %v359 = vsel %vm221, %v342, 0
    %v362 = vsel %vm221, %v345, 0
    %v365 = vsel %vm221, %v348, 0
    %367 = vmatpush.msra.mxu0 0.0
    %368 = vmatpush.msra.mxu0 0.0
    %369 = vmatpush.msra.mxu0 0.0
    %370 = vmatpush.msra.mxu0 0.0
    %371 = vmatpush.msra.mxu0 0.0
    %372 = vmatpush.msra.mxu0 0.0
    %373 = vmatpush.msra.mxu0 0.0
    %374 = vmatpush.msra.mxu0 0.0
    %375 = vmatpush.msra.mxu0 0.0
    %376 = vmatpush.msra.mxu0 0.0
    %377 = vmatpush.msra.mxu0 0.0
    %378 = vmatpush.msra.mxu0 0.0
    %379 = vmatpush.msra.mxu0 %v354
    %380 = vmatpush.msra.mxu0 %v353
    %381 = vmatpush.msra.mxu0 %v352
    %382 = vmatpush.msra.mxu0 %v351
    %383 = vmatmul.f32.gmra.mxu0 %v356
    %v384 = vpop.f32.mrf.mxu0
    %v385 = vadd.f32 0.0, %v384
    %386 = vmatmul.f32.gmra.mxu0 %v359
    %v387 = vpop.f32.mrf.mxu0
    %v388 = vadd.f32 0.0, %v387
    %389 = vmatmul.f32.gmra.mxu0 %v362
    %v390 = vpop.f32.mrf.mxu0
    %v391 = vadd.f32 0.0, %v390
    %392 = vmatmul.f32.gmra.mxu0 %v365
    %v393 = vpop.f32.mrf.mxu0
    %v394 = vadd.f32 0.0, %v393
    %395 = vdwg.mxu0
    %v396 = vadd.f32 %v293, %v385
    %v397 = vadd.f32 %v296, %v388
    %v398 = vadd.f32 %v299, %v391
    %v399 = vadd.f32 %v302, %v394
    %s400 = scalar_lea.vmem %s1, 96
    %v401 = vld [vmem:[%s400] sm:$0xff]
    %v402 = vld [vmem:[%s400 + $0x8] sm:$0xff]
    %v403 = vld [vmem:[%s400 + $0x10] sm:$0xff]
    %v404 = vld [vmem:[%s400 + $0x18] sm:$0xff]
    %v406 = vsel %vm124, %v401, 0
    %v409 = vsel %vm124, %v402, 0
    %v412 = vsel %vm124, %v403, 0
    %v415 = vsel %vm124, %v404, 0
    %417 = vmatpush.msra.mxu0 0.0
    %418 = vmatpush.msra.mxu0 0.0
    %419 = vmatpush.msra.mxu0 0.0
    %420 = vmatpush.msra.mxu0 0.0
    %421 = vmatpush.msra.mxu0 0.0
    %422 = vmatpush.msra.mxu0 0.0
    %423 = vmatpush.msra.mxu0 0.0
    %424 = vmatpush.msra.mxu0 0.0
    %425 = vmatpush.msra.mxu0 %v119
    %426 = vmatpush.msra.mxu0 %v118
    %427 = vmatpush.msra.mxu0 %v117
    %428 = vmatpush.msra.mxu0 %v116
    %429 = vmatpush.msra.mxu0 %v115
    %430 = vmatpush.msra.mxu0 %v114
    %431 = vmatpush.msra.mxu0 %v113
    %432 = vmatpush.msra.mxu0 %v112
    %433 = vmatmul.f32.gmra.mxu0 %v406
    %v434 = vpop.f32.mrf.mxu0
    %v435 = vadd.f32 0.0, %v434
    %436 = vmatmul.f32.gmra.mxu0 %v409
    %v437 = vpop.f32.mrf.mxu0
    %v438 = vadd.f32 0.0, %v437
    %439 = vmatmul.f32.gmra.mxu0 %v412
    %v440 = vpop.f32.mrf.mxu0
    %v441 = vadd.f32 0.0, %v440
    %442 = vmatmul.f32.gmra.mxu0 %v415
    %v443 = vpop.f32.mrf.mxu0
    %v444 = vadd.f32 0.0, %v443
    %445 = vdwg.mxu0
    %s446 = scalar_lea.vmem %s2, 96
    %v447 = vld [vmem:[%s446] sm:$0xff]
    %v448 = vld [vmem:[%s446 + $0x8] sm:$0xff]
    %v449 = vld [vmem:[%s446 + $0x10] sm:$0xff]
    %v450 = vld [vmem:[%s446 + $0x18] sm:$0xff]
    %v452 = vsel %vm221, %v435, 0
    %v455 = vsel %vm221, %v438, 0
    %v458 = vsel %vm221, %v441, 0
    %v461 = vsel %vm221, %v444, 0
    %463 = vmatpush.msra.mxu0 0.0
    %464 = vmatpush.msra.mxu0 0.0
    %465 = vmatpush.msra.mxu0 0.0
    %466 = vmatpush.msra.mxu0 0.0
    %467 = vmatpush.msra.mxu0 0.0
    %468 = vmatpush.msra.mxu0 0.0
    %469 = vmatpush.msra.mxu0 0.0
    %470 = vmatpush.msra.mxu0 0.0
    %471 = vmatpush.msra.mxu0 0.0
    %472 = vmatpush.msra.mxu0 0.0
    %473 = vmatpush.msra.mxu0 0.0
    %474 = vmatpush.msra.mxu0 0.0
    %475 = vmatpush.msra.mxu0 %v450
    %476 = vmatpush.msra.mxu0 %v449
    %477 = vmatpush.msra.mxu0 %v448
    %478 = vmatpush.msra.mxu0 %v447
    %479 = vmatmul.f32.gmra.mxu0 %v452
    %v480 = vpop.f32.mrf.mxu0
    %v481 = vadd.f32 0.0, %v480
    %482 = vmatmul.f32.gmra.mxu0 %v455
    %v483 = vpop.f32.mrf.mxu0
    %v484 = vadd.f32 0.0, %v483
    %485 = vmatmul.f32.gmra.mxu0 %v458
    %v486 = vpop.f32.mrf.mxu0
    %v487 = vadd.f32 0.0, %v486
    %488 = vmatmul.f32.gmra.mxu0 %v461
    %v489 = vpop.f32.mrf.mxu0
    %v490 = vadd.f32 0.0, %v489
    %491 = vdwg.mxu0
    %v492 = vadd.f32 %v396, %v481
    %v493 = vadd.f32 %v397, %v484
    %v494 = vadd.f32 %v398, %v487
    %v495 = vadd.f32 %v399, %v490
    %v496 = vld [vmem:[%s14] sm:$0xff]
    %v497 = vld [vmem:[%s14 + $0x8] sm:$0xff]
    %v498 = vld [vmem:[%s14 + $0x10] sm:$0xff]
    %v499 = vld [vmem:[%s14 + $0x18] sm:$0xff]
    %v500 = vld [vmem:[%s14 + $0x20] sm:$0xff]
    %v501 = vld [vmem:[%s14 + $0x28] sm:$0xff]
    %v502 = vld [vmem:[%s14 + $0x30] sm:$0xff]
    %v503 = vld [vmem:[%s14 + $0x38] sm:$0xff]
    %v504 = vld [vmem:[%s14 + $0x40] sm:$0xff]
    %v505 = vld [vmem:[%s14 + $0x48] sm:$0xff]
    %v506 = vld [vmem:[%s14 + $0x50] sm:$0xff]
    %v507 = vld [vmem:[%s14 + $0x58] sm:$0xff]
    %v508 = vld [vmem:[%s14 + $0x60] sm:$0xff]
    %v509 = vld [vmem:[%s14 + $0x68] sm:$0xff]
    %v510 = vld [vmem:[%s14 + $0x70] sm:$0xff]
    %v511 = vld [vmem:[%s14 + $0x78] sm:$0xff]
    %v512 = vld [vmem:[%s15] sm:$0xff]
    %v513 = vld [vmem:[#allocation4] sm:$0x1]
    %v514 = vld [vmem:[#allocation6] sm:$0x1]
    %v515 = vadd.f32 %v492, %v493
    %v516 = vadd.f32 %v515, %v494
    %v517 = vadd.f32 %v516, %v495
    %v518 = vrot.slane %v517, 4
    %v519 = vadd.f32 %v517, %v518
    %v520 = vrot.slane %v519, 2
    %v521 = vadd.f32 %v519, %v520
    %v522 = vrot.slane %v521, 1
    %v523 = vadd.f32 %v521, %v522
    %524 = vmatpush.msra.mxu0 %v511
    %525 = vmatpush.msra.mxu0 %v510
    %526 = vmatpush.msra.mxu0 %v509
    %527 = vmatpush.msra.mxu0 %v508
    %528 = vmatpush.msra.mxu0 %v507
    %529 = vmatpush.msra.mxu0 %v506
    %530 = vmatpush.msra.mxu0 %v505
    %531 = vmatpush.msra.mxu0 %v504
    %532 = vmatpush.msra.mxu0 %v503
    %533 = vmatpush.msra.mxu0 %v502
    %534 = vmatpush.msra.mxu0 %v501
    %535 = vmatpush.msra.mxu0 %v500
    %536 = vmatpush.msra.mxu0 %v499
    %537 = vmatpush.msra.mxu0 %v498
    %538 = vmatpush.msra.mxu0 %v497
    %539 = vmatpush.msra.mxu0 %v496
    %540 = vmatmul.f32.gmra.mxu0 %v523
    %v541 = vpop.f32.mrf.mxu0
    %v542 = vadd.f32 0.0, %v541
    %543 = vdwg.mxu0
    %v544 = vmul.f32 %v492, %v492
    %v545 = vmul.f32 %v493, %v493
    %v546 = vmul.f32 %v494, %v494
    %v547 = vmul.f32 %v495, %v495
    %v548 = vadd.f32 %v544, %v545
    %v549 = vadd.f32 %v548, %v546
    %v550 = vadd.f32 %v549, %v547
    %v551 = vrot.slane %v550, 4
    %v552 = vadd.f32 %v550, %v551
    %v553 = vrot.slane %v552, 2
    %v554 = vadd.f32 %v552, %v553
    %v555 = vrot.slane %v554, 1
    %v556 = vadd.f32 %v554, %v555
    %557 = vmatpush.msra.mxu0 %v511
    %558 = vmatpush.msra.mxu0 %v510
    %559 = vmatpush.msra.mxu0 %v509
    %560 = vmatpush.msra.mxu0 %v508
    %561 = vmatpush.msra.mxu0 %v507
    %562 = vmatpush.msra.mxu0 %v506
    %563 = vmatpush.msra.mxu0 %v505
    %564 = vmatpush.msra.mxu0 %v504
    %565 = vmatpush.msra.mxu0 %v503
    %566 = vmatpush.msra.mxu0 %v502
    %567 = vmatpush.msra.mxu0 %v501
    %568 = vmatpush.msra.mxu0 %v500
    %569 = vmatpush.msra.mxu0 %v499
    %570 = vmatpush.msra.mxu0 %v498
    %571 = vmatpush.msra.mxu0 %v497
    %572 = vmatpush.msra.mxu0 %v496
    %573 = vmatmul.f32.gmra.mxu0 %v556
    %v574 = vpop.f32.mrf.mxu0
    %v575 = vadd.f32 0.0, %v574
    %576 = vdwg.mxu0
    %v577 = vrcp.pop 512.0
    %v578 = vmul.f32 512.0, %v577
    %v579 = vsub.f32 1.0, %v578
    %v580 = vmul.f32 %v577, %v579
    %v581 = vadd.f32 %v577, %v580
    %vm582 = vweird.f32 %v577
    %v583 = vsel %vm582, %v577, %v581
    %v584 = vmul.f32 %v542, %v583
    %v585 = vmul.f32 %v575, %v583
    %v586 = vmul.f32 %v584, %v584
    %v587 = vsub.f32 %v585, %v586
    %v588 = vmax.f32 %v587, 0.0
    %v589 = vadd.f32 %v588, 1e-05
    %v590 = vrsqrt.pop %v589
    %v591 = vmul.f32 %v590, %v589
    %v592 = vmul.f32 %v591, %v590
    %v593 = vmul.f32 0.5, %v592
    %v594 = vsub.f32 1.5, %v593
    %v595 = vmul.f32 %v590, %v594
    %vm596 = vweird.f32 %v589
    %vm597 = vweird.f32 %v590
    %vm598 = vmor %vm596, %vm597
    %v599 = vsel %vm598, %v590, %v595
    %v600 = vmul.f32 %v513, %v599
    %v601 = vmul.f32 %v584, %v600
    %v602 = vsub.f32 %v514, %v601
    %vm603 = vcmask 64512
    %v605 = vsel %vm603, %v600, 0
    %607 = vmatpush.msra.mxu0 0.0
    %608 = vmatpush.msra.mxu0 0.0
    %609 = vmatpush.msra.mxu0 0.0
    %610 = vmatpush.msra.mxu0 0.0
    %611 = vmatpush.msra.mxu0 0.0
    %612 = vmatpush.msra.mxu0 0.0
    %613 = vmatpush.msra.mxu0 0.0
    %614 = vmatpush.msra.mxu0 0.0
    %615 = vmatpush.msra.mxu0 0.0
    %616 = vmatpush.msra.mxu0 0.0
    %617 = vmatpush.msra.mxu0 0.0
    %618 = vmatpush.msra.mxu0 0.0
    %619 = vmatpush.msra.mxu0 0.0
    %620 = vmatpush.msra.mxu0 0.0
    %621 = vmatpush.msra.mxu0 0.0
    %622 = vmatpush.msra.mxu0 %v512
    %623 = vmatmul.f32.gmra.mxu0 %v605
    %v624 = vpop.f32.mrf.mxu0
    %v625 = vadd.f32 0.0, %v624
    %626 = vdwg.mxu0
    %v628 = vsel %vm603, %v602, 0
    %630 = vmatpush.msra.mxu0 0.0
    %631 = vmatpush.msra.mxu0 0.0
    %632 = vmatpush.msra.mxu0 0.0
    %633 = vmatpush.msra.mxu0 0.0
    %634 = vmatpush.msra.mxu0 0.0
    %635 = vmatpush.msra.mxu0 0.0
    %636 = vmatpush.msra.mxu0 0.0
    %637 = vmatpush.msra.mxu0 0.0
    %638 = vmatpush.msra.mxu0 0.0
    %639 = vmatpush.msra.mxu0 0.0
    %640 = vmatpush.msra.mxu0 0.0
    %641 = vmatpush.msra.mxu0 0.0
    %642 = vmatpush.msra.mxu0 0.0
    %643 = vmatpush.msra.mxu0 0.0
    %644 = vmatpush.msra.mxu0 0.0
    %645 = vmatpush.msra.mxu0 %v512
    %646 = vmatmul.f32.gmra.mxu0 %v628
    %v647 = vpop.f32.mrf.mxu0
    %v648 = vadd.f32 0.0, %v647
    %649 = vdwg.mxu0
    %v650 = vperm.slane %v625, 0
    %v651 = vmul.f32 %v492, %v650
    %v652 = vmul.f32 %v493, %v650
    %v653 = vmul.f32 %v494, %v650
    %v654 = vmul.f32 %v495, %v650
    %v655 = vperm.slane %v648, 0
    %v656 = vadd.f32 %v651, %v655
    %v657 = vadd.f32 %v652, %v655
    %v658 = vadd.f32 %v653, %v655
    %v659 = vadd.f32 %v654, %v655
    %v660 = vmax.f32 %v656, 0.0
    %v661 = vmax.f32 %v657, 0.0
    %v662 = vmax.f32 %v658, 0.0
    %v663 = vmax.f32 %v659, 0.0
    %v664 = vld [vmem:[%s3] sm:$0xff]
    %v665 = vld [vmem:[%s3 + $0x8] sm:$0xff]
    %v667 = vsel %vm221, %v664, 0
    %v670 = vsel %vm221, %v665, 0
    %672 = vmatpush.msra.mxu0 0.0
    %673 = vmatpush.msra.mxu0 0.0
    %674 = vmatpush.msra.mxu0 0.0
    %675 = vmatpush.msra.mxu0 0.0
    %676 = vmatpush.msra.mxu0 0.0
    %677 = vmatpush.msra.mxu0 0.0
    %678 = vmatpush.msra.mxu0 0.0
    %679 = vmatpush.msra.mxu0 0.0
    %680 = vmatpush.msra.mxu0 0.0
    %681 = vmatpush.msra.mxu0 0.0
    %682 = vmatpush.msra.mxu0 0.0
    %683 = vmatpush.msra.mxu0 0.0
    %684 = vmatpush.msra.mxu0 %v663
    %685 = vmatpush.msra.mxu0 %v662
    %686 = vmatpush.msra.mxu0 %v661
    %687 = vmatpush.msra.mxu0 %v660
    %688 = vmatmul.f32.gmra.mxu0 %v667
    %v689 = vpop.f32.mrf.mxu0
    %v690 = vadd.f32 0.0, %v689
    %691 = vmatmul.f32.gmra.mxu0 %v670
    %v692 = vpop.f32.mrf.mxu0
    %v693 = vadd.f32 0.0, %v692
    %694 = vdwg.mxu0
    %v695 = vld [vmem:[%s4] sm:$0xff]
    %v696 = vld [vmem:[%s4 + $0x8] sm:$0xff]
    %v697 = vld [vmem:[%s4 + $0x10] sm:$0xff]
    %v698 = vld [vmem:[%s4 + $0x18] sm:$0xff]
    %v699 = vld [vmem:[%s4 + $0x20] sm:$0xff]
    %v700 = vld [vmem:[%s4 + $0x28] sm:$0xff]
    %v701 = vld [vmem:[%s4 + $0x30] sm:$0xff]
    %v702 = vld [vmem:[%s4 + $0x38] sm:$0xff]
    %v703 = vld [vmem:[%s4 + $0x40] sm:$0xff]
    %v704 = vld [vmem:[%s4 + $0x48] sm:$0xff]
    %v705 = vld [vmem:[%s4 + $0x50] sm:$0xff]
    %v706 = vld [vmem:[%s4 + $0x58] sm:$0xff]
    %v707 = vld [vmem:[%s4 + $0x60] sm:$0xff]
    %v708 = vld [vmem:[%s4 + $0x68] sm:$0xff]
    %v709 = vld [vmem:[%s4 + $0x70] sm:$0xff]
    %v710 = vld [vmem:[%s4 + $0x78] sm:$0xff]
    %s711 = scalar_lea.vmem %s3, 16
    %v712 = vld [vmem:[%s711] sm:$0xff]
    %v713 = vld [vmem:[%s711 + $0x8] sm:$0xff]
    %v715 = vsel %vm221, %v712, 0
    %v718 = vsel %vm221, %v713, 0
    %720 = vmatpush.msra.mxu0 0.0
    %721 = vmatpush.msra.mxu0 0.0
    %722 = vmatpush.msra.mxu0 0.0
    %723 = vmatpush.msra.mxu0 0.0
    %724 = vmatpush.msra.mxu0 0.0
    %725 = vmatpush.msra.mxu0 0.0
    %726 = vmatpush.msra.mxu0 0.0
    %727 = vmatpush.msra.mxu0 0.0
    %728 = vmatpush.msra.mxu0 0.0
    %729 = vmatpush.msra.mxu0 0.0
    %730 = vmatpush.msra.mxu0 0.0
    %731 = vmatpush.msra.mxu0 0.0
    %732 = vmatpush.msra.mxu0 %v663
    %733 = vmatpush.msra.mxu0 %v662
    %734 = vmatpush.msra.mxu0 %v661
    %735 = vmatpush.msra.mxu0 %v660
    %736 = vmatmul.f32.gmra.mxu0 %v715
    %v737 = vpop.f32.mrf.mxu0
    %v738 = vadd.f32 0.0, %v737
    %739 = vmatmul.f32.gmra.mxu0 %v718
    %v740 = vpop.f32.mrf.mxu0
    %v741 = vadd.f32 0.0, %v740
    %742 = vdwg.mxu0
    %s743 = scalar_lea.vmem %s4, 128
    %v744 = vld [vmem:[%s743] sm:$0xff]
    %v745 = vld [vmem:[%s743 + $0x8] sm:$0xff]
    %v746 = vld [vmem:[%s743 + $0x10] sm:$0xff]
    %v747 = vld [vmem:[%s743 + $0x18] sm:$0xff]
    %v748 = vld [vmem:[%s743 + $0x20] sm:$0xff]
    %v749 = vld [vmem:[%s743 + $0x28] sm:$0xff]
    %v750 = vld [vmem:[%s743 + $0x30] sm:$0xff]
    %v751 = vld [vmem:[%s743 + $0x38] sm:$0xff]
    %v752 = vld [vmem:[%s743 + $0x40] sm:$0xff]
    %v753 = vld [vmem:[%s743 + $0x48] sm:$0xff]
    %v754 = vld [vmem:[%s743 + $0x50] sm:$0xff]
    %v755 = vld [vmem:[%s743 + $0x58] sm:$0xff]
    %v756 = vld [vmem:[%s743 + $0x60] sm:$0xff]
    %v757 = vld [vmem:[%s743 + $0x68] sm:$0xff]
    %v758 = vld [vmem:[%s743 + $0x70] sm:$0xff]
    %v759 = vld [vmem:[%s743 + $0x78] sm:$0xff]
    %760 = vmatpush.msra.mxu0 %v759
    %761 = vmatpush.msra.mxu0 %v758
    %762 = vmatpush.msra.mxu0 %v757
    %763 = vmatpush.msra.mxu0 %v756
    %764 = vmatpush.msra.mxu0 %v755
    %765 = vmatpush.msra.mxu0 %v754
    %766 = vmatpush.msra.mxu0 %v753
    %767 = vmatpush.msra.mxu0 %v752
    %768 = vmatpush.msra.mxu0 %v751
    %769 = vmatpush.msra.mxu0 %v750
    %770 = vmatpush.msra.mxu0 %v749
    %771 = vmatpush.msra.mxu0 %v748
    %772 = vmatpush.msra.mxu0 %v747
    %773 = vmatpush.msra.mxu0 %v746
    %774 = vmatpush.msra.mxu0 %v745
    %775 = vmatpush.msra.mxu0 %v744
    %776 = vmatmul.f32.gmra.mxu0 %v738
    %v777 = vpop.f32.mrf.mxu0
    %v778 = vadd.f32 0.0, %v777
    %779 = vmatmul.f32.gmra.mxu0 %v741
    %v780 = vpop.f32.mrf.mxu0
    %v781 = vadd.f32 0.0, %v780
    %782 = vdwg.mxu0
    %783 = vmatpush.msra.mxu0 %v710
    %784 = vmatpush.msra.mxu0 %v709
    %785 = vmatpush.msra.mxu0 %v708
    %786 = vmatpush.msra.mxu0 %v707
    %787 = vmatpush.msra.mxu0 %v706
    %788 = vmatpush.msra.mxu0 %v705
    %789 = vmatpush.msra.mxu0 %v704
    %790 = vmatpush.msra.mxu0 %v703
    %791 = vmatpush.msra.mxu0 %v702
    %792 = vmatpush.msra.mxu0 %v701
    %793 = vmatpush.msra.mxu0 %v700
    %794 = vmatpush.msra.mxu0 %v699
    %795 = vmatpush.msra.mxu0 %v698
    %796 = vmatpush.msra.mxu0 %v697
    %797 = vmatpush.msra.mxu0 %v696
    %798 = vmatpush.msra.mxu0 %v695
    %799 = vmatmul.f32.gmra.mxu0 %v690
    %v800 = vpop.f32.mrf.mxu0
    %v801 = vadd.f32 %v778, %v800
    %802 = vmatmul.f32.gmra.mxu0 %v693
    %v803 = vpop.f32.mrf.mxu0
    %v804 = vadd.f32 %v781, %v803
    %805 = vdwg.mxu0
    %s806 = scalar_lea.vmem %s3, 32
    %v807 = vld [vmem:[%s806] sm:$0xff]
    %v808 = vld [vmem:[%s806 + $0x8] sm:$0xff]
    %v810 = vsel %vm221, %v807, 0
    %v813 = vsel %vm221, %v808, 0
    %815 = vmatpush.msra.mxu0 0.0
    %816 = vmatpush.msra.mxu0 0.0
    %817 = vmatpush.msra.mxu0 0.0
    %818 = vmatpush.msra.mxu0 0.0
    %819 = vmatpush.msra.mxu0 0.0
    %820 = vmatpush.msra.mxu0 0.0
    %821 = vmatpush.msra.mxu0 0.0
    %822 = vmatpush.msra.mxu0 0.0
    %823 = vmatpush.msra.mxu0 0.0
    %824 = vmatpush.msra.mxu0 0.0
    %825 = vmatpush.msra.mxu0 0.0
    %826 = vmatpush.msra.mxu0 0.0
    %827 = vmatpush.msra.mxu0 %v663
    %828 = vmatpush.msra.mxu0 %v662
    %829 = vmatpush.msra.mxu0 %v661
    %830 = vmatpush.msra.mxu0 %v660
    %831 = vmatmul.f32.gmra.mxu0 %v810
    %v832 = vpop.f32.mrf.mxu0
    %v833 = vadd.f32 0.0, %v832
    %834 = vmatmul.f32.gmra.mxu0 %v813
    %v835 = vpop.f32.mrf.mxu0
    %v836 = vadd.f32 0.0, %v835
    %837 = vdwg.mxu0
    %s838 = scalar_lea.vmem %s4, 256
    %v839 = vld [vmem:[%s838] sm:$0xff]
    %v840 = vld [vmem:[%s838 + $0x8] sm:$0xff]
    %v841 = vld [vmem:[%s838 + $0x10] sm:$0xff]
    %v842 = vld [vmem:[%s838 + $0x18] sm:$0xff]
    %v843 = vld [vmem:[%s838 + $0x20] sm:$0xff]
    %v844 = vld [vmem:[%s838 + $0x28] sm:$0xff]
    %v845 = vld [vmem:[%s838 + $0x30] sm:$0xff]
    %v846 = vld [vmem:[%s838 + $0x38] sm:$0xff]
    %v847 = vld [vmem:[%s838 + $0x40] sm:$0xff]
    %v848 = vld [vmem:[%s838 + $0x48] sm:$0xff]
    %v849 = vld [vmem:[%s838 + $0x50] sm:$0xff]
    %v850 = vld [vmem:[%s838 + $0x58] sm:$0xff]
    %v851 = vld [vmem:[%s838 + $0x60] sm:$0xff]
    %v852 = vld [vmem:[%s838 + $0x68] sm:$0xff]
    %v853 = vld [vmem:[%s838 + $0x70] sm:$0xff]
    %v854 = vld [vmem:[%s838 + $0x78] sm:$0xff]
    %855 = vmatpush.msra.mxu0 %v854
    %856 = vmatpush.msra.mxu0 %v853
    %857 = vmatpush.msra.mxu0 %v852
    %858 = vmatpush.msra.mxu0 %v851
    %859 = vmatpush.msra.mxu0 %v850
    %860 = vmatpush.msra.mxu0 %v849
    %861 = vmatpush.msra.mxu0 %v848
    %862 = vmatpush.msra.mxu0 %v847
    %863 = vmatpush.msra.mxu0 %v846
    %864 = vmatpush.msra.mxu0 %v845
    %865 = vmatpush.msra.mxu0 %v844
    %866 = vmatpush.msra.mxu0 %v843
    %867 = vmatpush.msra.mxu0 %v842
    %868 = vmatpush.msra.mxu0 %v841
    %869 = vmatpush.msra.mxu0 %v840
    %870 = vmatpush.msra.mxu0 %v839
    %871 = vmatmul.f32.gmra.mxu0 %v833
    %v872 = vpop.f32.mrf.mxu0
    %v873 = vadd.f32 0.0, %v872
    %874 = vmatmul.f32.gmra.mxu0 %v836
    %v875 = vpop.f32.mrf.mxu0
    %v876 = vadd.f32 0.0, %v875
    %877 = vdwg.mxu0
    %v878 = vadd.f32 %v801, %v873
    %v879 = vadd.f32 %v804, %v876
    %s880 = scalar_lea.vmem %s3, 48
    %v881 = vld [vmem:[%s880] sm:$0xff]
    %v882 = vld [vmem:[%s880 + $0x8] sm:$0xff]
    %v884 = vsel %vm221, %v881, 0
    %v887 = vsel %vm221, %v882, 0
    %889 = vmatpush.msra.mxu0 0.0
    %890 = vmatpush.msra.mxu0 0.0
    %891 = vmatpush.msra.mxu0 0.0
    %892 = vmatpush.msra.mxu0 0.0
    %893 = vmatpush.msra.mxu0 0.0
    %894 = vmatpush.msra.mxu0 0.0
    %895 = vmatpush.msra.mxu0 0.0
    %896 = vmatpush.msra.mxu0 0.0
    %897 = vmatpush.msra.mxu0 0.0
    %898 = vmatpush.msra.mxu0 0.0
    %899 = vmatpush.msra.mxu0 0.0
    %900 = vmatpush.msra.mxu0 0.0
    %901 = vmatpush.msra.mxu0 %v663
    %902 = vmatpush.msra.mxu0 %v662
    %903 = vmatpush.msra.mxu0 %v661
    %904 = vmatpush.msra.mxu0 %v660
    %905 = vmatmul.f32.gmra.mxu0 %v884
    %v906 = vpop.f32.mrf.mxu0
    %v907 = vadd.f32 0.0, %v906
    %908 = vmatmul.f32.gmra.mxu0 %v887
    %v909 = vpop.f32.mrf.mxu0
    %v910 = vadd.f32 0.0, %v909
    %911 = vdwg.mxu0
    %s912 = scalar_lea.vmem %s4, 384
    %v913 = vld [vmem:[%s912] sm:$0xff]
    %v914 = vld [vmem:[%s912 + $0x8] sm:$0xff]
    %v915 = vld [vmem:[%s912 + $0x10] sm:$0xff]
    %v916 = vld [vmem:[%s912 + $0x18] sm:$0xff]
    %v917 = vld [vmem:[%s912 + $0x20] sm:$0xff]
    %v918 = vld [vmem:[%s912 + $0x28] sm:$0xff]
    %v919 = vld [vmem:[%s912 + $0x30] sm:$0xff]
    %v920 = vld [vmem:[%s912 + $0x38] sm:$0xff]
    %v921 = vld [vmem:[%s912 + $0x40] sm:$0xff]
    %v922 = vld [vmem:[%s912 + $0x48] sm:$0xff]
    %v923 = vld [vmem:[%s912 + $0x50] sm:$0xff]
    %v924 = vld [vmem:[%s912 + $0x58] sm:$0xff]
    %v925 = vld [vmem:[%s912 + $0x60] sm:$0xff]
    %v926 = vld [vmem:[%s912 + $0x68] sm:$0xff]
    %v927 = vld [vmem:[%s912 + $0x70] sm:$0xff]
    %v928 = vld [vmem:[%s912 + $0x78] sm:$0xff]
    %929 = vmatpush.msra.mxu0 %v928
    %930 = vmatpush.msra.mxu0 %v927
    %931 = vmatpush.msra.mxu0 %v926
    %932 = vmatpush.msra.mxu0 %v925
    %933 = vmatpush.msra.mxu0 %v924
    %934 = vmatpush.msra.mxu0 %v923
    %935 = vmatpush.msra.mxu0 %v922
    %936 = vmatpush.msra.mxu0 %v921
    %937 = vmatpush.msra.mxu0 %v920
    %938 = vmatpush.msra.mxu0 %v919
    %939 = vmatpush.msra.mxu0 %v918
    %940 = vmatpush.msra.mxu0 %v917
    %941 = vmatpush.msra.mxu0 %v916
    %942 = vmatpush.msra.mxu0 %v915
    %943 = vmatpush.msra.mxu0 %v914
    %944 = vmatpush.msra.mxu0 %v913
    %945 = vmatmul.f32.gmra.mxu0 %v907
    %v946 = vpop.f32.mrf.mxu0
    %v947 = vadd.f32 0.0, %v946
    %948 = vmatmul.f32.gmra.mxu0 %v910
    %v949 = vpop.f32.mrf.mxu0
    %v950 = vadd.f32 0.0, %v949
    %951 = vdwg.mxu0
    %v952 = vadd.f32 %v878, %v947
    %v953 = vadd.f32 %v879, %v950
    %v954 = vld [vmem:[%s16] sm:$0xff]
    %v955 = vld [vmem:[%s16 + $0x8] sm:$0xff]
    %v956 = vld [vmem:[%s16 + $0x10] sm:$0xff]
    %v957 = vld [vmem:[%s16 + $0x18] sm:$0xff]
    %v958 = vld [vmem:[%s16 + $0x20] sm:$0xff]
    %v959 = vld [vmem:[%s16 + $0x28] sm:$0xff]
    %v960 = vld [vmem:[%s16 + $0x30] sm:$0xff]
    %v961 = vld [vmem:[%s16 + $0x38] sm:$0xff]
    %v962 = vld [vmem:[%s17] sm:$0xff]
    %v963 = vld [vmem:[#allocation4 + $0x1] sm:$0x1]
    %v964 = vld [vmem:[#allocation6 + $0x1] sm:$0x1]
    %v965 = vsel %vm124, %v952, 0.0
    %v966 = vsel %vm124, %v953, 0.0
    %v967 = vadd.f32 %v965, %v966
    %v968 = vrot.slane %v967, 4
    %v969 = vadd.f32 %v967, %v968
    %v970 = vrot.slane %v969, 2
    %v971 = vadd.f32 %v969, %v970
    %v972 = vrot.slane %v971, 1
    %v973 = vadd.f32 %v971, %v972
    %v975 = vsel %vm124, %v973, 0
    %977 = vmatpush.msra.mxu0 0.0
    %978 = vmatpush.msra.mxu0 0.0
    %979 = vmatpush.msra.mxu0 0.0
    %980 = vmatpush.msra.mxu0 0.0
    %981 = vmatpush.msra.mxu0 0.0
    %982 = vmatpush.msra.mxu0 0.0
    %983 = vmatpush.msra.mxu0 0.0
    %984 = vmatpush.msra.mxu0 0.0
    %985 = vmatpush.msra.mxu0 %v961
    %986 = vmatpush.msra.mxu0 %v960
    %987 = vmatpush.msra.mxu0 %v959
    %988 = vmatpush.msra.mxu0 %v958
    %989 = vmatpush.msra.mxu0 %v957
    %990 = vmatpush.msra.mxu0 %v956
    %991 = vmatpush.msra.mxu0 %v955
    %992 = vmatpush.msra.mxu0 %v954
    %993 = vmatmul.f32.gmra.mxu0 %v975
    %v994 = vpop.f32.mrf.mxu0
    %v995 = vadd.f32 0.0, %v994
    %996 = vdwg.mxu0
    %v997 = vmul.f32 %v952, %v952
    %v998 = vmul.f32 %v953, %v953
    %v999 = vsel %vm124, %v997, 0.0
    %v1000 = vsel %vm124, %v998, 0.0
    %v1001 = vadd.f32 %v999, %v1000
    %v1002 = vrot.slane %v1001, 4
    %v1003 = vadd.f32 %v1001, %v1002
    %v1004 = vrot.slane %v1003, 2
    %v1005 = vadd.f32 %v1003, %v1004
    %v1006 = vrot.slane %v1005, 1
    %v1007 = vadd.f32 %v1005, %v1006
    %v1009 = vsel %vm124, %v1007, 0
    %1011 = vmatpush.msra.mxu0 0.0
    %1012 = vmatpush.msra.mxu0 0.0
    %1013 = vmatpush.msra.mxu0 0.0
    %1014 = vmatpush.msra.mxu0 0.0
    %1015 = vmatpush.msra.mxu0 0.0
    %1016 = vmatpush.msra.mxu0 0.0
    %1017 = vmatpush.msra.mxu0 0.0
    %1018 = vmatpush.msra.mxu0 0.0
    %1019 = vmatpush.msra.mxu0 %v961
    %1020 = vmatpush.msra.mxu0 %v960
    %1021 = vmatpush.msra.mxu0 %v959
    %1022 = vmatpush.msra.mxu0 %v958
    %1023 = vmatpush.msra.mxu0 %v957
    %1024 = vmatpush.msra.mxu0 %v956
    %1025 = vmatpush.msra.mxu0 %v955
    %1026 = vmatpush.msra.mxu0 %v954
    %1027 = vmatmul.f32.gmra.mxu0 %v1009
    %v1028 = vpop.f32.mrf.mxu0
    %v1029 = vadd.f32 0.0, %v1028
    %1030 = vdwg.mxu0
    %v1031 = vrcp.pop 128.0
    %v1032 = vmul.f32 128.0, %v1031
    %v1033 = vsub.f32 1.0, %v1032
    %v1034 = vmul.f32 %v1031, %v1033
    %v1035 = vadd.f32 %v1031, %v1034
    %vm1036 = vweird.f32 %v1031
    %v1037 = vsel %vm1036, %v1031, %v1035
    %v1038 = vmul.f32 %v995, %v1037
    %v1039 = vmul.f32 %v1029, %v1037
    %v1040 = vmul.f32 %v1038, %v1038
    %v1041 = vsub.f32 %v1039, %v1040
    %v1042 = vmax.f32 %v1041, 0.0
    %v1043 = vadd.f32 %v1042, 1e-05
    %v1044 = vrsqrt.pop %v1043
    %v1045 = vmul.f32 %v1044, %v1043
    %v1046 = vmul.f32 %v1045, %v1044
    %v1047 = vmul.f32 0.5, %v1046
    %v1048 = vsub.f32 1.5, %v1047
    %v1049 = vmul.f32 %v1044, %v1048
    %vm1050 = vweird.f32 %v1043
    %vm1051 = vweird.f32 %v1044
    %vm1052 = vmor %vm1050, %vm1051
    %v1053 = vsel %vm1052, %v1044, %v1049
    %v1054 = vmul.f32 %v963, %v1053
    %v1055 = vmul.f32 %v1038, %v1054
    %v1056 = vsub.f32 %v964, %v1055
    %v1058 = vsel %vm603, %v1054, 0
    %1060 = vmatpush.msra.mxu0 0.0
    %1061 = vmatpush.msra.mxu0 0.0
    %1062 = vmatpush.msra.mxu0 0.0
    %1063 = vmatpush.msra.mxu0 0.0
    %1064 = vmatpush.msra.mxu0 0.0
    %1065 = vmatpush.msra.mxu0 0.0
    %1066 = vmatpush.msra.mxu0 0.0
    %1067 = vmatpush.msra.mxu0 0.0
    %1068 = vmatpush.msra.mxu0 0.0
    %1069 = vmatpush.msra.mxu0 0.0
    %1070 = vmatpush.msra.mxu0 0.0
    %1071 = vmatpush.msra.mxu0 0.0
    %1072 = vmatpush.msra.mxu0 0.0
    %1073 = vmatpush.msra.mxu0 0.0
    %1074 = vmatpush.msra.mxu0 0.0
    %1075 = vmatpush.msra.mxu0 %v962
    %1076 = vmatmul.f32.gmra.mxu0 %v1058
    %v1077 = vpop.f32.mrf.mxu0
    %v1078 = vadd.f32 0.0, %v1077
    %1079 = vdwg.mxu0
    %v1081 = vsel %vm603, %v1056, 0
    %1083 = vmatpush.msra.mxu0 0.0
    %1084 = vmatpush.msra.mxu0 0.0
    %1085 = vmatpush.msra.mxu0 0.0
    %1086 = vmatpush.msra.mxu0 0.0
    %1087 = vmatpush.msra.mxu0 0.0
    %1088 = vmatpush.msra.mxu0 0.0
    %1089 = vmatpush.msra.mxu0 0.0
    %1090 = vmatpush.msra.mxu0 0.0
    %1091 = vmatpush.msra.mxu0 0.0
    %1092 = vmatpush.msra.mxu0 0.0
    %1093 = vmatpush.msra.mxu0 0.0
    %1094 = vmatpush.msra.mxu0 0.0
    %1095 = vmatpush.msra.mxu0 0.0
    %1096 = vmatpush.msra.mxu0 0.0
    %1097 = vmatpush.msra.mxu0 0.0
    %1098 = vmatpush.msra.mxu0 %v962
    %1099 = vmatmul.f32.gmra.mxu0 %v1081
    %v1100 = vpop.f32.mrf.mxu0
    %v1101 = vadd.f32 0.0, %v1100
    %1102 = vdwg.mxu0
    %v1103 = vperm.slane %v1078, 0
    %v1104 = vmul.f32 %v952, %v1103
    %v1105 = vmul.f32 %v953, %v1103
    %v1106 = vperm.slane %v1101, 0
    %v1107 = vadd.f32 %v1104, %v1106
    %v1108 = vadd.f32 %v1105, %v1106
    %v1109 = vmax.f32 %v1107, 0.0
    %v1110 = vmax.f32 %v1108, 0.0
    %v1111 = vld [vmem:[%s5] sm:$0xff]
    %v1112 = vld [vmem:[%s5 + $0x8] sm:$0xff]
    %vm1113 = vcmask 130048
    %v1115 = vsel %vm1113, %v1111, 0
    %v1118 = vsel %vm1113, %v1112, 0
    %1120 = vmatpush.msra.mxu0 0.0
    %1121 = vmatpush.msra.mxu0 0.0
    %1122 = vmatpush.msra.mxu0 0.0
    %1123 = vmatpush.msra.mxu0 0.0
    %1124 = vmatpush.msra.mxu0 0.0
    %1125 = vmatpush.msra.mxu0 0.0
    %1126 = vmatpush.msra.mxu0 0.0
    %1127 = vmatpush.msra.mxu0 0.0
    %1128 = vmatpush.msra.mxu0 0.0
    %1129 = vmatpush.msra.mxu0 0.0
    %1130 = vmatpush.msra.mxu0 0.0
    %1131 = vmatpush.msra.mxu0 0.0
    %1132 = vmatpush.msra.mxu0 0.0
    %1133 = vmatpush.msra.mxu0 0.0
    %1134 = vmatpush.msra.mxu0 %v1110
    %1135 = vmatpush.msra.mxu0 %v1109
    %1136 = vmatmul.f32.gmra.mxu0 %v1115
    %v1137 = vpop.f32.mrf.mxu0
    %v1138 = vadd.f32 0.0, %v1137
    %1139 = vmatmul.f32.gmra.mxu0 %v1118
    %v1140 = vpop.f32.mrf.mxu0
    %v1141 = vadd.f32 0.0, %v1140
    %1142 = vdwg.mxu0
    %v1143 = vld [vmem:[%s6] sm:$0xff]
    %v1144 = vld [vmem:[%s6 + $0x8] sm:$0xff]
    %v1145 = vld [vmem:[%s6 + $0x10] sm:$0xff]
    %v1146 = vld [vmem:[%s6 + $0x18] sm:$0xff]
    %v1147 = vld [vmem:[%s6 + $0x20] sm:$0xff]
    %v1148 = vld [vmem:[%s6 + $0x28] sm:$0xff]
    %v1149 = vld [vmem:[%s6 + $0x30] sm:$0xff]
    %v1150 = vld [vmem:[%s6 + $0x38] sm:$0xff]
    %s1151 = scalar_lea.vmem %s5, 16
    %v1152 = vld [vmem:[%s1151] sm:$0xff]
    %v1153 = vld [vmem:[%s1151 + $0x8] sm:$0xff]
    %v1155 = vsel %vm1113, %v1152, 0
    %v1158 = vsel %vm1113, %v1153, 0
    %1160 = vmatpush.msra.mxu0 0.0
    %1161 = vmatpush.msra.mxu0 0.0
    %1162 = vmatpush.msra.mxu0 0.0
    %1163 = vmatpush.msra.mxu0 0.0
    %1164 = vmatpush.msra.mxu0 0.0
    %1165 = vmatpush.msra.mxu0 0.0
    %1166 = vmatpush.msra.mxu0 0.0
    %1167 = vmatpush.msra.mxu0 0.0
    %1168 = vmatpush.msra.mxu0 0.0
    %1169 = vmatpush.msra.mxu0 0.0
    %1170 = vmatpush.msra.mxu0 0.0
    %1171 = vmatpush.msra.mxu0 0.0
    %1172 = vmatpush.msra.mxu0 0.0
    %1173 = vmatpush.msra.mxu0 0.0
    %1174 = vmatpush.msra.mxu0 %v1110
    %1175 = vmatpush.msra.mxu0 %v1109
    %1176 = vmatmul.f32.gmra.mxu0 %v1155
    %v1177 = vpop.f32.mrf.mxu0
    %v1178 = vadd.f32 0.0, %v1177
    %1179 = vmatmul.f32.gmra.mxu0 %v1158
    %v1180 = vpop.f32.mrf.mxu0
    %v1181 = vadd.f32 0.0, %v1180
    %1182 = vdwg.mxu0
    %s1183 = scalar_lea.vmem %s6, 64
    %v1184 = vld [vmem:[%s1183] sm:$0xff]
    %v1185 = vld [vmem:[%s1183 + $0x8] sm:$0xff]
    %v1186 = vld [vmem:[%s1183 + $0x10] sm:$0xff]
    %v1187 = vld [vmem:[%s1183 + $0x18] sm:$0xff]
    %v1188 = vld [vmem:[%s1183 + $0x20] sm:$0xff]
    %v1189 = vld [vmem:[%s1183 + $0x28] sm:$0xff]
    %v1190 = vld [vmem:[%s1183 + $0x30] sm:$0xff]
    %v1191 = vld [vmem:[%s1183 + $0x38] sm:$0xff]
    %v1193 = vsel %vm124, %v1178, 0
    %v1196 = vsel %vm124, %v1181, 0
    %1198 = vmatpush.msra.mxu0 0.0
    %1199 = vmatpush.msra.mxu0 0.0
    %1200 = vmatpush.msra.mxu0 0.0
    %1201 = vmatpush.msra.mxu0 0.0
    %1202 = vmatpush.msra.mxu0 0.0
    %1203 = vmatpush.msra.mxu0 0.0
    %1204 = vmatpush.msra.mxu0 0.0
    %1205 = vmatpush.msra.mxu0 0.0
    %1206 = vmatpush.msra.mxu0 %v1191
    %1207 = vmatpush.msra.mxu0 %v1190
    %1208 = vmatpush.msra.mxu0 %v1189
    %1209 = vmatpush.msra.mxu0 %v1188
    %1210 = vmatpush.msra.mxu0 %v1187
    %1211 = vmatpush.msra.mxu0 %v1186
    %1212 = vmatpush.msra.mxu0 %v1185
    %1213 = vmatpush.msra.mxu0 %v1184
    %1214 = vmatmul.f32.gmra.mxu0 %v1193
    %v1215 = vpop.f32.mrf.mxu0
    %v1216 = vadd.f32 0.0, %v1215
    %1217 = vmatmul.f32.gmra.mxu0 %v1196
    %v1218 = vpop.f32.mrf.mxu0
    %v1219 = vadd.f32 0.0, %v1218
    %1220 = vdwg.mxu0
    %v1222 = vsel %vm124, %v1138, 0
    %v1225 = vsel %vm124, %v1141, 0
    %1227 = vmatpush.msra.mxu0 0.0
    %1228 = vmatpush.msra.mxu0 0.0
    %1229 = vmatpush.msra.mxu0 0.0
    %1230 = vmatpush.msra.mxu0 0.0
    %1231 = vmatpush.msra.mxu0 0.0
    %1232 = vmatpush.msra.mxu0 0.0
    %1233 = vmatpush.msra.mxu0 0.0
    %1234 = vmatpush.msra.mxu0 0.0
    %1235 = vmatpush.msra.mxu0 %v1150
    %1236 = vmatpush.msra.mxu0 %v1149
    %1237 = vmatpush.msra.mxu0 %v1148
    %1238 = vmatpush.msra.mxu0 %v1147
    %1239 = vmatpush.msra.mxu0 %v1146
    %1240 = vmatpush.msra.mxu0 %v1145
    %1241 = vmatpush.msra.mxu0 %v1144
    %1242 = vmatpush.msra.mxu0 %v1143
    %1243 = vmatmul.f32.gmra.mxu0 %v1222
    %v1244 = vpop.f32.mrf.mxu0
    %v1245 = vadd.f32 %v1216, %v1244
    %1246 = vmatmul.f32.gmra.mxu0 %v1225
    %v1247 = vpop.f32.mrf.mxu0
    %v1248 = vadd.f32 %v1219, %v1247
    %1249 = vdwg.mxu0
    %s1250 = scalar_lea.vmem %s5, 32
    %v1251 = vld [vmem:[%s1250] sm:$0xff]
    %v1252 = vld [vmem:[%s1250 + $0x8] sm:$0xff]
    %v1254 = vsel %vm1113, %v1251, 0
    %v1257 = vsel %vm1113, %v1252, 0
    %1259 = vmatpush.msra.mxu0 0.0
    %1260 = vmatpush.msra.mxu0 0.0
    %1261 = vmatpush.msra.mxu0 0.0
    %1262 = vmatpush.msra.mxu0 0.0
    %1263 = vmatpush.msra.mxu0 0.0
    %1264 = vmatpush.msra.mxu0 0.0
    %1265 = vmatpush.msra.mxu0 0.0
    %1266 = vmatpush.msra.mxu0 0.0
    %1267 = vmatpush.msra.mxu0 0.0
    %1268 = vmatpush.msra.mxu0 0.0
    %1269 = vmatpush.msra.mxu0 0.0
    %1270 = vmatpush.msra.mxu0 0.0
    %1271 = vmatpush.msra.mxu0 0.0
    %1272 = vmatpush.msra.mxu0 0.0
    %1273 = vmatpush.msra.mxu0 %v1110
    %1274 = vmatpush.msra.mxu0 %v1109
    %1275 = vmatmul.f32.gmra.mxu0 %v1254
    %v1276 = vpop.f32.mrf.mxu0
    %v1277 = vadd.f32 0.0, %v1276
    %1278 = vmatmul.f32.gmra.mxu0 %v1257
    %v1279 = vpop.f32.mrf.mxu0
    %v1280 = vadd.f32 0.0, %v1279
    %1281 = vdwg.mxu0
    %s1282 = scalar_lea.vmem %s6, 128
    %v1283 = vld [vmem:[%s1282] sm:$0xff]
    %v1284 = vld [vmem:[%s1282 + $0x8] sm:$0xff]
    %v1285 = vld [vmem:[%s1282 + $0x10] sm:$0xff]
    %v1286 = vld [vmem:[%s1282 + $0x18] sm:$0xff]
    %v1287 = vld [vmem:[%s1282 + $0x20] sm:$0xff]
    %v1288 = vld [vmem:[%s1282 + $0x28] sm:$0xff]
    %v1289 = vld [vmem:[%s1282 + $0x30] sm:$0xff]
    %v1290 = vld [vmem:[%s1282 + $0x38] sm:$0xff]
    %v1292 = vsel %vm124, %v1277, 0
    %v1295 = vsel %vm124, %v1280, 0
    %1297 = vmatpush.msra.mxu0 0.0
    %1298 = vmatpush.msra.mxu0 0.0
    %1299 = vmatpush.msra.mxu0 0.0
    %1300 = vmatpush.msra.mxu0 0.0
    %1301 = vmatpush.msra.mxu0 0.0
    %1302 = vmatpush.msra.mxu0 0.0
    %1303 = vmatpush.msra.mxu0 0.0
    %1304 = vmatpush.msra.mxu0 0.0
    %1305 = vmatpush.msra.mxu0 %v1290
    %1306 = vmatpush.msra.mxu0 %v1289
    %1307 = vmatpush.msra.mxu0 %v1288
    %1308 = vmatpush.msra.mxu0 %v1287
    %1309 = vmatpush.msra.mxu0 %v1286
    %1310 = vmatpush.msra.mxu0 %v1285
    %1311 = vmatpush.msra.mxu0 %v1284
    %1312 = vmatpush.msra.mxu0 %v1283
    %1313 = vmatmul.f32.gmra.mxu0 %v1292
    %v1314 = vpop.f32.mrf.mxu0
    %v1315 = vadd.f32 0.0, %v1314
    %1316 = vmatmul.f32.gmra.mxu0 %v1295
    %v1317 = vpop.f32.mrf.mxu0
    %v1318 = vadd.f32 0.0, %v1317
    %1319 = vdwg.mxu0
    %v1320 = vadd.f32 %v1245, %v1315
    %v1321 = vadd.f32 %v1248, %v1318
    %v1322 = vld [vmem:[#allocation4 + $0x2] sm:$0x1]
    %v1323 = vld [vmem:[#allocation6 + $0x2] sm:$0x1]
    %v1324 = vsel %vm124, %v1320, 0.0
    %v1325 = vsel %vm124, %v1321, 0.0
    %v1326 = vadd.f32 %v1324, %v1325
    %v1327 = vrot.slane %v1326, 4
    %v1328 = vadd.f32 %v1326, %v1327
    %v1329 = vrot.slane %v1328, 2
    %v1330 = vadd.f32 %v1328, %v1329
    %v1331 = vrot.slane %v1330, 1
    %v1332 = vadd.f32 %v1330, %v1331
    %v1334 = vsel %vm124, %v1332, 0
    %1336 = vmatpush.msra.mxu0 0.0
    %1337 = vmatpush.msra.mxu0 0.0
    %1338 = vmatpush.msra.mxu0 0.0
    %1339 = vmatpush.msra.mxu0 0.0
    %1340 = vmatpush.msra.mxu0 0.0
    %1341 = vmatpush.msra.mxu0 0.0
    %1342 = vmatpush.msra.mxu0 0.0
    %1343 = vmatpush.msra.mxu0 0.0
    %1344 = vmatpush.msra.mxu0 %v961
    %1345 = vmatpush.msra.mxu0 %v960
    %1346 = vmatpush.msra.mxu0 %v959
    %1347 = vmatpush.msra.mxu0 %v958
    %1348 = vmatpush.msra.mxu0 %v957
    %1349 = vmatpush.msra.mxu0 %v956
    %1350 = vmatpush.msra.mxu0 %v955
    %1351 = vmatpush.msra.mxu0 %v954
    %1352 = vmatmul.f32.gmra.mxu0 %v1334
    %v1353 = vpop.f32.mrf.mxu0
    %v1354 = vadd.f32 0.0, %v1353
    %1355 = vdwg.mxu0
    %v1356 = vmul.f32 %v1320, %v1320
    %v1357 = vmul.f32 %v1321, %v1321
    %v1358 = vsel %vm124, %v1356, 0.0
    %v1359 = vsel %vm124, %v1357, 0.0
    %v1360 = vadd.f32 %v1358, %v1359
    %v1361 = vrot.slane %v1360, 4
    %v1362 = vadd.f32 %v1360, %v1361
    %v1363 = vrot.slane %v1362, 2
    %v1364 = vadd.f32 %v1362, %v1363
    %v1365 = vrot.slane %v1364, 1
    %v1366 = vadd.f32 %v1364, %v1365
    %v1368 = vsel %vm124, %v1366, 0
    %1370 = vmatpush.msra.mxu0 0.0
    %1371 = vmatpush.msra.mxu0 0.0
    %1372 = vmatpush.msra.mxu0 0.0
    %1373 = vmatpush.msra.mxu0 0.0
    %1374 = vmatpush.msra.mxu0 0.0
    %1375 = vmatpush.msra.mxu0 0.0
    %1376 = vmatpush.msra.mxu0 0.0
    %1377 = vmatpush.msra.mxu0 0.0
    %1378 = vmatpush.msra.mxu0 %v961
    %1379 = vmatpush.msra.mxu0 %v960
    %1380 = vmatpush.msra.mxu0 %v959
    %1381 = vmatpush.msra.mxu0 %v958
    %1382 = vmatpush.msra.mxu0 %v957
    %1383 = vmatpush.msra.mxu0 %v956
    %1384 = vmatpush.msra.mxu0 %v955
    %1385 = vmatpush.msra.mxu0 %v954
    %1386 = vmatmul.f32.gmra.mxu0 %v1368
    %v1387 = vpop.f32.mrf.mxu0
    %v1388 = vadd.f32 0.0, %v1387
    %1389 = vdwg.mxu0
    %v1390 = vmul.f32 %v1354, %v1037
    %v1391 = vmul.f32 %v1388, %v1037
    %v1392 = vmul.f32 %v1390, %v1390
    %v1393 = vsub.f32 %v1391, %v1392
    %v1394 = vmax.f32 %v1393, 0.0
    %v1395 = vadd.f32 %v1394, 1e-05
    %v1396 = vrsqrt.pop %v1395
    %v1397 = vmul.f32 %v1396, %v1395
    %v1398 = vmul.f32 %v1397, %v1396
    %v1399 = vmul.f32 0.5, %v1398
    %v1400 = vsub.f32 1.5, %v1399
    %v1401 = vmul.f32 %v1396, %v1400
    %vm1402 = vweird.f32 %v1395
    %vm1403 = vweird.f32 %v1396
    %vm1404 = vmor %vm1402, %vm1403
    %v1405 = vsel %vm1404, %v1396, %v1401
    %v1406 = vmul.f32 %v1322, %v1405
    %v1407 = vmul.f32 %v1390, %v1406
    %v1408 = vsub.f32 %v1323, %v1407
    %v1410 = vsel %vm603, %v1406, 0
    %1412 = vmatpush.msra.mxu0 0.0
    %1413 = vmatpush.msra.mxu0 0.0
    %1414 = vmatpush.msra.mxu0 0.0
    %1415 = vmatpush.msra.mxu0 0.0
    %1416 = vmatpush.msra.mxu0 0.0
    %1417 = vmatpush.msra.mxu0 0.0
    %1418 = vmatpush.msra.mxu0 0.0
    %1419 = vmatpush.msra.mxu0 0.0
    %1420 = vmatpush.msra.mxu0 0.0
    %1421 = vmatpush.msra.mxu0 0.0
    %1422 = vmatpush.msra.mxu0 0.0
    %1423 = vmatpush.msra.mxu0 0.0
    %1424 = vmatpush.msra.mxu0 0.0
    %1425 = vmatpush.msra.mxu0 0.0
    %1426 = vmatpush.msra.mxu0 0.0
    %1427 = vmatpush.msra.mxu0 %v962
    %1428 = vmatmul.f32.gmra.mxu0 %v1410
    %v1429 = vpop.f32.mrf.mxu0
    %v1430 = vadd.f32 0.0, %v1429
    %1431 = vdwg.mxu0
    %v1433 = vsel %vm603, %v1408, 0
    %1435 = vmatpush.msra.mxu0 0.0
    %1436 = vmatpush.msra.mxu0 0.0
    %1437 = vmatpush.msra.mxu0 0.0
    %1438 = vmatpush.msra.mxu0 0.0
    %1439 = vmatpush.msra.mxu0 0.0
    %1440 = vmatpush.msra.mxu0 0.0
    %1441 = vmatpush.msra.mxu0 0.0
    %1442 = vmatpush.msra.mxu0 0.0
    %1443 = vmatpush.msra.mxu0 0.0
    %1444 = vmatpush.msra.mxu0 0.0
    %1445 = vmatpush.msra.mxu0 0.0
    %1446 = vmatpush.msra.mxu0 0.0
    %1447 = vmatpush.msra.mxu0 0.0
    %1448 = vmatpush.msra.mxu0 0.0
    %1449 = vmatpush.msra.mxu0 0.0
    %1450 = vmatpush.msra.mxu0 %v962
    %1451 = vmatmul.f32.gmra.mxu0 %v1433
    %v1452 = vpop.f32.mrf.mxu0
    %v1453 = vadd.f32 0.0, %v1452
    %1454 = vdwg.mxu0
    %v1455 = vperm.slane %v1430, 0
    %v1456 = vmul.f32 %v1320, %v1455
    %v1457 = vmul.f32 %v1321, %v1455
    %v1458 = vperm.slane %v1453, 0
    %v1459 = vadd.f32 %v1456, %v1458
    %v1460 = vadd.f32 %v1457, %v1458
    %v1461 = vmax.f32 %v1459, 0.0
    %v1462 = vmax.f32 %v1460, 0.0
    %v1463 = vld [vmem:[%s8] sm:$0xff]
    %v1464 = vld [vmem:[%s8 + $0x8] sm:$0xff]
    %v1465 = vld [vmem:[%s8 + $0x10] sm:$0xff]
    %v1466 = vld [vmem:[%s8 + $0x18] sm:$0xff]
    %v1467 = vld [vmem:[%s8 + $0x20] sm:$0xff]
    %v1468 = vld [vmem:[%s8 + $0x28] sm:$0xff]
    %v1469 = vld [vmem:[%s8 + $0x30] sm:$0xff]
    %v1470 = vld [vmem:[%s8 + $0x38] sm:$0xff]
    %v1472 = vsel %vm124, %v1461, 0
    %v1475 = vsel %vm124, %v1462, 0
    %1477 = vmatpush.msra.mxu0 0.0
    %1478 = vmatpush.msra.mxu0 0.0
    %1479 = vmatpush.msra.mxu0 0.0
    %1480 = vmatpush.msra.mxu0 0.0
    %1481 = vmatpush.msra.mxu0 0.0
    %1482 = vmatpush.msra.mxu0 0.0
    %1483 = vmatpush.msra.mxu0 0.0
    %1484 = vmatpush.msra.mxu0 0.0
    %1485 = vmatpush.msra.mxu0 %v1470
    %1486 = vmatpush.msra.mxu0 %v1469
    %1487 = vmatpush.msra.mxu0 %v1468
    %1488 = vmatpush.msra.mxu0 %v1467
    %1489 = vmatpush.msra.mxu0 %v1466
    %1490 = vmatpush.msra.mxu0 %v1465
    %1491 = vmatpush.msra.mxu0 %v1464
    %1492 = vmatpush.msra.mxu0 %v1463
    %1493 = vmatmul.f32.gmra.mxu0 %v1472
    %v1494 = vpop.f32.mrf.mxu0
    %v1495 = vadd.f32 0.0, %v1494
    %1496 = vmatmul.f32.gmra.mxu0 %v1475
    %v1497 = vpop.f32.mrf.mxu0
    %v1498 = vadd.f32 0.0, %v1497
    %1499 = vdwg.mxu0
    %v1500 = vld [vmem:[#allocation4 + $0x3] sm:$0x1]
    %v1501 = vld [vmem:[#allocation6 + $0x3] sm:$0x1]
    %v1502 = vsel %vm124, %v1495, 0.0
    %v1503 = vsel %vm124, %v1498, 0.0
    %v1504 = vadd.f32 %v1502, %v1503
    %v1505 = vrot.slane %v1504, 4
    %v1506 = vadd.f32 %v1504, %v1505
    %v1507 = vrot.slane %v1506, 2
    %v1508 = vadd.f32 %v1506, %v1507
    %v1509 = vrot.slane %v1508, 1
    %v1510 = vadd.f32 %v1508, %v1509
    %v1512 = vsel %vm124, %v1510, 0
    %1514 = vmatpush.msra.mxu0 0.0
    %1515 = vmatpush.msra.mxu0 0.0
    %1516 = vmatpush.msra.mxu0 0.0
    %1517 = vmatpush.msra.mxu0 0.0
    %1518 = vmatpush.msra.mxu0 0.0
    %1519 = vmatpush.msra.mxu0 0.0
    %1520 = vmatpush.msra.mxu0 0.0
    %1521 = vmatpush.msra.mxu0 0.0
    %1522 = vmatpush.msra.mxu0 %v961
    %1523 = vmatpush.msra.mxu0 %v960
    %1524 = vmatpush.msra.mxu0 %v959
    %1525 = vmatpush.msra.mxu0 %v958
    %1526 = vmatpush.msra.mxu0 %v957
    %1527 = vmatpush.msra.mxu0 %v956
    %1528 = vmatpush.msra.mxu0 %v955
    %1529 = vmatpush.msra.mxu0 %v954
    %1530 = vmatmul.f32.gmra.mxu0 %v1512
    %v1531 = vpop.f32.mrf.mxu0
    %v1532 = vadd.f32 0.0, %v1531
    %1533 = vdwg.mxu0
    %v1534 = vmul.f32 %v1495, %v1495
    %v1535 = vmul.f32 %v1498, %v1498
    %v1536 = vsel %vm124, %v1534, 0.0
    %v1537 = vsel %vm124, %v1535, 0.0
    %v1538 = vadd.f32 %v1536, %v1537
    %v1539 = vrot.slane %v1538, 4
    %v1540 = vadd.f32 %v1538, %v1539
    %v1541 = vrot.slane %v1540, 2
    %v1542 = vadd.f32 %v1540, %v1541
    %v1543 = vrot.slane %v1542, 1
    %v1544 = vadd.f32 %v1542, %v1543
    %v1546 = vsel %vm124, %v1544, 0
    %1548 = vmatpush.msra.mxu0 0.0
    %1549 = vmatpush.msra.mxu0 0.0
    %1550 = vmatpush.msra.mxu0 0.0
    %1551 = vmatpush.msra.mxu0 0.0
    %1552 = vmatpush.msra.mxu0 0.0
    %1553 = vmatpush.msra.mxu0 0.0
    %1554 = vmatpush.msra.mxu0 0.0
    %1555 = vmatpush.msra.mxu0 0.0
    %1556 = vmatpush.msra.mxu0 %v961
    %1557 = vmatpush.msra.mxu0 %v960
    %1558 = vmatpush.msra.mxu0 %v959
    %1559 = vmatpush.msra.mxu0 %v958
    %1560 = vmatpush.msra.mxu0 %v957
    %1561 = vmatpush.msra.mxu0 %v956
    %1562 = vmatpush.msra.mxu0 %v955
    %1563 = vmatpush.msra.mxu0 %v954
    %1564 = vmatmul.f32.gmra.mxu0 %v1546
    %v1565 = vpop.f32.mrf.mxu0
    %v1566 = vadd.f32 0.0, %v1565
    %1567 = vdwg.mxu0
    %v1568 = vmul.f32 %v1532, %v1037
    %v1569 = vmul.f32 %v1566, %v1037
    %v1570 = vmul.f32 %v1568, %v1568
    %v1571 = vsub.f32 %v1569, %v1570
    %v1572 = vmax.f32 %v1571, 0.0
    %v1573 = vadd.f32 %v1572, 1e-05
    %v1574 = vrsqrt.pop %v1573
    %v1575 = vmul.f32 %v1574, %v1573
    %v1576 = vmul.f32 %v1575, %v1574
    %v1577 = vmul.f32 0.5, %v1576
    %v1578 = vsub.f32 1.5, %v1577
    %v1579 = vmul.f32 %v1574, %v1578
    %vm1580 = vweird.f32 %v1573
    %vm1581 = vweird.f32 %v1574
    %vm1582 = vmor %vm1580, %vm1581
    %v1583 = vsel %vm1582, %v1574, %v1579
    %v1584 = vmul.f32 %v1500, %v1583
    %v1585 = vmul.f32 %v1568, %v1584
    %v1586 = vsub.f32 %v1501, %v1585
    %v1588 = vsel %vm603, %v1584, 0
    %1590 = vmatpush.msra.mxu0 0.0
    %1591 = vmatpush.msra.mxu0 0.0
    %1592 = vmatpush.msra.mxu0 0.0
    %1593 = vmatpush.msra.mxu0 0.0
    %1594 = vmatpush.msra.mxu0 0.0
    %1595 = vmatpush.msra.mxu0 0.0
    %1596 = vmatpush.msra.mxu0 0.0
    %1597 = vmatpush.msra.mxu0 0.0
    %1598 = vmatpush.msra.mxu0 0.0
    %1599 = vmatpush.msra.mxu0 0.0
    %1600 = vmatpush.msra.mxu0 0.0
    %1601 = vmatpush.msra.mxu0 0.0
    %1602 = vmatpush.msra.mxu0 0.0
    %1603 = vmatpush.msra.mxu0 0.0
    %1604 = vmatpush.msra.mxu0 0.0
    %1605 = vmatpush.msra.mxu0 %v962
    %1606 = vmatmul.f32.gmra.mxu0 %v1588
    %v1607 = vpop.f32.mrf.mxu0
    %v1608 = vadd.f32 0.0, %v1607
    %1609 = vdwg.mxu0
    %v1611 = vsel %vm603, %v1586, 0
    %1613 = vmatpush.msra.mxu0 0.0
    %1614 = vmatpush.msra.mxu0 0.0
    %1615 = vmatpush.msra.mxu0 0.0
    %1616 = vmatpush.msra.mxu0 0.0
    %1617 = vmatpush.msra.mxu0 0.0
    %1618 = vmatpush.msra.mxu0 0.0
    %1619 = vmatpush.msra.mxu0 0.0
    %1620 = vmatpush.msra.mxu0 0.0
    %1621 = vmatpush.msra.mxu0 0.0
    %1622 = vmatpush.msra.mxu0 0.0
    %1623 = vmatpush.msra.mxu0 0.0
    %1624 = vmatpush.msra.mxu0 0.0
    %1625 = vmatpush.msra.mxu0 0.0
    %1626 = vmatpush.msra.mxu0 0.0
    %1627 = vmatpush.msra.mxu0 0.0
    %1628 = vmatpush.msra.mxu0 %v962
    %1629 = vmatmul.f32.gmra.mxu0 %v1611
    %v1630 = vpop.f32.mrf.mxu0
    %v1631 = vadd.f32 0.0, %v1630
    %1632 = vdwg.mxu0
    %v1633 = vperm.slane %v1608, 0
    %v1634 = vmul.f32 %v1495, %v1633
    %v1635 = vmul.f32 %v1498, %v1633
    %v1636 = vperm.slane %v1631, 0
    %v1637 = vadd.f32 %v1634, %v1636
    %v1638 = vadd.f32 %v1635, %v1636
    %v1639 = vadd.f32 %v1107, %v1637
    %v1640 = vadd.f32 %v1108, %v1638
    %v1641 = vmax.f32 %v1639, 0.0
    %v1642 = vmax.f32 %v1640, 0.0
    %1643 = vmatpush.msra.mxu0 0.0
    %1644 = vmatpush.msra.mxu0 0.0
    %1645 = vmatpush.msra.mxu0 0.0
    %1646 = vmatpush.msra.mxu0 0.0
    %1647 = vmatpush.msra.mxu0 0.0
    %1648 = vmatpush.msra.mxu0 0.0
    %1649 = vmatpush.msra.mxu0 0.0
    %1650 = vmatpush.msra.mxu0 0.0
    %1651 = vmatpush.msra.mxu0 0.0
    %1652 = vmatpush.msra.mxu0 0.0
    %1653 = vmatpush.msra.mxu0 0.0
    %1654 = vmatpush.msra.mxu0 0.0
    %1655 = vmatpush.msra.mxu0 0.0
    %1656 = vmatpush.msra.mxu0 0.0
    %1657 = vmatpush.msra.mxu0 %v1642
    %1658 = vmatpush.msra.mxu0 %v1641
    %1659 = vmatmul.f32.gmra.mxu0 %v1115
    %v1660 = vpop.f32.mrf.mxu0
    %v1661 = vadd.f32 0.0, %v1660
    %1662 = vmatmul.f32.gmra.mxu0 %v1118
    %v1663 = vpop.f32.mrf.mxu0
    %v1664 = vadd.f32 0.0, %v1663
    %1665 = vdwg.mxu0
    %v1666 = vld [vmem:[%s7] sm:$0xff]
    %v1667 = vld [vmem:[%s7 + $0x8] sm:$0xff]
    %v1668 = vld [vmem:[%s7 + $0x10] sm:$0xff]
    %v1669 = vld [vmem:[%s7 + $0x18] sm:$0xff]
    %v1670 = vld [vmem:[%s7 + $0x20] sm:$0xff]
    %v1671 = vld [vmem:[%s7 + $0x28] sm:$0xff]
    %v1672 = vld [vmem:[%s7 + $0x30] sm:$0xff]
    %v1673 = vld [vmem:[%s7 + $0x38] sm:$0xff]
    %1674 = vmatpush.msra.mxu0 0.0
    %1675 = vmatpush.msra.mxu0 0.0
    %1676 = vmatpush.msra.mxu0 0.0
    %1677 = vmatpush.msra.mxu0 0.0
    %1678 = vmatpush.msra.mxu0 0.0
    %1679 = vmatpush.msra.mxu0 0.0
    %1680 = vmatpush.msra.mxu0 0.0
    %1681 = vmatpush.msra.mxu0 0.0
    %1682 = vmatpush.msra.mxu0 0.0
    %1683 = vmatpush.msra.mxu0 0.0
    %1684 = vmatpush.msra.mxu0 0.0
    %1685 = vmatpush.msra.mxu0 0.0
    %1686 = vmatpush.msra.mxu0 0.0
    %1687 = vmatpush.msra.mxu0 0.0
    %1688 = vmatpush.msra.mxu0 %v1642
    %1689 = vmatpush.msra.mxu0 %v1641
    %1690 = vmatmul.f32.gmra.mxu0 %v1155
    %v1691 = vpop.f32.mrf.mxu0
    %v1692 = vadd.f32 0.0, %v1691
    %1693 = vmatmul.f32.gmra.mxu0 %v1158
    %v1694 = vpop.f32.mrf.mxu0
    %v1695 = vadd.f32 0.0, %v1694
    %1696 = vdwg.mxu0
    %s1697 = scalar_lea.vmem %s7, 64
    %v1698 = vld [vmem:[%s1697] sm:$0xff]
    %v1699 = vld [vmem:[%s1697 + $0x8] sm:$0xff]
    %v1700 = vld [vmem:[%s1697 + $0x10] sm:$0xff]
    %v1701 = vld [vmem:[%s1697 + $0x18] sm:$0xff]
    %v1702 = vld [vmem:[%s1697 + $0x20] sm:$0xff]
    %v1703 = vld [vmem:[%s1697 + $0x28] sm:$0xff]
    %v1704 = vld [vmem:[%s1697 + $0x30] sm:$0xff]
    %v1705 = vld [vmem:[%s1697 + $0x38] sm:$0xff]
    %v1707 = vsel %vm124, %v1692, 0
    %v1710 = vsel %vm124, %v1695, 0
    %1712 = vmatpush.msra.mxu0 0.0
    %1713 = vmatpush.msra.mxu0 0.0
    %1714 = vmatpush.msra.mxu0 0.0
    %1715 = vmatpush.msra.mxu0 0.0
    %1716 = vmatpush.msra.mxu0 0.0
    %1717 = vmatpush.msra.mxu0 0.0
    %1718 = vmatpush.msra.mxu0 0.0
    %1719 = vmatpush.msra.mxu0 0.0
    %1720 = vmatpush.msra.mxu0 %v1705
    %1721 = vmatpush.msra.mxu0 %v1704
    %1722 = vmatpush.msra.mxu0 %v1703
    %1723 = vmatpush.msra.mxu0 %v1702
    %1724 = vmatpush.msra.mxu0 %v1701
    %1725 = vmatpush.msra.mxu0 %v1700
    %1726 = vmatpush.msra.mxu0 %v1699
    %1727 = vmatpush.msra.mxu0 %v1698
    %1728 = vmatmul.f32.gmra.mxu0 %v1707
    %v1729 = vpop.f32.mrf.mxu0
    %v1730 = vadd.f32 0.0, %v1729
    %1731 = vmatmul.f32.gmra.mxu0 %v1710
    %v1732 = vpop.f32.mrf.mxu0
    %v1733 = vadd.f32 0.0, %v1732
    %1734 = vdwg.mxu0
    %v1736 = vsel %vm124, %v1661, 0
    %v1739 = vsel %vm124, %v1664, 0
    %1741 = vmatpush.msra.mxu0 0.0
    %1742 = vmatpush.msra.mxu0 0.0
    %1743 = vmatpush.msra.mxu0 0.0
    %1744 = vmatpush.msra.mxu0 0.0
    %1745 = vmatpush.msra.mxu0 0.0
    %1746 = vmatpush.msra.mxu0 0.0
    %1747 = vmatpush.msra.mxu0 0.0
    %1748 = vmatpush.msra.mxu0 0.0
    %1749 = vmatpush.msra.mxu0 %v1673
    %1750 = vmatpush.msra.mxu0 %v1672
    %1751 = vmatpush.msra.mxu0 %v1671
    %1752 = vmatpush.msra.mxu0 %v1670
    %1753 = vmatpush.msra.mxu0 %v1669
    %1754 = vmatpush.msra.mxu0 %v1668
    %1755 = vmatpush.msra.mxu0 %v1667
    %1756 = vmatpush.msra.mxu0 %v1666
    %1757 = vmatmul.f32.gmra.mxu0 %v1736
    %v1758 = vpop.f32.mrf.mxu0
    %v1759 = vadd.f32 %v1730, %v1758
    %1760 = vmatmul.f32.gmra.mxu0 %v1739
    %v1761 = vpop.f32.mrf.mxu0
    %v1762 = vadd.f32 %v1733, %v1761
    %1763 = vdwg.mxu0
    %1764 = vmatpush.msra.mxu0 0.0
    %1765 = vmatpush.msra.mxu0 0.0
    %1766 = vmatpush.msra.mxu0 0.0
    %1767 = vmatpush.msra.mxu0 0.0
    %1768 = vmatpush.msra.mxu0 0.0
    %1769 = vmatpush.msra.mxu0 0.0
    %1770 = vmatpush.msra.mxu0 0.0
    %1771 = vmatpush.msra.mxu0 0.0
    %1772 = vmatpush.msra.mxu0 0.0
    %1773 = vmatpush.msra.mxu0 0.0
    %1774 = vmatpush.msra.mxu0 0.0
    %1775 = vmatpush.msra.mxu0 0.0
    %1776 = vmatpush.msra.mxu0 0.0
    %1777 = vmatpush.msra.mxu0 0.0
    %1778 = vmatpush.msra.mxu0 %v1642
    %1779 = vmatpush.msra.mxu0 %v1641
    %1780 = vmatmul.f32.gmra.mxu0 %v1254
    %v1781 = vpop.f32.mrf.mxu0
    %v1782 = vadd.f32 0.0, %v1781
    %1783 = vmatmul.f32.gmra.mxu0 %v1257
    %v1784 = vpop.f32.mrf.mxu0
    %v1785 = vadd.f32 0.0, %v1784
    %1786 = vdwg.mxu0
    %s1787 = scalar_lea.vmem %s7, 128
    %v1788 = vld [vmem:[%s1787] sm:$0xff]
    %v1789 = vld [vmem:[%s1787 + $0x8] sm:$0xff]
    %v1790 = vld [vmem:[%s1787 + $0x10] sm:$0xff]
    %v1791 = vld [vmem:[%s1787 + $0x18] sm:$0xff]
    %v1792 = vld [vmem:[%s1787 + $0x20] sm:$0xff]
    %v1793 = vld [vmem:[%s1787 + $0x28] sm:$0xff]
    %v1794 = vld [vmem:[%s1787 + $0x30] sm:$0xff]
    %v1795 = vld [vmem:[%s1787 + $0x38] sm:$0xff]
    %v1797 = vsel %vm124, %v1782, 0
    %v1800 = vsel %vm124, %v1785, 0
    %1802 = vmatpush.msra.mxu0 0.0
    %1803 = vmatpush.msra.mxu0 0.0
    %1804 = vmatpush.msra.mxu0 0.0
    %1805 = vmatpush.msra.mxu0 0.0
    %1806 = vmatpush.msra.mxu0 0.0
    %1807 = vmatpush.msra.mxu0 0.0
    %1808 = vmatpush.msra.mxu0 0.0
    %1809 = vmatpush.msra.mxu0 0.0
    %1810 = vmatpush.msra.mxu0 %v1795
    %1811 = vmatpush.msra.mxu0 %v1794
    %1812 = vmatpush.msra.mxu0 %v1793
    %1813 = vmatpush.msra.mxu0 %v1792
    %1814 = vmatpush.msra.mxu0 %v1791
    %1815 = vmatpush.msra.mxu0 %v1790
    %1816 = vmatpush.msra.mxu0 %v1789
    %1817 = vmatpush.msra.mxu0 %v1788
    %1818 = vmatmul.f32.gmra.mxu0 %v1797
    %v1819 = vpop.f32.mrf.mxu0
    %v1820 = vadd.f32 0.0, %v1819
    %1821 = vmatmul.f32.gmra.mxu0 %v1800
    %v1822 = vpop.f32.mrf.mxu0
    %v1823 = vadd.f32 0.0, %v1822
    %1824 = vdwg.mxu0
    %v1825 = vadd.f32 %v1759, %v1820
    %v1826 = vadd.f32 %v1762, %v1823
    %v1827 = vld [vmem:[#allocation4 + $0x4] sm:$0x1]
    %v1828 = vld [vmem:[#allocation6 + $0x4] sm:$0x1]
    %v1829 = vsel %vm124, %v1825, 0.0
    %v1830 = vsel %vm124, %v1826, 0.0
    %v1831 = vadd.f32 %v1829, %v1830
    %v1832 = vrot.slane %v1831, 4
    %v1833 = vadd.f32 %v1831, %v1832
    %v1834 = vrot.slane %v1833, 2
    %v1835 = vadd.f32 %v1833, %v1834
    %v1836 = vrot.slane %v1835, 1
    %v1837 = vadd.f32 %v1835, %v1836
    %v1839 = vsel %vm124, %v1837, 0
    %1841 = vmatpush.msra.mxu0 0.0
    %1842 = vmatpush.msra.mxu0 0.0
    %1843 = vmatpush.msra.mxu0 0.0
    %1844 = vmatpush.msra.mxu0 0.0
    %1845 = vmatpush.msra.mxu0 0.0
    %1846 = vmatpush.msra.mxu0 0.0
    %1847 = vmatpush.msra.mxu0 0.0
    %1848 = vmatpush.msra.mxu0 0.0
    %1849 = vmatpush.msra.mxu0 %v961
    %1850 = vmatpush.msra.mxu0 %v960
    %1851 = vmatpush.msra.mxu0 %v959
    %1852 = vmatpush.msra.mxu0 %v958
    %1853 = vmatpush.msra.mxu0 %v957
    %1854 = vmatpush.msra.mxu0 %v956
    %1855 = vmatpush.msra.mxu0 %v955
    %1856 = vmatpush.msra.mxu0 %v954
    %1857 = vmatmul.f32.gmra.mxu0 %v1839
    %v1858 = vpop.f32.mrf.mxu0
    %v1859 = vadd.f32 0.0, %v1858
    %1860 = vdwg.mxu0
    %v1861 = vmul.f32 %v1825, %v1825
    %v1862 = vmul.f32 %v1826, %v1826
    %v1863 = vsel %vm124, %v1861, 0.0
    %v1864 = vsel %vm124, %v1862, 0.0
    %v1865 = vadd.f32 %v1863, %v1864
    %v1866 = vrot.slane %v1865, 4
    %v1867 = vadd.f32 %v1865, %v1866
    %v1868 = vrot.slane %v1867, 2
    %v1869 = vadd.f32 %v1867, %v1868
    %v1870 = vrot.slane %v1869, 1
    %v1871 = vadd.f32 %v1869, %v1870
    %v1873 = vsel %vm124, %v1871, 0
    %1875 = vmatpush.msra.mxu0 0.0
    %1876 = vmatpush.msra.mxu0 0.0
    %1877 = vmatpush.msra.mxu0 0.0
    %1878 = vmatpush.msra.mxu0 0.0
    %1879 = vmatpush.msra.mxu0 0.0
    %1880 = vmatpush.msra.mxu0 0.0
    %1881 = vmatpush.msra.mxu0 0.0
    %1882 = vmatpush.msra.mxu0 0.0
    %1883 = vmatpush.msra.mxu0 %v961
    %1884 = vmatpush.msra.mxu0 %v960
    %1885 = vmatpush.msra.mxu0 %v959
    %1886 = vmatpush.msra.mxu0 %v958
    %1887 = vmatpush.msra.mxu0 %v957
    %1888 = vmatpush.msra.mxu0 %v956
    %1889 = vmatpush.msra.mxu0 %v955
    %1890 = vmatpush.msra.mxu0 %v954
    %1891 = vmatmul.f32.gmra.mxu0 %v1873
    %v1892 = vpop.f32.mrf.mxu0
    %v1893 = vadd.f32 0.0, %v1892
    %1894 = vdwg.mxu0
    %v1895 = vmul.f32 %v1859, %v1037
    %v1896 = vmul.f32 %v1893, %v1037
    %v1897 = vmul.f32 %v1895, %v1895
    %v1898 = vsub.f32 %v1896, %v1897
    %v1899 = vmax.f32 %v1898, 0.0
    %v1900 = vadd.f32 %v1899, 1e-05
    %v1901 = vrsqrt.pop %v1900
    %v1902 = vmul.f32 %v1901, %v1900
    %v1903 = vmul.f32 %v1902, %v1901
    %v1904 = vmul.f32 0.5, %v1903
    %v1905 = vsub.f32 1.5, %v1904
    %v1906 = vmul.f32 %v1901, %v1905
    %vm1907 = vweird.f32 %v1900
    %vm1908 = vweird.f32 %v1901
    %vm1909 = vmor %vm1907, %vm1908
    %v1910 = vsel %vm1909, %v1901, %v1906
    %v1911 = vmul.f32 %v1827, %v1910
    %v1912 = vmul.f32 %v1895, %v1911
    %v1913 = vsub.f32 %v1828, %v1912
    %v1915 = vsel %vm603, %v1911, 0
    %1917 = vmatpush.msra.mxu0 0.0
    %1918 = vmatpush.msra.mxu0 0.0
    %1919 = vmatpush.msra.mxu0 0.0
    %1920 = vmatpush.msra.mxu0 0.0
    %1921 = vmatpush.msra.mxu0 0.0
    %1922 = vmatpush.msra.mxu0 0.0
    %1923 = vmatpush.msra.mxu0 0.0
    %1924 = vmatpush.msra.mxu0 0.0
    %1925 = vmatpush.msra.mxu0 0.0
    %1926 = vmatpush.msra.mxu0 0.0
    %1927 = vmatpush.msra.mxu0 0.0
    %1928 = vmatpush.msra.mxu0 0.0
    %1929 = vmatpush.msra.mxu0 0.0
    %1930 = vmatpush.msra.mxu0 0.0
    %1931 = vmatpush.msra.mxu0 0.0
    %1932 = vmatpush.msra.mxu0 %v962
    %1933 = vmatmul.f32.gmra.mxu0 %v1915
    %v1934 = vpop.f32.mrf.mxu0
    %v1935 = vadd.f32 0.0, %v1934
    %1936 = vdwg.mxu0
    %v1938 = vsel %vm603, %v1913, 0
    %1940 = vmatpush.msra.mxu0 0.0
    %1941 = vmatpush.msra.mxu0 0.0
    %1942 = vmatpush.msra.mxu0 0.0
    %1943 = vmatpush.msra.mxu0 0.0
    %1944 = vmatpush.msra.mxu0 0.0
    %1945 = vmatpush.msra.mxu0 0.0
    %1946 = vmatpush.msra.mxu0 0.0
    %1947 = vmatpush.msra.mxu0 0.0
    %1948 = vmatpush.msra.mxu0 0.0
    %1949 = vmatpush.msra.mxu0 0.0
    %1950 = vmatpush.msra.mxu0 0.0
    %1951 = vmatpush.msra.mxu0 0.0
    %1952 = vmatpush.msra.mxu0 0.0
    %1953 = vmatpush.msra.mxu0 0.0
    %1954 = vmatpush.msra.mxu0 0.0
    %1955 = vmatpush.msra.mxu0 %v962
    %1956 = vmatmul.f32.gmra.mxu0 %v1938
    %v1957 = vpop.f32.mrf.mxu0
    %v1958 = vadd.f32 0.0, %v1957
    %1959 = vdwg.mxu0
    %v1960 = vperm.slane %v1935, 0
    %v1961 = vmul.f32 %v1825, %v1960
    %v1962 = vmul.f32 %v1826, %v1960
    %v1963 = vperm.slane %v1958, 0
    %v1964 = vadd.f32 %v1961, %v1963
    %v1965 = vadd.f32 %v1962, %v1963
    %v1966 = vmax.f32 %v1964, 0.0
    %v1967 = vmax.f32 %v1965, 0.0
    %v1968 = vld [vmem:[%s9] sm:$0xff]
    %v1970 = vsel %vm1113, %v1968, 0
    %1972 = vmatpush.msra.mxu0 0.0
    %1973 = vmatpush.msra.mxu0 0.0
    %1974 = vmatpush.msra.mxu0 0.0
    %1975 = vmatpush.msra.mxu0 0.0
    %1976 = vmatpush.msra.mxu0 0.0
    %1977 = vmatpush.msra.mxu0 0.0
    %1978 = vmatpush.msra.mxu0 0.0
    %1979 = vmatpush.msra.mxu0 0.0
    %1980 = vmatpush.msra.mxu0 0.0
    %1981 = vmatpush.msra.mxu0 0.0
    %1982 = vmatpush.msra.mxu0 0.0
    %1983 = vmatpush.msra.mxu0 0.0
    %1984 = vmatpush.msra.mxu0 0.0
    %1985 = vmatpush.msra.mxu0 0.0
    %1986 = vmatpush.msra.mxu0 %v1967
    %1987 = vmatpush.msra.mxu0 %v1966
    %1988 = vmatmul.f32.gmra.mxu0 %v1970
    %v1989 = vpop.f32.mrf.mxu0
    %v1990 = vadd.f32 0.0, %v1989
    %1991 = vdwg.mxu0
    %v1992 = vld [vmem:[%s10] sm:$0xff]
    %v1993 = vld [vmem:[%s10 + $0x8] sm:$0xff]
    %v1994 = vld [vmem:[%s10 + $0x10] sm:$0xff]
    %v1995 = vld [vmem:[%s10 + $0x18] sm:$0xff]
    %v1996 = vld [vmem:[%s10 + $0x20] sm:$0xff]
    %v1997 = vld [vmem:[%s10 + $0x28] sm:$0xff]
    %v1998 = vld [vmem:[%s10 + $0x30] sm:$0xff]
    %v1999 = vld [vmem:[%s10 + $0x38] sm:$0xff]
    %v2001 = vsel %vm124, %v1990, 0
    %2003 = vmatpush.msra.mxu0 0.0
    %2004 = vmatpush.msra.mxu0 0.0
    %2005 = vmatpush.msra.mxu0 0.0
    %2006 = vmatpush.msra.mxu0 0.0
    %2007 = vmatpush.msra.mxu0 0.0
    %2008 = vmatpush.msra.mxu0 0.0
    %2009 = vmatpush.msra.mxu0 0.0
    %2010 = vmatpush.msra.mxu0 0.0
    %2011 = vmatpush.msra.mxu0 %v1999
    %2012 = vmatpush.msra.mxu0 %v1998
    %2013 = vmatpush.msra.mxu0 %v1997
    %2014 = vmatpush.msra.mxu0 %v1996
    %2015 = vmatpush.msra.mxu0 %v1995
    %2016 = vmatpush.msra.mxu0 %v1994
    %2017 = vmatpush.msra.mxu0 %v1993
    %2018 = vmatpush.msra.mxu0 %v1992
    %2019 = vmatmul.f32.gmra.mxu0 %v2001
    %v2020 = vpop.f32.mrf.mxu0
    %v2021 = vadd.f32 0.0, %v2020
    %2022 = vdwg.mxu0
    %v2023 = vld [vmem:[%s18] sm:$0xff]
    %v2024 = vld [vmem:[%s18 + $0x8] sm:$0xff]
    %v2025 = vld [vmem:[%s18 + $0x10] sm:$0xff]
    %v2026 = vld [vmem:[%s18 + $0x18] sm:$0xff]
    %v2027 = vld [vmem:[%s19] sm:$0xff]
    %v2028 = vld [vmem:[#allocation4 + $0x5] sm:$0x1]
    %v2029 = vld [vmem:[#allocation6 + $0x5] sm:$0x1]
    %v2030 = vsel %vm221, %v2021, 0.0
    %v2031 = vrot.slane %v2030, 4
    %v2032 = vadd.f32 %v2030, %v2031
    %v2033 = vrot.slane %v2032, 2
    %v2034 = vadd.f32 %v2032, %v2033
    %v2035 = vrot.slane %v2034, 1
    %v2036 = vadd.f32 %v2034, %v2035
    %v2038 = vsel %vm221, %v2036, 0
    %2040 = vmatpush.msra.mxu0 0.0
    %2041 = vmatpush.msra.mxu0 0.0
    %2042 = vmatpush.msra.mxu0 0.0
    %2043 = vmatpush.msra.mxu0 0.0
    %2044 = vmatpush.msra.mxu0 0.0
    %2045 = vmatpush.msra.mxu0 0.0
    %2046 = vmatpush.msra.mxu0 0.0
    %2047 = vmatpush.msra.mxu0 0.0
    %2048 = vmatpush.msra.mxu0 0.0
    %2049 = vmatpush.msra.mxu0 0.0
    %2050 = vmatpush.msra.mxu0 0.0
    %2051 = vmatpush.msra.mxu0 0.0
    %2052 = vmatpush.msra.mxu0 %v2026
    %2053 = vmatpush.msra.mxu0 %v2025
    %2054 = vmatpush.msra.mxu0 %v2024
    %2055 = vmatpush.msra.mxu0 %v2023
    %2056 = vmatmul.f32.gmra.mxu0 %v2038
    %v2057 = vpop.f32.mrf.mxu0
    %v2058 = vadd.f32 0.0, %v2057
    %2059 = vdwg.mxu0
    %v2060 = vmul.f32 %v2021, %v2021
    %v2061 = vsel %vm221, %v2060, 0.0
    %v2062 = vrot.slane %v2061, 4
    %v2063 = vadd.f32 %v2061, %v2062
    %v2064 = vrot.slane %v2063, 2
    %v2065 = vadd.f32 %v2063, %v2064
    %v2066 = vrot.slane %v2065, 1
    %v2067 = vadd.f32 %v2065, %v2066
    %v2069 = vsel %vm221, %v2067, 0
    %2071 = vmatpush.msra.mxu0 0.0
    %2072 = vmatpush.msra.mxu0 0.0
    %2073 = vmatpush.msra.mxu0 0.0
    %2074 = vmatpush.msra.mxu0 0.0
    %2075 = vmatpush.msra.mxu0 0.0
    %2076 = vmatpush.msra.mxu0 0.0
    %2077 = vmatpush.msra.mxu0 0.0
    %2078 = vmatpush.msra.mxu0 0.0
    %2079 = vmatpush.msra.mxu0 0.0
    %2080 = vmatpush.msra.mxu0 0.0
    %2081 = vmatpush.msra.mxu0 0.0
    %2082 = vmatpush.msra.mxu0 0.0
    %2083 = vmatpush.msra.mxu0 %v2026
    %2084 = vmatpush.msra.mxu0 %v2025
    %2085 = vmatpush.msra.mxu0 %v2024
    %2086 = vmatpush.msra.mxu0 %v2023
    %2087 = vmatmul.f32.gmra.mxu0 %v2069
    %v2088 = vpop.f32.mrf.mxu0
    %v2089 = vadd.f32 0.0, %v2088
    %2090 = vdwg.mxu0
    %v2091 = vrcp.pop 32.0
    %v2092 = vmul.f32 32.0, %v2091
    %v2093 = vsub.f32 1.0, %v2092
    %v2094 = vmul.f32 %v2091, %v2093
    %v2095 = vadd.f32 %v2091, %v2094
    %vm2096 = vweird.f32 %v2091
    %v2097 = vsel %vm2096, %v2091, %v2095
    %v2098 = vmul.f32 %v2058, %v2097
    %v2099 = vmul.f32 %v2089, %v2097
    %v2100 = vmul.f32 %v2098, %v2098
    %v2101 = vsub.f32 %v2099, %v2100
    %v2102 = vmax.f32 %v2101, 0.0
    %v2103 = vadd.f32 %v2102, 1e-05
    %v2104 = vrsqrt.pop %v2103
    %v2105 = vmul.f32 %v2104, %v2103
    %v2106 = vmul.f32 %v2105, %v2104
    %v2107 = vmul.f32 0.5, %v2106
    %v2108 = vsub.f32 1.5, %v2107
    %v2109 = vmul.f32 %v2104, %v2108
    %vm2110 = vweird.f32 %v2103
    %vm2111 = vweird.f32 %v2104
    %vm2112 = vmor %vm2110, %vm2111
    %v2113 = vsel %vm2112, %v2104, %v2109
    %v2114 = vmul.f32 %v2028, %v2113
    %v2115 = vmul.f32 %v2098, %v2114
    %v2116 = vsub.f32 %v2029, %v2115
    %v2118 = vsel %vm603, %v2114, 0
    %2120 = vmatpush.msra.mxu0 0.0
    %2121 = vmatpush.msra.mxu0 0.0
    %2122 = vmatpush.msra.mxu0 0.0
    %2123 = vmatpush.msra.mxu0 0.0
    %2124 = vmatpush.msra.mxu0 0.0
    %2125 = vmatpush.msra.mxu0 0.0
    %2126 = vmatpush.msra.mxu0 0.0
    %2127 = vmatpush.msra.mxu0 0.0
    %2128 = vmatpush.msra.mxu0 0.0
    %2129 = vmatpush.msra.mxu0 0.0
    %2130 = vmatpush.msra.mxu0 0.0
    %2131 = vmatpush.msra.mxu0 0.0
    %2132 = vmatpush.msra.mxu0 0.0
    %2133 = vmatpush.msra.mxu0 0.0
    %2134 = vmatpush.msra.mxu0 0.0
    %2135 = vmatpush.msra.mxu0 %v2027
    %2136 = vmatmul.f32.gmra.mxu0 %v2118
    %v2137 = vpop.f32.mrf.mxu0
    %v2138 = vadd.f32 0.0, %v2137
    %2139 = vdwg.mxu0
    %v2141 = vsel %vm603, %v2116, 0
    %2143 = vmatpush.msra.mxu0 0.0
    %2144 = vmatpush.msra.mxu0 0.0
    %2145 = vmatpush.msra.mxu0 0.0
    %2146 = vmatpush.msra.mxu0 0.0
    %2147 = vmatpush.msra.mxu0 0.0
    %2148 = vmatpush.msra.mxu0 0.0
    %2149 = vmatpush.msra.mxu0 0.0
    %2150 = vmatpush.msra.mxu0 0.0
    %2151 = vmatpush.msra.mxu0 0.0
    %2152 = vmatpush.msra.mxu0 0.0
    %2153 = vmatpush.msra.mxu0 0.0
    %2154 = vmatpush.msra.mxu0 0.0
    %2155 = vmatpush.msra.mxu0 0.0
    %2156 = vmatpush.msra.mxu0 0.0
    %2157 = vmatpush.msra.mxu0 0.0
    %2158 = vmatpush.msra.mxu0 %v2027
    %2159 = vmatmul.f32.gmra.mxu0 %v2141
    %v2160 = vpop.f32.mrf.mxu0
    %v2161 = vadd.f32 0.0, %v2160
    %2162 = vdwg.mxu0
    %v2163 = vperm.slane %v2138, 0
    %v2164 = vmul.f32 %v2021, %v2163
    %v2165 = vperm.slane %v2161, 0
    %v2166 = vadd.f32 %v2164, %v2165
    %2167 = vmatpush.msra.mxu0 0.0
    %2168 = vmatpush.msra.mxu0 0.0
    %2169 = vmatpush.msra.mxu0 0.0
    %2170 = vmatpush.msra.mxu0 0.0
    %2171 = vmatpush.msra.mxu0 0.0
    %2172 = vmatpush.msra.mxu0 0.0
    %2173 = vmatpush.msra.mxu0 0.0
    %2174 = vmatpush.msra.mxu0 0.0
    %2175 = vmatpush.msra.mxu0 0.0
    %2176 = vmatpush.msra.mxu0 0.0
    %2177 = vmatpush.msra.mxu0 0.0
    %2178 = vmatpush.msra.mxu0 0.0
    %2179 = vmatpush.msra.mxu0 0.0
    %2180 = vmatpush.msra.mxu0 0.0
    %2181 = vmatpush.msra.mxu0 %v1640
    %2182 = vmatpush.msra.mxu0 %v1639
    %2183 = vmatmul.f32.gmra.mxu0 %v1970
    %v2184 = vpop.f32.mrf.mxu0
    %v2185 = vadd.f32 0.0, %v2184
    %2186 = vdwg.mxu0
    %v2187 = vld [vmem:[%s11] sm:$0xff]
    %v2188 = vld [vmem:[%s11 + $0x8] sm:$0xff]
    %v2189 = vld [vmem:[%s11 + $0x10] sm:$0xff]
    %v2190 = vld [vmem:[%s11 + $0x18] sm:$0xff]
    %v2191 = vld [vmem:[%s11 + $0x20] sm:$0xff]
    %v2192 = vld [vmem:[%s11 + $0x28] sm:$0xff]
    %v2193 = vld [vmem:[%s11 + $0x30] sm:$0xff]
    %v2194 = vld [vmem:[%s11 + $0x38] sm:$0xff]
    %v2196 = vsel %vm124, %v2185, 0
    %2198 = vmatpush.msra.mxu0 0.0
    %2199 = vmatpush.msra.mxu0 0.0
    %2200 = vmatpush.msra.mxu0 0.0
    %2201 = vmatpush.msra.mxu0 0.0
    %2202 = vmatpush.msra.mxu0 0.0
    %2203 = vmatpush.msra.mxu0 0.0
    %2204 = vmatpush.msra.mxu0 0.0
    %2205 = vmatpush.msra.mxu0 0.0
    %2206 = vmatpush.msra.mxu0 %v2194
    %2207 = vmatpush.msra.mxu0 %v2193
    %2208 = vmatpush.msra.mxu0 %v2192
    %2209 = vmatpush.msra.mxu0 %v2191
    %2210 = vmatpush.msra.mxu0 %v2190
    %2211 = vmatpush.msra.mxu0 %v2189
    %2212 = vmatpush.msra.mxu0 %v2188
    %2213 = vmatpush.msra.mxu0 %v2187
    %2214 = vmatmul.f32.gmra.mxu0 %v2196
    %v2215 = vpop.f32.mrf.mxu0
    %v2216 = vadd.f32 %v2166, %v2215
    %2217 = vdwg.mxu0
    %v2218 = vld [vmem:[%s12] sm:$0xff]
    %v2219 = vld [vmem:[%s12 + $0x8] sm:$0xff]
    %v2220 = vld [vmem:[%s12 + $0x10] sm:$0xff]
    %v2221 = vld [vmem:[%s12 + $0x18] sm:$0xff]
    %v2222 = vld [vmem:[#allocation2] sm:$0x1]
    %v2224 = vperm.slane %v2222, 0
    %v2227 = vsel %vm221, %v2216, 0
    %2229 = vmatpush.msra.mxu0 0.0
    %2230 = vmatpush.msra.mxu0 0.0
    %2231 = vmatpush.msra.mxu0 0.0
    %2232 = vmatpush.msra.mxu0 0.0
    %2233 = vmatpush.msra.mxu0 0.0
    %2234 = vmatpush.msra.mxu0 0.0
    %2235 = vmatpush.msra.mxu0 0.0
    %2236 = vmatpush.msra.mxu0 0.0
    %2237 = vmatpush.msra.mxu0 0.0
    %2238 = vmatpush.msra.mxu0 0.0
    %2239 = vmatpush.msra.mxu0 0.0
    %2240 = vmatpush.msra.mxu0 0.0
    %2241 = vmatpush.msra.mxu0 %v2221
    %2242 = vmatpush.msra.mxu0 %v2220
    %2243 = vmatpush.msra.mxu0 %v2219
    %2244 = vmatpush.msra.mxu0 %v2218
    %2245 = vmatmul.f32.gmra.mxu0 %v2227
    %v2246 = vpop.f32.mrf.mxu0
    %v2247 = vadd.f32 %v2224, %v2246
    %2248 = vdwg.mxu0
    %2249 = vst.msk [vmem:[%s22] sm:$0xff] %vm124, %v2247
    // Predicated region
    $region102: #{encoder_forward.1} parent=1 // pred_check
      _
    $region103: #{encoder_forward.1} parent=1 // pred_check_branch
      %2251 = sbr.rel (0) target = $region105
    $region104: #{encoder_forward.1} parent=1 // pred_region
      _
    $region105: #{encoder_forward.1} parent=1 // pred_fallthru
      _
    // Predicated region
    $region106: #{encoder_forward.1} parent=1 // pred_check
      _
    $region107: #{encoder_forward.1} parent=1 // pred_check_branch
      %2253 = sbr.rel (0) target = $region109
    $region108: #{encoder_forward.1} parent=1 // pred_region
      _
    $region109: #{encoder_forward.1} parent=1 // pred_fallthru
      _
    %2254 = vsyncpa [#allocation3], 1
    %2255 = vsyncpa [#allocation5], 1

</llo_original>
